<compile_context>
chip_gen: v7x
topology: tpu7x:2x2x1
jax: 0.10.0
libtpu: 0.0.40
codegen_flags: <defaults>
</compile_context>

<pallas_src>
import functools

import jax
import jax.numpy as jnp
from jax.experimental import pallas as pl
from jax.experimental.pallas import tpu as pltpu

# --- model hyperparameters (from the PyTorch module) ---
INPUT_SIZE = 2
HIDDEN_SIZE = 12
NUM_LAYERS = 2
OUTPUT_SIZE = 2
DROPOUT_PROB = 0.4  # identity at inference
HP = 128            # per-gate padded hidden width = one 128-lane block


def lstm_kernel(x_ref,      # (T*B, I)     flattened time-major input
                wih0_ref,   # (I, 4*HP)    layer-0 input weights (gate-padded)
                whh0_ref,   # (HP, 4*HP)   layer-0 recurrent weights
                b0_ref,     # (1, 4*HP)    layer-0 bias (b_ih + b_hh)
                wcat1_ref,  # (2*HP, 4*HP) layer-1 [W_ih ; W_hh] stacked
                b1_ref,     # (1, 4*HP)    layer-1 bias (b_ih + b_hh)
                wfc_ref,    # (HP, O)      final linear weight
                bfc_ref,    # (1, O)       final linear bias
                out_ref,    # (B, O)
                *, T, B):
    # ---- hoisted, non-recurrent work: ONE matmul covers all timesteps ----
    x = x_ref[...].astype(jnp.float32)                              # (T*B, I)
    xproj = (jnp.dot(x, wih0_ref[...],
                     preferred_element_type=jnp.float32)
             + b0_ref[...])                                         # (T*B, 4*HP)

    whh0 = whh0_ref[...]
    wcat1 = wcat1_ref[...]
    b1 = jnp.broadcast_to(b1_ref[...], (B, 4 * HP))  # broadcast hoisted out of loop

    def gates_to_hc(gates, c):
        # lane-aligned gate slices: each gate owns one full 128-lane block
        i_g = jax.nn.sigmoid(gates[:, 0 * HP:1 * HP])
        f_g = jax.nn.sigmoid(gates[:, 1 * HP:2 * HP])
        g_g = jnp.tanh(gates[:, 2 * HP:3 * HP])
        o_g = jax.nn.sigmoid(gates[:, 3 * HP:4 * HP])
        c_new = f_g * c + i_g * g_g
        h_new = o_g * jnp.tanh(c_new)
        return h_new, c_new

    h0 = jnp.zeros((B, HP), jnp.float32)
    c0 = jnp.zeros((B, HP), jnp.float32)
    h1 = jnp.zeros((B, HP), jnp.float32)
    c1 = jnp.zeros((B, HP), jnp.float32)

    # Fully unrolled recurrence (T static & small): 2 MXU ops per timestep.
    for t in range(T):
        # layer 0: recurrent matmul only (input projection precomputed above)
        g0 = xproj[t * B:(t + 1) * B, :] + jnp.dot(
            h0, whh0, preferred_element_type=jnp.float32)
        h0, c0 = gates_to_hc(g0, c0)

        # inter-layer dropout: identity in eval mode
        # layer 1: fused input + recurrent matmul via [h0 | h1] @ [W_ih ; W_hh]
        hcat = jnp.concatenate([h0, h1], axis=1)                    # (B, 2*HP)
        g1 = jnp.dot(hcat, wcat1, preferred_element_type=jnp.float32) + b1
        h1, c1 = gates_to_hc(g1, c1)

    # dropout on last-timestep output -> identity (eval), then final linear
    y = jnp.dot(h1, wfc_ref[...], preferred_element_type=jnp.float32) + bfc_ref[...]
    out_ref[...] = y.astype(out_ref.dtype)


def _pad_gate_cols(w, H):
    """(K, 4H) -> (K, 4*HP): gate g's H columns placed at [g*HP, g*HP + H)."""
    K = w.shape[0]
    out = jnp.zeros((K, 4, HP), w.dtype)
    out = out.at[:, :, :H].set(w.reshape(K, 4, H))
    return out.reshape(K, 4 * HP)


def _pad_rows(w, rows):
    return jnp.zeros((rows, w.shape[1]), w.dtype).at[:w.shape[0], :].set(w)


def lstm_model_forward(x, params):
    """x: (B, T, I) batch-first, matching the PyTorch module."""
    B, T, I = x.shape
    H = HIDDEN_SIZE
    (wih0, whh0, b0, wih1, whh1, b1, wfc, bfc) = params

    # Layout plumbing in the wrapper (cheap, one-time): time-major & flattened
    # input, gate axis padded so each gate is a full 128-lane block.
    x_flat = jnp.transpose(x, (1, 0, 2)).reshape(T * B, I)          # (T*B, I)

    wih0_p = _pad_gate_cols(wih0, H)                                # (I, 4*HP)
    whh0_p = _pad_rows(_pad_gate_cols(whh0, H), HP)                 # (HP, 4*HP)
    b0_p = _pad_gate_cols(b0, H)                                    # (1, 4*HP)

    wih1_p = _pad_gate_cols(wih1, H)                                # (H, 4*HP)
    whh1_p = _pad_gate_cols(whh1, H)                                # (H, 4*HP)
    wcat1_p = jnp.zeros((2 * HP, 4 * HP), jnp.float32)
    wcat1_p = wcat1_p.at[:H, :].set(wih1_p)          # rows hit by h0 lanes [0, H)
    wcat1_p = wcat1_p.at[HP:HP + H, :].set(whh1_p)   # rows hit by h1 lanes [HP, HP+H)
    b1_p = _pad_gate_cols(b1, H)                                    # (1, 4*HP)

    wfc_p = _pad_rows(wfc, HP)                                      # (HP, O)

    vmem = pl.BlockSpec(memory_space=pltpu.MemorySpace.VMEM)
    out = pl.pallas_call(
        functools.partial(lstm_kernel, T=T, B=B),
        out_shape=jax.ShapeDtypeStruct((B, OUTPUT_SIZE), jnp.float32),
        in_specs=[vmem] * 8,
        out_specs=vmem,
    )(x_flat, wih0_p, whh0_p, b0_p, wcat1_p, b1_p, wfc_p, bfc)
    return out


def init_params(key):
    """Deterministic init mirroring PyTorch's U(-1/sqrt(H), 1/sqrt(H))."""
    H, I, O = HIDDEN_SIZE, INPUT_SIZE, OUTPUT_SIZE
    k = 1.0 / jnp.sqrt(jnp.float32(H))
    keys = jax.random.split(key, 12)

    def u(kk, shape):
        return jax.random.uniform(kk, shape, jnp.float32, -k, k)

    # layer 0: input size I ; layer 1: input size H.  Gate order [i, f, g, o].
    wih0 = u(keys[0], (I, 4 * H))
    whh0 = u(keys[1], (H, 4 * H))
    b0 = u(keys[2], (1, 4 * H)) + u(keys[3], (1, 4 * H))   # b_ih + b_hh
    wih1 = u(keys[4], (H, 4 * H))
    whh1 = u(keys[5], (H, 4 * H))
    b1 = u(keys[6], (1, 4 * H)) + u(keys[7], (1, 4 * H))

    wfc = jax.random.uniform(keys[8], (H, O), jnp.float32, -k, k)
    bfc = jax.random.uniform(keys[9], (1, O), jnp.float32, -k, k)
    return (wih0, whh0, b0, wih1, whh1, b1, wfc, bfc)


if __name__ == "__main__":
    key = jax.random.PRNGKey(0)
    pkey, xkey = jax.random.split(key)

    params = init_params(pkey)

    B, T = 2, 8
    x = jax.random.normal(xkey, (B, T, INPUT_SIZE), jnp.float32)

    out = lstm_model_forward(x, params)
    out = jax.block_until_ready(out)
    assert out.shape == (B, OUTPUT_SIZE), out.shape
    print("KERNEL_OK")
</pallas_src>

<mosaic_0001>
module attributes {stable_mosaic.version = 11 : i64} {
  func.func @lstm_kernel(%arg0: memref<16x2xf32, #tpu.memory_space<vmem>>, %arg1: memref<2x512xf32, #tpu.memory_space<vmem>>, %arg2: memref<128x512xf32, #tpu.memory_space<vmem>>, %arg3: memref<1x512xf32, #tpu.memory_space<vmem>>, %arg4: memref<256x512xf32, #tpu.memory_space<vmem>>, %arg5: memref<1x512xf32, #tpu.memory_space<vmem>>, %arg6: memref<128x2xf32, #tpu.memory_space<vmem>>, %arg7: memref<1x2xf32, #tpu.memory_space<vmem>>, %arg8: memref<2x2xf32, #tpu.memory_space<vmem>>) attributes {dimension_semantics = [], scalar_prefetch = 0 : i64, scratch_operands = 0 : i64, tpu.core_type = #tpu.core_type<tc>} {
    %c0 = arith.constant 0 : index
    %c0_0 = arith.constant 0 : index
    %0 = vector.load %arg0[%c0, %c0_0] : memref<16x2xf32, #tpu.memory_space<vmem>>, vector<16x2xf32>
    %c0_1 = arith.constant 0 : index
    %c0_2 = arith.constant 0 : index
    %1 = vector.load %arg1[%c0_1, %c0_2] : memref<2x512xf32, #tpu.memory_space<vmem>>, vector<2x512xf32>
    %cst = arith.constant dense<0.000000e+00> : vector<16x512xf32>
    %2 = tpu.matmul %0, %1, %cst {dimension_numbers = #tpu.dot_dimension_numbers<[1], [0], [0], [1], [0, 0, 1, 1], [], []>} : vector<16x2xf32>, vector<2x512xf32>, vector<16x512xf32> -> vector<16x512xf32>
    %c0_3 = arith.constant 0 : index
    %c0_4 = arith.constant 0 : index
    %3 = vector.load %arg3[%c0_3, %c0_4] : memref<1x512xf32, #tpu.memory_space<vmem>>, vector<1x512xf32>
    %4 = vector.broadcast %3 : vector<1x512xf32> to vector<16x512xf32>
    %5 = arith.addf %2, %4 : vector<16x512xf32>
    %c0_5 = arith.constant 0 : index
    %c0_6 = arith.constant 0 : index
    %6 = vector.load %arg2[%c0_5, %c0_6] : memref<128x512xf32, #tpu.memory_space<vmem>>, vector<128x512xf32>
    %c0_7 = arith.constant 0 : index
    %c0_8 = arith.constant 0 : index
    %7 = vector.load %arg4[%c0_7, %c0_8] : memref<256x512xf32, #tpu.memory_space<vmem>>, vector<256x512xf32>
    %c0_9 = arith.constant 0 : index
    %c0_10 = arith.constant 0 : index
    %8 = vector.load %arg5[%c0_9, %c0_10] : memref<1x512xf32, #tpu.memory_space<vmem>>, vector<1x512xf32>
    %9 = vector.shape_cast %8 : vector<1x512xf32> to vector<1x512xf32>
    %10 = vector.broadcast %9 : vector<1x512xf32> to vector<2x512xf32>
    %cst_11 = arith.constant 0.000000e+00 : f32
    %11 = vector.broadcast %cst_11 : f32 to vector<2x128xf32>
    %cst_12 = arith.constant 0.000000e+00 : f32
    %12 = vector.broadcast %cst_12 : f32 to vector<2x128xf32>
    %cst_13 = arith.constant 0.000000e+00 : f32
    %13 = vector.broadcast %cst_13 : f32 to vector<2x128xf32>
    %cst_14 = arith.constant 0.000000e+00 : f32
    %14 = vector.broadcast %cst_14 : f32 to vector<2x128xf32>
    %15 = vector.extract_strided_slice %5 {offsets = [0, 0], sizes = [2, 512], strides = [1, 1]} : vector<16x512xf32> to vector<2x512xf32>
    %cst_15 = arith.constant dense<0.000000e+00> : vector<2x512xf32>
    %16 = tpu.matmul %11, %6, %cst_15 {dimension_numbers = #tpu.dot_dimension_numbers<[1], [0], [0], [1], [0, 0, 1, 1], [], []>} : vector<2x128xf32>, vector<128x512xf32>, vector<2x512xf32> -> vector<2x512xf32>
    %17 = arith.addf %15, %16 : vector<2x512xf32>
    %18 = vector.extract_strided_slice %17 {offsets = [0, 0], sizes = [2, 128], strides = [1, 1]} : vector<2x512xf32> to vector<2x128xf32>
    %19 = arith.negf %18 : vector<2x128xf32>
    %20 = math.exp %19 : vector<2x128xf32>
    %cst_16 = arith.constant 1.000000e+00 : f32
    %21 = vector.broadcast %cst_16 : f32 to vector<2x128xf32>
    %22 = arith.addf %21, %20 : vector<2x128xf32>
    %23 = arith.divf %21, %22 : vector<2x128xf32>
    %24 = vector.extract_strided_slice %17 {offsets = [0, 128], sizes = [2, 128], strides = [1, 1]} : vector<2x512xf32> to vector<2x128xf32>
    %25 = arith.negf %24 : vector<2x128xf32>
    %26 = math.exp %25 : vector<2x128xf32>
    %cst_17 = arith.constant 1.000000e+00 : f32
    %27 = vector.broadcast %cst_17 : f32 to vector<2x128xf32>
    %28 = arith.addf %27, %26 : vector<2x128xf32>
    %29 = arith.divf %27, %28 : vector<2x128xf32>
    %30 = vector.extract_strided_slice %17 {offsets = [0, 256], sizes = [2, 128], strides = [1, 1]} : vector<2x512xf32> to vector<2x128xf32>
    %31 = math.tanh %30 : vector<2x128xf32>
    %32 = vector.extract_strided_slice %17 {offsets = [0, 384], sizes = [2, 128], strides = [1, 1]} : vector<2x512xf32> to vector<2x128xf32>
    %33 = arith.negf %32 : vector<2x128xf32>
    %34 = math.exp %33 : vector<2x128xf32>
    %cst_18 = arith.constant 1.000000e+00 : f32
    %35 = vector.broadcast %cst_18 : f32 to vector<2x128xf32>
    %36 = arith.addf %35, %34 : vector<2x128xf32>
    %37 = arith.divf %35, %36 : vector<2x128xf32>
    %38 = arith.mulf %29, %12 : vector<2x128xf32>
    %39 = arith.mulf %23, %31 : vector<2x128xf32>
    %40 = arith.addf %38, %39 : vector<2x128xf32>
    %41 = math.tanh %40 : vector<2x128xf32>
    %42 = arith.mulf %37, %41 : vector<2x128xf32>
    %43 = tpu.concatenate %42, %13 in 1 : vector<2x128xf32>, vector<2x128xf32> -> vector<2x256xf32>
    %cst_19 = arith.constant dense<0.000000e+00> : vector<2x512xf32>
    %44 = tpu.matmul %43, %7, %cst_19 {dimension_numbers = #tpu.dot_dimension_numbers<[1], [0], [0], [1], [0, 0, 1, 1], [], []>} : vector<2x256xf32>, vector<256x512xf32>, vector<2x512xf32> -> vector<2x512xf32>
    %45 = arith.addf %44, %10 : vector<2x512xf32>
    %46 = vector.extract_strided_slice %45 {offsets = [0, 0], sizes = [2, 128], strides = [1, 1]} : vector<2x512xf32> to vector<2x128xf32>
    %47 = arith.negf %46 : vector<2x128xf32>
    %48 = math.exp %47 : vector<2x128xf32>
    %cst_20 = arith.constant 1.000000e+00 : f32
    %49 = vector.broadcast %cst_20 : f32 to vector<2x128xf32>
    %50 = arith.addf %49, %48 : vector<2x128xf32>
    %51 = arith.divf %49, %50 : vector<2x128xf32>
    %52 = vector.extract_strided_slice %45 {offsets = [0, 128], sizes = [2, 128], strides = [1, 1]} : vector<2x512xf32> to vector<2x128xf32>
    %53 = arith.negf %52 : vector<2x128xf32>
    %54 = math.exp %53 : vector<2x128xf32>
    %cst_21 = arith.constant 1.000000e+00 : f32
    %55 = vector.broadcast %cst_21 : f32 to vector<2x128xf32>
    %56 = arith.addf %55, %54 : vector<2x128xf32>
    %57 = arith.divf %55, %56 : vector<2x128xf32>
    %58 = vector.extract_strided_slice %45 {offsets = [0, 256], sizes = [2, 128], strides = [1, 1]} : vector<2x512xf32> to vector<2x128xf32>
    %59 = math.tanh %58 : vector<2x128xf32>
    %60 = vector.extract_strided_slice %45 {offsets = [0, 384], sizes = [2, 128], strides = [1, 1]} : vector<2x512xf32> to vector<2x128xf32>
    %61 = arith.negf %60 : vector<2x128xf32>
    %62 = math.exp %61 : vector<2x128xf32>
    %cst_22 = arith.constant 1.000000e+00 : f32
    %63 = vector.broadcast %cst_22 : f32 to vector<2x128xf32>
    %64 = arith.addf %63, %62 : vector<2x128xf32>
    %65 = arith.divf %63, %64 : vector<2x128xf32>
    %66 = arith.mulf %57, %14 : vector<2x128xf32>
    %67 = arith.mulf %51, %59 : vector<2x128xf32>
    %68 = arith.addf %66, %67 : vector<2x128xf32>
    %69 = math.tanh %68 : vector<2x128xf32>
    %70 = arith.mulf %65, %69 : vector<2x128xf32>
    %71 = vector.extract_strided_slice %5 {offsets = [2, 0], sizes = [2, 512], strides = [1, 1]} : vector<16x512xf32> to vector<2x512xf32>
    %cst_23 = arith.constant dense<0.000000e+00> : vector<2x512xf32>
    %72 = tpu.matmul %42, %6, %cst_23 {dimension_numbers = #tpu.dot_dimension_numbers<[1], [0], [0], [1], [0, 0, 1, 1], [], []>} : vector<2x128xf32>, vector<128x512xf32>, vector<2x512xf32> -> vector<2x512xf32>
    %73 = arith.addf %71, %72 : vector<2x512xf32>
    %74 = vector.extract_strided_slice %73 {offsets = [0, 0], sizes = [2, 128], strides = [1, 1]} : vector<2x512xf32> to vector<2x128xf32>
    %75 = arith.negf %74 : vector<2x128xf32>
    %76 = math.exp %75 : vector<2x128xf32>
    %cst_24 = arith.constant 1.000000e+00 : f32
    %77 = vector.broadcast %cst_24 : f32 to vector<2x128xf32>
    %78 = arith.addf %77, %76 : vector<2x128xf32>
    %79 = arith.divf %77, %78 : vector<2x128xf32>
    %80 = vector.extract_strided_slice %73 {offsets = [0, 128], sizes = [2, 128], strides = [1, 1]} : vector<2x512xf32> to vector<2x128xf32>
    %81 = arith.negf %80 : vector<2x128xf32>
    %82 = math.exp %81 : vector<2x128xf32>
    %cst_25 = arith.constant 1.000000e+00 : f32
    %83 = vector.broadcast %cst_25 : f32 to vector<2x128xf32>
    %84 = arith.addf %83, %82 : vector<2x128xf32>
    %85 = arith.divf %83, %84 : vector<2x128xf32>
    %86 = vector.extract_strided_slice %73 {offsets = [0, 256], sizes = [2, 128], strides = [1, 1]} : vector<2x512xf32> to vector<2x128xf32>
    %87 = math.tanh %86 : vector<2x128xf32>
    %88 = vector.extract_strided_slice %73 {offsets = [0, 384], sizes = [2, 128], strides = [1, 1]} : vector<2x512xf32> to vector<2x128xf32>
    %89 = arith.negf %88 : vector<2x128xf32>
    %90 = math.exp %89 : vector<2x128xf32>
    %cst_26 = arith.constant 1.000000e+00 : f32
    %91 = vector.broadcast %cst_26 : f32 to vector<2x128xf32>
    %92 = arith.addf %91, %90 : vector<2x128xf32>
    %93 = arith.divf %91, %92 : vector<2x128xf32>
    %94 = arith.mulf %85, %40 : vector<2x128xf32>
    %95 = arith.mulf %79, %87 : vector<2x128xf32>
    %96 = arith.addf %94, %95 : vector<2x128xf32>
    %97 = math.tanh %96 : vector<2x128xf32>
    %98 = arith.mulf %93, %97 : vector<2x128xf32>
    %99 = tpu.concatenate %98, %70 in 1 : vector<2x128xf32>, vector<2x128xf32> -> vector<2x256xf32>
    %cst_27 = arith.constant dense<0.000000e+00> : vector<2x512xf32>
    %100 = tpu.matmul %99, %7, %cst_27 {dimension_numbers = #tpu.dot_dimension_numbers<[1], [0], [0], [1], [0, 0, 1, 1], [], []>} : vector<2x256xf32>, vector<256x512xf32>, vector<2x512xf32> -> vector<2x512xf32>
    %101 = arith.addf %100, %10 : vector<2x512xf32>
    %102 = vector.extract_strided_slice %101 {offsets = [0, 0], sizes = [2, 128], strides = [1, 1]} : vector<2x512xf32> to vector<2x128xf32>
    %103 = arith.negf %102 : vector<2x128xf32>
    %104 = math.exp %103 : vector<2x128xf32>
    %cst_28 = arith.constant 1.000000e+00 : f32
    %105 = vector.broadcast %cst_28 : f32 to vector<2x128xf32>
    %106 = arith.addf %105, %104 : vector<2x128xf32>
    %107 = arith.divf %105, %106 : vector<2x128xf32>
    %108 = vector.extract_strided_slice %101 {offsets = [0, 128], sizes = [2, 128], strides = [1, 1]} : vector<2x512xf32> to vector<2x128xf32>
    %109 = arith.negf %108 : vector<2x128xf32>
    %110 = math.exp %109 : vector<2x128xf32>
    %cst_29 = arith.constant 1.000000e+00 : f32
    %111 = vector.broadcast %cst_29 : f32 to vector<2x128xf32>
    %112 = arith.addf %111, %110 : vector<2x128xf32>
    %113 = arith.divf %111, %112 : vector<2x128xf32>
    %114 = vector.extract_strided_slice %101 {offsets = [0, 256], sizes = [2, 128], strides = [1, 1]} : vector<2x512xf32> to vector<2x128xf32>
    %115 = math.tanh %114 : vector<2x128xf32>
    %116 = vector.extract_strided_slice %101 {offsets = [0, 384], sizes = [2, 128], strides = [1, 1]} : vector<2x512xf32> to vector<2x128xf32>
    %117 = arith.negf %116 : vector<2x128xf32>
    %118 = math.exp %117 : vector<2x128xf32>
    %cst_30 = arith.constant 1.000000e+00 : f32
    %119 = vector.broadcast %cst_30 : f32 to vector<2x128xf32>
    %120 = arith.addf %119, %118 : vector<2x128xf32>
    %121 = arith.divf %119, %120 : vector<2x128xf32>
    %122 = arith.mulf %113, %68 : vector<2x128xf32>
    %123 = arith.mulf %107, %115 : vector<2x128xf32>
    %124 = arith.addf %122, %123 : vector<2x128xf32>
    %125 = math.tanh %124 : vector<2x128xf32>
    %126 = arith.mulf %121, %125 : vector<2x128xf32>
    %127 = vector.extract_strided_slice %5 {offsets = [4, 0], sizes = [2, 512], strides = [1, 1]} : vector<16x512xf32> to vector<2x512xf32>
    %cst_31 = arith.constant dense<0.000000e+00> : vector<2x512xf32>
    %128 = tpu.matmul %98, %6, %cst_31 {dimension_numbers = #tpu.dot_dimension_numbers<[1], [0], [0], [1], [0, 0, 1, 1], [], []>} : vector<2x128xf32>, vector<128x512xf32>, vector<2x512xf32> -> vector<2x512xf32>
    %129 = arith.addf %127, %128 : vector<2x512xf32>
    %130 = vector.extract_strided_slice %129 {offsets = [0, 0], sizes = [2, 128], strides = [1, 1]} : vector<2x512xf32> to vector<2x128xf32>
    %131 = arith.negf %130 : vector<2x128xf32>
    %132 = math.exp %131 : vector<2x128xf32>
    %cst_32 = arith.constant 1.000000e+00 : f32
    %133 = vector.broadcast %cst_32 : f32 to vector<2x128xf32>
    %134 = arith.addf %133, %132 : vector<2x128xf32>
    %135 = arith.divf %133, %134 : vector<2x128xf32>
    %136 = vector.extract_strided_slice %129 {offsets = [0, 128], sizes = [2, 128], strides = [1, 1]} : vector<2x512xf32> to vector<2x128xf32>
    %137 = arith.negf %136 : vector<2x128xf32>
    %138 = math.exp %137 : vector<2x128xf32>
    %cst_33 = arith.constant 1.000000e+00 : f32
    %139 = vector.broadcast %cst_33 : f32 to vector<2x128xf32>
    %140 = arith.addf %139, %138 : vector<2x128xf32>
    %141 = arith.divf %139, %140 : vector<2x128xf32>
    %142 = vector.extract_strided_slice %129 {offsets = [0, 256], sizes = [2, 128], strides = [1, 1]} : vector<2x512xf32> to vector<2x128xf32>
    %143 = math.tanh %142 : vector<2x128xf32>
    %144 = vector.extract_strided_slice %129 {offsets = [0, 384], sizes = [2, 128], strides = [1, 1]} : vector<2x512xf32> to vector<2x128xf32>
    %145 = arith.negf %144 : vector<2x128xf32>
    %146 = math.exp %145 : vector<2x128xf32>
    %cst_34 = arith.constant 1.000000e+00 : f32
    %147 = vector.broadcast %cst_34 : f32 to vector<2x128xf32>
    %148 = arith.addf %147, %146 : vector<2x128xf32>
    %149 = arith.divf %147, %148 : vector<2x128xf32>
    %150 = arith.mulf %141, %96 : vector<2x128xf32>
    %151 = arith.mulf %135, %143 : vector<2x128xf32>
    %152 = arith.addf %150, %151 : vector<2x128xf32>
    %153 = math.tanh %152 : vector<2x128xf32>
    %154 = arith.mulf %149, %153 : vector<2x128xf32>
    %155 = tpu.concatenate %154, %126 in 1 : vector<2x128xf32>, vector<2x128xf32> -> vector<2x256xf32>
    %cst_35 = arith.constant dense<0.000000e+00> : vector<2x512xf32>
    %156 = tpu.matmul %155, %7, %cst_35 {dimension_numbers = #tpu.dot_dimension_numbers<[1], [0], [0], [1], [0, 0, 1, 1], [], []>} : vector<2x256xf32>, vector<256x512xf32>, vector<2x512xf32> -> vector<2x512xf32>
    %157 = arith.addf %156, %10 : vector<2x512xf32>
    %158 = vector.extract_strided_slice %157 {offsets = [0, 0], sizes = [2, 128], strides = [1, 1]} : vector<2x512xf32> to vector<2x128xf32>
    %159 = arith.negf %158 : vector<2x128xf32>
    %160 = math.exp %159 : vector<2x128xf32>
    %cst_36 = arith.constant 1.000000e+00 : f32
    %161 = vector.broadcast %cst_36 : f32 to vector<2x128xf32>
    %162 = arith.addf %161, %160 : vector<2x128xf32>
    %163 = arith.divf %161, %162 : vector<2x128xf32>
    %164 = vector.extract_strided_slice %157 {offsets = [0, 128], sizes = [2, 128], strides = [1, 1]} : vector<2x512xf32> to vector<2x128xf32>
    %165 = arith.negf %164 : vector<2x128xf32>
    %166 = math.exp %165 : vector<2x128xf32>
    %cst_37 = arith.constant 1.000000e+00 : f32
    %167 = vector.broadcast %cst_37 : f32 to vector<2x128xf32>
    %168 = arith.addf %167, %166 : vector<2x128xf32>
    %169 = arith.divf %167, %168 : vector<2x128xf32>
    %170 = vector.extract_strided_slice %157 {offsets = [0, 256], sizes = [2, 128], strides = [1, 1]} : vector<2x512xf32> to vector<2x128xf32>
    %171 = math.tanh %170 : vector<2x128xf32>
    %172 = vector.extract_strided_slice %157 {offsets = [0, 384], sizes = [2, 128], strides = [1, 1]} : vector<2x512xf32> to vector<2x128xf32>
    %173 = arith.negf %172 : vector<2x128xf32>
    %174 = math.exp %173 : vector<2x128xf32>
    %cst_38 = arith.constant 1.000000e+00 : f32
    %175 = vector.broadcast %cst_38 : f32 to vector<2x128xf32>
    %176 = arith.addf %175, %174 : vector<2x128xf32>
    %177 = arith.divf %175, %176 : vector<2x128xf32>
    %178 = arith.mulf %169, %124 : vector<2x128xf32>
    %179 = arith.mulf %163, %171 : vector<2x128xf32>
    %180 = arith.addf %178, %179 : vector<2x128xf32>
    %181 = math.tanh %180 : vector<2x128xf32>
    %182 = arith.mulf %177, %181 : vector<2x128xf32>
    %183 = vector.extract_strided_slice %5 {offsets = [6, 0], sizes = [2, 512], strides = [1, 1]} : vector<16x512xf32> to vector<2x512xf32>
    %cst_39 = arith.constant dense<0.000000e+00> : vector<2x512xf32>
    %184 = tpu.matmul %154, %6, %cst_39 {dimension_numbers = #tpu.dot_dimension_numbers<[1], [0], [0], [1], [0, 0, 1, 1], [], []>} : vector<2x128xf32>, vector<128x512xf32>, vector<2x512xf32> -> vector<2x512xf32>
    %185 = arith.addf %183, %184 : vector<2x512xf32>
    %186 = vector.extract_strided_slice %185 {offsets = [0, 0], sizes = [2, 128], strides = [1, 1]} : vector<2x512xf32> to vector<2x128xf32>
    %187 = arith.negf %186 : vector<2x128xf32>
    %188 = math.exp %187 : vector<2x128xf32>
    %cst_40 = arith.constant 1.000000e+00 : f32
    %189 = vector.broadcast %cst_40 : f32 to vector<2x128xf32>
    %190 = arith.addf %189, %188 : vector<2x128xf32>
    %191 = arith.divf %189, %190 : vector<2x128xf32>
    %192 = vector.extract_strided_slice %185 {offsets = [0, 128], sizes = [2, 128], strides = [1, 1]} : vector<2x512xf32> to vector<2x128xf32>
    %193 = arith.negf %192 : vector<2x128xf32>
    %194 = math.exp %193 : vector<2x128xf32>
    %cst_41 = arith.constant 1.000000e+00 : f32
    %195 = vector.broadcast %cst_41 : f32 to vector<2x128xf32>
    %196 = arith.addf %195, %194 : vector<2x128xf32>
    %197 = arith.divf %195, %196 : vector<2x128xf32>
    %198 = vector.extract_strided_slice %185 {offsets = [0, 256], sizes = [2, 128], strides = [1, 1]} : vector<2x512xf32> to vector<2x128xf32>
    %199 = math.tanh %198 : vector<2x128xf32>
    %200 = vector.extract_strided_slice %185 {offsets = [0, 384], sizes = [2, 128], strides = [1, 1]} : vector<2x512xf32> to vector<2x128xf32>
    %201 = arith.negf %200 : vector<2x128xf32>
    %202 = math.exp %201 : vector<2x128xf32>
    %cst_42 = arith.constant 1.000000e+00 : f32
    %203 = vector.broadcast %cst_42 : f32 to vector<2x128xf32>
    %204 = arith.addf %203, %202 : vector<2x128xf32>
    %205 = arith.divf %203, %204 : vector<2x128xf32>
    %206 = arith.mulf %197, %152 : vector<2x128xf32>
    %207 = arith.mulf %191, %199 : vector<2x128xf32>
    %208 = arith.addf %206, %207 : vector<2x128xf32>
    %209 = math.tanh %208 : vector<2x128xf32>
    %210 = arith.mulf %205, %209 : vector<2x128xf32>
    %211 = tpu.concatenate %210, %182 in 1 : vector<2x128xf32>, vector<2x128xf32> -> vector<2x256xf32>
    %cst_43 = arith.constant dense<0.000000e+00> : vector<2x512xf32>
    %212 = tpu.matmul %211, %7, %cst_43 {dimension_numbers = #tpu.dot_dimension_numbers<[1], [0], [0], [1], [0, 0, 1, 1], [], []>} : vector<2x256xf32>, vector<256x512xf32>, vector<2x512xf32> -> vector<2x512xf32>
    %213 = arith.addf %212, %10 : vector<2x512xf32>
    %214 = vector.extract_strided_slice %213 {offsets = [0, 0], sizes = [2, 128], strides = [1, 1]} : vector<2x512xf32> to vector<2x128xf32>
    %215 = arith.negf %214 : vector<2x128xf32>
    %216 = math.exp %215 : vector<2x128xf32>
    %cst_44 = arith.constant 1.000000e+00 : f32
    %217 = vector.broadcast %cst_44 : f32 to vector<2x128xf32>
    %218 = arith.addf %217, %216 : vector<2x128xf32>
    %219 = arith.divf %217, %218 : vector<2x128xf32>
    %220 = vector.extract_strided_slice %213 {offsets = [0, 128], sizes = [2, 128], strides = [1, 1]} : vector<2x512xf32> to vector<2x128xf32>
    %221 = arith.negf %220 : vector<2x128xf32>
    %222 = math.exp %221 : vector<2x128xf32>
    %cst_45 = arith.constant 1.000000e+00 : f32
    %223 = vector.broadcast %cst_45 : f32 to vector<2x128xf32>
    %224 = arith.addf %223, %222 : vector<2x128xf32>
    %225 = arith.divf %223, %224 : vector<2x128xf32>
    %226 = vector.extract_strided_slice %213 {offsets = [0, 256], sizes = [2, 128], strides = [1, 1]} : vector<2x512xf32> to vector<2x128xf32>
    %227 = math.tanh %226 : vector<2x128xf32>
    %228 = vector.extract_strided_slice %213 {offsets = [0, 384], sizes = [2, 128], strides = [1, 1]} : vector<2x512xf32> to vector<2x128xf32>
    %229 = arith.negf %228 : vector<2x128xf32>
    %230 = math.exp %229 : vector<2x128xf32>
    %cst_46 = arith.constant 1.000000e+00 : f32
    %231 = vector.broadcast %cst_46 : f32 to vector<2x128xf32>
    %232 = arith.addf %231, %230 : vector<2x128xf32>
    %233 = arith.divf %231, %232 : vector<2x128xf32>
    %234 = arith.mulf %225, %180 : vector<2x128xf32>
    %235 = arith.mulf %219, %227 : vector<2x128xf32>
    %236 = arith.addf %234, %235 : vector<2x128xf32>
    %237 = math.tanh %236 : vector<2x128xf32>
    %238 = arith.mulf %233, %237 : vector<2x128xf32>
    %239 = vector.extract_strided_slice %5 {offsets = [8, 0], sizes = [2, 512], strides = [1, 1]} : vector<16x512xf32> to vector<2x512xf32>
    %cst_47 = arith.constant dense<0.000000e+00> : vector<2x512xf32>
    %240 = tpu.matmul %210, %6, %cst_47 {dimension_numbers = #tpu.dot_dimension_numbers<[1], [0], [0], [1], [0, 0, 1, 1], [], []>} : vector<2x128xf32>, vector<128x512xf32>, vector<2x512xf32> -> vector<2x512xf32>
    %241 = arith.addf %239, %240 : vector<2x512xf32>
    %242 = vector.extract_strided_slice %241 {offsets = [0, 0], sizes = [2, 128], strides = [1, 1]} : vector<2x512xf32> to vector<2x128xf32>
    %243 = arith.negf %242 : vector<2x128xf32>
    %244 = math.exp %243 : vector<2x128xf32>
    %cst_48 = arith.constant 1.000000e+00 : f32
    %245 = vector.broadcast %cst_48 : f32 to vector<2x128xf32>
    %246 = arith.addf %245, %244 : vector<2x128xf32>
    %247 = arith.divf %245, %246 : vector<2x128xf32>
    %248 = vector.extract_strided_slice %241 {offsets = [0, 128], sizes = [2, 128], strides = [1, 1]} : vector<2x512xf32> to vector<2x128xf32>
    %249 = arith.negf %248 : vector<2x128xf32>
    %250 = math.exp %249 : vector<2x128xf32>
    %cst_49 = arith.constant 1.000000e+00 : f32
    %251 = vector.broadcast %cst_49 : f32 to vector<2x128xf32>
    %252 = arith.addf %251, %250 : vector<2x128xf32>
    %253 = arith.divf %251, %252 : vector<2x128xf32>
    %254 = vector.extract_strided_slice %241 {offsets = [0, 256], sizes = [2, 128], strides = [1, 1]} : vector<2x512xf32> to vector<2x128xf32>
    %255 = math.tanh %254 : vector<2x128xf32>
    %256 = vector.extract_strided_slice %241 {offsets = [0, 384], sizes = [2, 128], strides = [1, 1]} : vector<2x512xf32> to vector<2x128xf32>
    %257 = arith.negf %256 : vector<2x128xf32>
    %258 = math.exp %257 : vector<2x128xf32>
    %cst_50 = arith.constant 1.000000e+00 : f32
    %259 = vector.broadcast %cst_50 : f32 to vector<2x128xf32>
    %260 = arith.addf %259, %258 : vector<2x128xf32>
    %261 = arith.divf %259, %260 : vector<2x128xf32>
    %262 = arith.mulf %253, %208 : vector<2x128xf32>
    %263 = arith.mulf %247, %255 : vector<2x128xf32>
    %264 = arith.addf %262, %263 : vector<2x128xf32>
    %265 = math.tanh %264 : vector<2x128xf32>
    %266 = arith.mulf %261, %265 : vector<2x128xf32>
    %267 = tpu.concatenate %266, %238 in 1 : vector<2x128xf32>, vector<2x128xf32> -> vector<2x256xf32>
    %cst_51 = arith.constant dense<0.000000e+00> : vector<2x512xf32>
    %268 = tpu.matmul %267, %7, %cst_51 {dimension_numbers = #tpu.dot_dimension_numbers<[1], [0], [0], [1], [0, 0, 1, 1], [], []>} : vector<2x256xf32>, vector<256x512xf32>, vector<2x512xf32> -> vector<2x512xf32>
    %269 = arith.addf %268, %10 : vector<2x512xf32>
    %270 = vector.extract_strided_slice %269 {offsets = [0, 0], sizes = [2, 128], strides = [1, 1]} : vector<2x512xf32> to vector<2x128xf32>
    %271 = arith.negf %270 : vector<2x128xf32>
    %272 = math.exp %271 : vector<2x128xf32>
    %cst_52 = arith.constant 1.000000e+00 : f32
    %273 = vector.broadcast %cst_52 : f32 to vector<2x128xf32>
    %274 = arith.addf %273, %272 : vector<2x128xf32>
    %275 = arith.divf %273, %274 : vector<2x128xf32>
    %276 = vector.extract_strided_slice %269 {offsets = [0, 128], sizes = [2, 128], strides = [1, 1]} : vector<2x512xf32> to vector<2x128xf32>
    %277 = arith.negf %276 : vector<2x128xf32>
    %278 = math.exp %277 : vector<2x128xf32>
    %cst_53 = arith.constant 1.000000e+00 : f32
    %279 = vector.broadcast %cst_53 : f32 to vector<2x128xf32>
    %280 = arith.addf %279, %278 : vector<2x128xf32>
    %281 = arith.divf %279, %280 : vector<2x128xf32>
    %282 = vector.extract_strided_slice %269 {offsets = [0, 256], sizes = [2, 128], strides = [1, 1]} : vector<2x512xf32> to vector<2x128xf32>
    %283 = math.tanh %282 : vector<2x128xf32>
    %284 = vector.extract_strided_slice %269 {offsets = [0, 384], sizes = [2, 128], strides = [1, 1]} : vector<2x512xf32> to vector<2x128xf32>
    %285 = arith.negf %284 : vector<2x128xf32>
    %286 = math.exp %285 : vector<2x128xf32>
    %cst_54 = arith.constant 1.000000e+00 : f32
    %287 = vector.broadcast %cst_54 : f32 to vector<2x128xf32>
    %288 = arith.addf %287, %286 : vector<2x128xf32>
    %289 = arith.divf %287, %288 : vector<2x128xf32>
    %290 = arith.mulf %281, %236 : vector<2x128xf32>
    %291 = arith.mulf %275, %283 : vector<2x128xf32>
    %292 = arith.addf %290, %291 : vector<2x128xf32>
    %293 = math.tanh %292 : vector<2x128xf32>
    %294 = arith.mulf %289, %293 : vector<2x128xf32>
    %295 = vector.extract_strided_slice %5 {offsets = [10, 0], sizes = [2, 512], strides = [1, 1]} : vector<16x512xf32> to vector<2x512xf32>
    %cst_55 = arith.constant dense<0.000000e+00> : vector<2x512xf32>
    %296 = tpu.matmul %266, %6, %cst_55 {dimension_numbers = #tpu.dot_dimension_numbers<[1], [0], [0], [1], [0, 0, 1, 1], [], []>} : vector<2x128xf32>, vector<128x512xf32>, vector<2x512xf32> -> vector<2x512xf32>
    %297 = arith.addf %295, %296 : vector<2x512xf32>
    %298 = vector.extract_strided_slice %297 {offsets = [0, 0], sizes = [2, 128], strides = [1, 1]} : vector<2x512xf32> to vector<2x128xf32>
    %299 = arith.negf %298 : vector<2x128xf32>
    %300 = math.exp %299 : vector<2x128xf32>
    %cst_56 = arith.constant 1.000000e+00 : f32
    %301 = vector.broadcast %cst_56 : f32 to vector<2x128xf32>
    %302 = arith.addf %301, %300 : vector<2x128xf32>
    %303 = arith.divf %301, %302 : vector<2x128xf32>
    %304 = vector.extract_strided_slice %297 {offsets = [0, 128], sizes = [2, 128], strides = [1, 1]} : vector<2x512xf32> to vector<2x128xf32>
    %305 = arith.negf %304 : vector<2x128xf32>
    %306 = math.exp %305 : vector<2x128xf32>
    %cst_57 = arith.constant 1.000000e+00 : f32
    %307 = vector.broadcast %cst_57 : f32 to vector<2x128xf32>
    %308 = arith.addf %307, %306 : vector<2x128xf32>
    %309 = arith.divf %307, %308 : vector<2x128xf32>
    %310 = vector.extract_strided_slice %297 {offsets = [0, 256], sizes = [2, 128], strides = [1, 1]} : vector<2x512xf32> to vector<2x128xf32>
    %311 = math.tanh %310 : vector<2x128xf32>
    %312 = vector.extract_strided_slice %297 {offsets = [0, 384], sizes = [2, 128], strides = [1, 1]} : vector<2x512xf32> to vector<2x128xf32>
    %313 = arith.negf %312 : vector<2x128xf32>
    %314 = math.exp %313 : vector<2x128xf32>
    %cst_58 = arith.constant 1.000000e+00 : f32
    %315 = vector.broadcast %cst_58 : f32 to vector<2x128xf32>
    %316 = arith.addf %315, %314 : vector<2x128xf32>
    %317 = arith.divf %315, %316 : vector<2x128xf32>
    %318 = arith.mulf %309, %264 : vector<2x128xf32>
    %319 = arith.mulf %303, %311 : vector<2x128xf32>
    %320 = arith.addf %318, %319 : vector<2x128xf32>
    %321 = math.tanh %320 : vector<2x128xf32>
    %322 = arith.mulf %317, %321 : vector<2x128xf32>
    %323 = tpu.concatenate %322, %294 in 1 : vector<2x128xf32>, vector<2x128xf32> -> vector<2x256xf32>
    %cst_59 = arith.constant dense<0.000000e+00> : vector<2x512xf32>
    %324 = tpu.matmul %323, %7, %cst_59 {dimension_numbers = #tpu.dot_dimension_numbers<[1], [0], [0], [1], [0, 0, 1, 1], [], []>} : vector<2x256xf32>, vector<256x512xf32>, vector<2x512xf32> -> vector<2x512xf32>
    %325 = arith.addf %324, %10 : vector<2x512xf32>
    %326 = vector.extract_strided_slice %325 {offsets = [0, 0], sizes = [2, 128], strides = [1, 1]} : vector<2x512xf32> to vector<2x128xf32>
    %327 = arith.negf %326 : vector<2x128xf32>
    %328 = math.exp %327 : vector<2x128xf32>
    %cst_60 = arith.constant 1.000000e+00 : f32
    %329 = vector.broadcast %cst_60 : f32 to vector<2x128xf32>
    %330 = arith.addf %329, %328 : vector<2x128xf32>
    %331 = arith.divf %329, %330 : vector<2x128xf32>
    %332 = vector.extract_strided_slice %325 {offsets = [0, 128], sizes = [2, 128], strides = [1, 1]} : vector<2x512xf32> to vector<2x128xf32>
    %333 = arith.negf %332 : vector<2x128xf32>
    %334 = math.exp %333 : vector<2x128xf32>
    %cst_61 = arith.constant 1.000000e+00 : f32
    %335 = vector.broadcast %cst_61 : f32 to vector<2x128xf32>
    %336 = arith.addf %335, %334 : vector<2x128xf32>
    %337 = arith.divf %335, %336 : vector<2x128xf32>
    %338 = vector.extract_strided_slice %325 {offsets = [0, 256], sizes = [2, 128], strides = [1, 1]} : vector<2x512xf32> to vector<2x128xf32>
    %339 = math.tanh %338 : vector<2x128xf32>
    %340 = vector.extract_strided_slice %325 {offsets = [0, 384], sizes = [2, 128], strides = [1, 1]} : vector<2x512xf32> to vector<2x128xf32>
    %341 = arith.negf %340 : vector<2x128xf32>
    %342 = math.exp %341 : vector<2x128xf32>
    %cst_62 = arith.constant 1.000000e+00 : f32
    %343 = vector.broadcast %cst_62 : f32 to vector<2x128xf32>
    %344 = arith.addf %343, %342 : vector<2x128xf32>
    %345 = arith.divf %343, %344 : vector<2x128xf32>
    %346 = arith.mulf %337, %292 : vector<2x128xf32>
    %347 = arith.mulf %331, %339 : vector<2x128xf32>
    %348 = arith.addf %346, %347 : vector<2x128xf32>
    %349 = math.tanh %348 : vector<2x128xf32>
    %350 = arith.mulf %345, %349 : vector<2x128xf32>
    %351 = vector.extract_strided_slice %5 {offsets = [12, 0], sizes = [2, 512], strides = [1, 1]} : vector<16x512xf32> to vector<2x512xf32>
    %cst_63 = arith.constant dense<0.000000e+00> : vector<2x512xf32>
    %352 = tpu.matmul %322, %6, %cst_63 {dimension_numbers = #tpu.dot_dimension_numbers<[1], [0], [0], [1], [0, 0, 1, 1], [], []>} : vector<2x128xf32>, vector<128x512xf32>, vector<2x512xf32> -> vector<2x512xf32>
    %353 = arith.addf %351, %352 : vector<2x512xf32>
    %354 = vector.extract_strided_slice %353 {offsets = [0, 0], sizes = [2, 128], strides = [1, 1]} : vector<2x512xf32> to vector<2x128xf32>
    %355 = arith.negf %354 : vector<2x128xf32>
    %356 = math.exp %355 : vector<2x128xf32>
    %cst_64 = arith.constant 1.000000e+00 : f32
    %357 = vector.broadcast %cst_64 : f32 to vector<2x128xf32>
    %358 = arith.addf %357, %356 : vector<2x128xf32>
    %359 = arith.divf %357, %358 : vector<2x128xf32>
    %360 = vector.extract_strided_slice %353 {offsets = [0, 128], sizes = [2, 128], strides = [1, 1]} : vector<2x512xf32> to vector<2x128xf32>
    %361 = arith.negf %360 : vector<2x128xf32>
    %362 = math.exp %361 : vector<2x128xf32>
    %cst_65 = arith.constant 1.000000e+00 : f32
    %363 = vector.broadcast %cst_65 : f32 to vector<2x128xf32>
    %364 = arith.addf %363, %362 : vector<2x128xf32>
    %365 = arith.divf %363, %364 : vector<2x128xf32>
    %366 = vector.extract_strided_slice %353 {offsets = [0, 256], sizes = [2, 128], strides = [1, 1]} : vector<2x512xf32> to vector<2x128xf32>
    %367 = math.tanh %366 : vector<2x128xf32>
    %368 = vector.extract_strided_slice %353 {offsets = [0, 384], sizes = [2, 128], strides = [1, 1]} : vector<2x512xf32> to vector<2x128xf32>
    %369 = arith.negf %368 : vector<2x128xf32>
    %370 = math.exp %369 : vector<2x128xf32>
    %cst_66 = arith.constant 1.000000e+00 : f32
    %371 = vector.broadcast %cst_66 : f32 to vector<2x128xf32>
    %372 = arith.addf %371, %370 : vector<2x128xf32>
    %373 = arith.divf %371, %372 : vector<2x128xf32>
    %374 = arith.mulf %365, %320 : vector<2x128xf32>
    %375 = arith.mulf %359, %367 : vector<2x128xf32>
    %376 = arith.addf %374, %375 : vector<2x128xf32>
    %377 = math.tanh %376 : vector<2x128xf32>
    %378 = arith.mulf %373, %377 : vector<2x128xf32>
    %379 = tpu.concatenate %378, %350 in 1 : vector<2x128xf32>, vector<2x128xf32> -> vector<2x256xf32>
    %cst_67 = arith.constant dense<0.000000e+00> : vector<2x512xf32>
    %380 = tpu.matmul %379, %7, %cst_67 {dimension_numbers = #tpu.dot_dimension_numbers<[1], [0], [0], [1], [0, 0, 1, 1], [], []>} : vector<2x256xf32>, vector<256x512xf32>, vector<2x512xf32> -> vector<2x512xf32>
    %381 = arith.addf %380, %10 : vector<2x512xf32>
    %382 = vector.extract_strided_slice %381 {offsets = [0, 0], sizes = [2, 128], strides = [1, 1]} : vector<2x512xf32> to vector<2x128xf32>
    %383 = arith.negf %382 : vector<2x128xf32>
    %384 = math.exp %383 : vector<2x128xf32>
    %cst_68 = arith.constant 1.000000e+00 : f32
    %385 = vector.broadcast %cst_68 : f32 to vector<2x128xf32>
    %386 = arith.addf %385, %384 : vector<2x128xf32>
    %387 = arith.divf %385, %386 : vector<2x128xf32>
    %388 = vector.extract_strided_slice %381 {offsets = [0, 128], sizes = [2, 128], strides = [1, 1]} : vector<2x512xf32> to vector<2x128xf32>
    %389 = arith.negf %388 : vector<2x128xf32>
    %390 = math.exp %389 : vector<2x128xf32>
    %cst_69 = arith.constant 1.000000e+00 : f32
    %391 = vector.broadcast %cst_69 : f32 to vector<2x128xf32>
    %392 = arith.addf %391, %390 : vector<2x128xf32>
    %393 = arith.divf %391, %392 : vector<2x128xf32>
    %394 = vector.extract_strided_slice %381 {offsets = [0, 256], sizes = [2, 128], strides = [1, 1]} : vector<2x512xf32> to vector<2x128xf32>
    %395 = math.tanh %394 : vector<2x128xf32>
    %396 = vector.extract_strided_slice %381 {offsets = [0, 384], sizes = [2, 128], strides = [1, 1]} : vector<2x512xf32> to vector<2x128xf32>
    %397 = arith.negf %396 : vector<2x128xf32>
    %398 = math.exp %397 : vector<2x128xf32>
    %cst_70 = arith.constant 1.000000e+00 : f32
    %399 = vector.broadcast %cst_70 : f32 to vector<2x128xf32>
    %400 = arith.addf %399, %398 : vector<2x128xf32>
    %401 = arith.divf %399, %400 : vector<2x128xf32>
    %402 = arith.mulf %393, %348 : vector<2x128xf32>
    %403 = arith.mulf %387, %395 : vector<2x128xf32>
    %404 = arith.addf %402, %403 : vector<2x128xf32>
    %405 = math.tanh %404 : vector<2x128xf32>
    %406 = arith.mulf %401, %405 : vector<2x128xf32>
    %407 = vector.extract_strided_slice %5 {offsets = [14, 0], sizes = [2, 512], strides = [1, 1]} : vector<16x512xf32> to vector<2x512xf32>
    %cst_71 = arith.constant dense<0.000000e+00> : vector<2x512xf32>
    %408 = tpu.matmul %378, %6, %cst_71 {dimension_numbers = #tpu.dot_dimension_numbers<[1], [0], [0], [1], [0, 0, 1, 1], [], []>} : vector<2x128xf32>, vector<128x512xf32>, vector<2x512xf32> -> vector<2x512xf32>
    %409 = arith.addf %407, %408 : vector<2x512xf32>
    %410 = vector.extract_strided_slice %409 {offsets = [0, 0], sizes = [2, 128], strides = [1, 1]} : vector<2x512xf32> to vector<2x128xf32>
    %411 = arith.negf %410 : vector<2x128xf32>
    %412 = math.exp %411 : vector<2x128xf32>
    %cst_72 = arith.constant 1.000000e+00 : f32
    %413 = vector.broadcast %cst_72 : f32 to vector<2x128xf32>
    %414 = arith.addf %413, %412 : vector<2x128xf32>
    %415 = arith.divf %413, %414 : vector<2x128xf32>
    %416 = vector.extract_strided_slice %409 {offsets = [0, 128], sizes = [2, 128], strides = [1, 1]} : vector<2x512xf32> to vector<2x128xf32>
    %417 = arith.negf %416 : vector<2x128xf32>
    %418 = math.exp %417 : vector<2x128xf32>
    %cst_73 = arith.constant 1.000000e+00 : f32
    %419 = vector.broadcast %cst_73 : f32 to vector<2x128xf32>
    %420 = arith.addf %419, %418 : vector<2x128xf32>
    %421 = arith.divf %419, %420 : vector<2x128xf32>
    %422 = vector.extract_strided_slice %409 {offsets = [0, 256], sizes = [2, 128], strides = [1, 1]} : vector<2x512xf32> to vector<2x128xf32>
    %423 = math.tanh %422 : vector<2x128xf32>
    %424 = vector.extract_strided_slice %409 {offsets = [0, 384], sizes = [2, 128], strides = [1, 1]} : vector<2x512xf32> to vector<2x128xf32>
    %425 = arith.negf %424 : vector<2x128xf32>
    %426 = math.exp %425 : vector<2x128xf32>
    %cst_74 = arith.constant 1.000000e+00 : f32
    %427 = vector.broadcast %cst_74 : f32 to vector<2x128xf32>
    %428 = arith.addf %427, %426 : vector<2x128xf32>
    %429 = arith.divf %427, %428 : vector<2x128xf32>
    %430 = arith.mulf %421, %376 : vector<2x128xf32>
    %431 = arith.mulf %415, %423 : vector<2x128xf32>
    %432 = arith.addf %430, %431 : vector<2x128xf32>
    %433 = math.tanh %432 : vector<2x128xf32>
    %434 = arith.mulf %429, %433 : vector<2x128xf32>
    %435 = tpu.concatenate %434, %406 in 1 : vector<2x128xf32>, vector<2x128xf32> -> vector<2x256xf32>
    %cst_75 = arith.constant dense<0.000000e+00> : vector<2x512xf32>
    %436 = tpu.matmul %435, %7, %cst_75 {dimension_numbers = #tpu.dot_dimension_numbers<[1], [0], [0], [1], [0, 0, 1, 1], [], []>} : vector<2x256xf32>, vector<256x512xf32>, vector<2x512xf32> -> vector<2x512xf32>
    %437 = arith.addf %436, %10 : vector<2x512xf32>
    %438 = vector.extract_strided_slice %437 {offsets = [0, 0], sizes = [2, 128], strides = [1, 1]} : vector<2x512xf32> to vector<2x128xf32>
    %439 = arith.negf %438 : vector<2x128xf32>
    %440 = math.exp %439 : vector<2x128xf32>
    %cst_76 = arith.constant 1.000000e+00 : f32
    %441 = vector.broadcast %cst_76 : f32 to vector<2x128xf32>
    %442 = arith.addf %441, %440 : vector<2x128xf32>
    %443 = arith.divf %441, %442 : vector<2x128xf32>
    %444 = vector.extract_strided_slice %437 {offsets = [0, 128], sizes = [2, 128], strides = [1, 1]} : vector<2x512xf32> to vector<2x128xf32>
    %445 = arith.negf %444 : vector<2x128xf32>
    %446 = math.exp %445 : vector<2x128xf32>
    %cst_77 = arith.constant 1.000000e+00 : f32
    %447 = vector.broadcast %cst_77 : f32 to vector<2x128xf32>
    %448 = arith.addf %447, %446 : vector<2x128xf32>
    %449 = arith.divf %447, %448 : vector<2x128xf32>
    %450 = vector.extract_strided_slice %437 {offsets = [0, 256], sizes = [2, 128], strides = [1, 1]} : vector<2x512xf32> to vector<2x128xf32>
    %451 = math.tanh %450 : vector<2x128xf32>
    %452 = vector.extract_strided_slice %437 {offsets = [0, 384], sizes = [2, 128], strides = [1, 1]} : vector<2x512xf32> to vector<2x128xf32>
    %453 = arith.negf %452 : vector<2x128xf32>
    %454 = math.exp %453 : vector<2x128xf32>
    %cst_78 = arith.constant 1.000000e+00 : f32
    %455 = vector.broadcast %cst_78 : f32 to vector<2x128xf32>
    %456 = arith.addf %455, %454 : vector<2x128xf32>
    %457 = arith.divf %455, %456 : vector<2x128xf32>
    %458 = arith.mulf %449, %404 : vector<2x128xf32>
    %459 = arith.mulf %443, %451 : vector<2x128xf32>
    %460 = arith.addf %458, %459 : vector<2x128xf32>
    %461 = math.tanh %460 : vector<2x128xf32>
    %462 = arith.mulf %457, %461 : vector<2x128xf32>
    %c0_79 = arith.constant 0 : index
    %c0_80 = arith.constant 0 : index
    %463 = vector.load %arg6[%c0_79, %c0_80] : memref<128x2xf32, #tpu.memory_space<vmem>>, vector<128x2xf32>
    %cst_81 = arith.constant dense<0.000000e+00> : vector<2x2xf32>
    %464 = tpu.matmul %462, %463, %cst_81 {dimension_numbers = #tpu.dot_dimension_numbers<[1], [0], [0], [1], [0, 0, 1, 1], [], []>} : vector<2x128xf32>, vector<128x2xf32>, vector<2x2xf32> -> vector<2x2xf32>
    %c0_82 = arith.constant 0 : index
    %c0_83 = arith.constant 0 : index
    %465 = vector.load %arg7[%c0_82, %c0_83] : memref<1x2xf32, #tpu.memory_space<vmem>>, vector<1x2xf32>
    %466 = vector.broadcast %465 : vector<1x2xf32> to vector<2x2xf32>
    %467 = arith.addf %464, %466 : vector<2x2xf32>
    %c0_84 = arith.constant 0 : index
    %c0_85 = arith.constant 0 : index
    %468 = vector.load %arg8[%c0_84, %c0_85] : memref<2x2xf32, #tpu.memory_space<vmem>>, vector<2x2xf32>
    tpu.vector_store %arg8[%c0_84, %c0_85], %467 {strides = array<i32>} : memref<2x2xf32, #tpu.memory_space<vmem>>, vector<2x2xf32>,
    return
  }
}

</mosaic_0001>

<llo_original>
// kernel: tpu_custom_call.1
$region0: #{tpu_custom_call.1}
  #allocation0 [shape = 'u32[]', space=smem, size = 0x4, offset = 0x4, fixed_abs, tag = 'smem constant byte address 0x4 - core index']
  #allocation1 [shape = 'u32[144,128]{1,0:T(1,128)}', space=vmem, size = 0x12000, scoped, tag = 'internal scratch']
  %s0 = inlined_call_operand.vmem [shape: f32[16,2], index: 0, kind: input, shape index: {}]
  %s1 = inlined_call_operand.vmem [shape: f32[2,512], index: 1, kind: input, shape index: {}]
  %s2 = inlined_call_operand.hbm [shape: f32[128,512], index: 2, kind: input, shape index: {}]
  %s3 = inlined_call_operand.vmem [shape: f32[1,512], index: 3, kind: input, shape index: {}]
  %s4 = inlined_call_operand.hbm [shape: f32[256,512], index: 4, kind: input, shape index: {}]
  %s5 = inlined_call_operand.vmem [shape: f32[1,512], index: 5, kind: input, shape index: {}]
  %s6 = inlined_call_operand.vmem [shape: f32[128,2], index: 6, kind: input, shape index: {}]
  %s7 = inlined_call_operand.vmem [shape: f32[1,2], index: 7, kind: input, shape index: {}]
  %s8 = inlined_call_operand.hbm [shape: f32[2,2], index: 8, kind: output, shape index: {}]
  %s9 = sld [smem:[#allocation0]]
  $region50: #{tpu_custom_call.1} parent=0
    _
  %s11 = ssub.s32 1, %s9
  %s12 = scalar_select 0, %s11, %s9
  $region1: #{tpu_custom_call.1} parent=0
    #allocation2 [shape = 'u8[262144]{0}', space=vmem, size = 0x40000, scoped, tag = 'input window, operand 2, single buffered']
    #allocation3 [shape = 's32[1]{0}', space=sflag, size = 0x4, scoped, tag = 'scoped memory for tpu_custom_call.1']
    #allocation4 [shape = 's32[1]{0}', space=sflag, size = 0x4, scoped, tag = 'scoped memory for tpu_custom_call.1']
    #allocation5 [shape = 'u8[524288]{0}', space=vmem, size = 0x80000, scoped, tag = 'input window, operand 4, single buffered']
    #allocation6 [shape = 's32[1]{0}', space=sflag, size = 0x4, scoped, tag = 'scoped memory for tpu_custom_call.1']
    #allocation7 [shape = 'u8[1024]{0}', space=vmem, size = 0x400, scoped, tag = 'output window, operand 0, single buffered']
    %13 = vsyncpa [#allocation3], 0
    %14 = vsyncpa [#allocation6], 0
    %15 = vsyncpa [#allocation4], 0
    // Predicated region
    $region2: #{tpu_custom_call.1} parent=1 // pred_check
      _
    $region3: #{tpu_custom_call.1} parent=1 // pred_check_branch
      %17 = sbr.rel (0) target = $region5
    $region4: #{tpu_custom_call.1} parent=1 // pred_region
      _
    $region5: #{tpu_custom_call.1} parent=1 // pred_fallthru
      _
    // Predicated region
    $region6: #{tpu_custom_call.1} parent=1 // pred_check
      _
    $region7: #{tpu_custom_call.1} parent=1 // pred_check_branch
      %19 = sbr.rel (0) target = $region9
    $region8: #{tpu_custom_call.1} parent=1 // pred_region
      _
    $region9: #{tpu_custom_call.1} parent=1 // pred_fallthru
      _
    // Predicated region
    $region10: #{tpu_custom_call.1} parent=1 // pred_check
      _
    $region11: #{tpu_custom_call.1} parent=1 // pred_check_branch
      %21 = sbr.rel (0) target = $region13
    $region12: #{tpu_custom_call.1} parent=1 // pred_region
      %s23 = ssub.s32 8192, 8192
      %24 = vsyncadd [#allocation3], %s23
      %s25 = sshll.u32 [#allocation2], 4
      %s26 = int_to_ptr.vmem [resolvable:$true] %s25
      %31 = dma.hbm_to_vmem [thread:$0]  %s2, 8192, %s26, [#allocation3], 512, 512, 32
    $region13: #{tpu_custom_call.1} parent=1 // pred_fallthru
      _
    // Predicated region
    $region14: #{tpu_custom_call.1} parent=1 // pred_check
      _
    $region15: #{tpu_custom_call.1} parent=1 // pred_check_branch
      %33 = sbr.rel (0) target = $region17
    $region16: #{tpu_custom_call.1} parent=1 // pred_region
      _
    $region17: #{tpu_custom_call.1} parent=1 // pred_fallthru
      _
    // Predicated region
    $region18: #{tpu_custom_call.1} parent=1 // pred_check
      _
    $region19: #{tpu_custom_call.1} parent=1 // pred_check_branch
      %35 = sbr.rel (0) target = $region21
    $region20: #{tpu_custom_call.1} parent=1 // pred_region
      %s37 = ssub.s32 16384, 16384
      %38 = vsyncadd [#allocation6], %s37
      %s39 = sshll.u32 [#allocation5], 4
      %s40 = int_to_ptr.vmem [resolvable:$true] %s39
      %45 = dma.hbm_to_vmem [thread:$0]  %s4, 16384, %s40, [#allocation6], 512, 512, 32
    $region21: #{tpu_custom_call.1} parent=1 // pred_fallthru
      _
    // Predicated region
    $region22: #{tpu_custom_call.1} parent=1 // pred_check
      _
    $region23: #{tpu_custom_call.1} parent=1 // pred_check_branch
      %47 = sbr.rel (0) target = $region25
    $region24: #{tpu_custom_call.1} parent=1 // pred_region
      _
    $region25: #{tpu_custom_call.1} parent=1 // pred_fallthru
      _
    // Predicated region
    $region26: #{tpu_custom_call.1} parent=1 // pred_check
      _
    $region27: #{tpu_custom_call.1} parent=1 // pred_check_branch
      %49 = sbr.rel (0) target = $region29
    $region28: #{tpu_custom_call.1} parent=1 // pred_region
      _
    $region29: #{tpu_custom_call.1} parent=1 // pred_fallthru
      _
    // Predicated region
    $region30: #{tpu_custom_call.1} parent=1 // pred_check
      _
    $region31: #{tpu_custom_call.1} parent=1 // pred_check_branch
      %51 = sbr.rel (0) target = $region33
    $region32: #{tpu_custom_call.1} parent=1 // pred_region
      _
    $region33: #{tpu_custom_call.1} parent=1 // pred_fallthru
      _
    // Predicated region
    $region34: #{tpu_custom_call.1} parent=1 // pred_check
      _
    $region35: #{tpu_custom_call.1} parent=1 // pred_check_branch
      %53 = sbr.rel (0) target = $region37
    $region36: #{tpu_custom_call.1} parent=1 // pred_region
      %54 = dma.done [#allocation3], 8192
    $region37: #{tpu_custom_call.1} parent=1 // pred_fallthru
      _
    // Predicated region
    $region38: #{tpu_custom_call.1} parent=1 // pred_check
      _
    $region39: #{tpu_custom_call.1} parent=1 // pred_check_branch
      %56 = sbr.rel (0) target = $region41
    $region40: #{tpu_custom_call.1} parent=1 // pred_region
      %57 = dma.done [#allocation6], 16384
    $region41: #{tpu_custom_call.1} parent=1 // pred_fallthru
      _
    %v58 = vld [vmem:[%s0] sm:$0xff]
    %v59 = vld [vmem:[%s0 + $0x8] sm:$0xff]
    %v60 = vld [vmem:[%s1] sm:$0xff]
    %v61 = vld [vmem:[%s3] sm:$0xf]
    %v63 = vlaneseq
    %v64 = vshrl.u32 %v63, 7
    %v65 = vsub.s32 0, %v64
    %v66 = vrot.slane %v61, %v65
    %v67 = vlaneseq
    %v68 = vshrl.u32 %v67, 7
    %v69 = vsub.s32 1, %v68
    %v70 = vrot.slane %v61, %v69
    %v71 = vlaneseq
    %v72 = vshrl.u32 %v71, 7
    %v73 = vsub.s32 2, %v72
    %v74 = vrot.slane %v61, %v73
    %v75 = vlaneseq
    %v76 = vshrl.u32 %v75, 7
    %v77 = vsub.s32 3, %v76
    %v78 = vrot.slane %v61, %v77
    %v84 = vcombine.high %v60, %v60
    %v86 = vunpack.c.l.s4 1983009808
    %v87 = vunpack.c.0.s8 %v86
    %v88 = vlaneseq
    %v89 = vshrl.u32 %v88, 7
    %v90 = vsub.s32 %v87, %v89
    %v91 = vrot.slane %v60, %v90
    %v93 = vunpack.c.l.s4 1983009808
    %v94 = vunpack.c.0.s8 %v93
    %v95 = vlaneseq
    %v96 = vshrl.u32 %v95, 7
    %v97 = vsub.s32 %v94, %v96
    %v98 = vrot.slane %v84, %v97
    %v99 = vcombine.high %v91, %v91
    %v100 = vcombine.high %v98, %v98
    %vm101 = vcmask 15360
    %v103 = vsel %vm101, %v58, 0
    %v106 = vsel %vm101, %v59, 0
    %vm108 = vcmask 1041408
    %v109 = vsel %vm108, %v91, 0
    %v111 = vsel %vm108, %v99, 0
    %v113 = vsel %vm108, %v98, 0
    %v115 = vsel %vm108, %v100, 0
    %117 = vmatprep.subr.mxu0 %v111
    %118 = vmatpush1.msra.mxu0 %v109
    %119 = vmatprep.subr.mxu0 0.0
    %120 = vmatpush1.msra.mxu0 0.0
    %121 = vmatprep.subr.mxu0 0.0
    %122 = vmatpush1.msra.mxu0 0.0
    %123 = vmatprep.subr.mxu0 0.0
    %124 = vmatpush1.msra.mxu0 0.0
    %125 = vmatprep.subr.mxu0 0.0
    %126 = vmatpush1.msra.mxu0 0.0
    %127 = vmatprep.subr.mxu0 0.0
    %128 = vmatpush1.msra.mxu0 0.0
    %129 = vmatprep.subr.mxu0 0.0
    %130 = vmatpush1.msra.mxu0 0.0
    %131 = vmatprep.subr.mxu0 0.0
    %132 = vmatpush1.msra.mxu0 0.0
    %133 = vmatprep.subr.mxu0 0.0
    %134 = vmatpush1.msra.mxu0 0.0
    %135 = vmatprep.subr.mxu0 0.0
    %136 = vmatpush1.msra.mxu0 0.0
    %137 = vmatprep.subr.mxu0 0.0
    %138 = vmatpush1.msra.mxu0 0.0
    %139 = vmatprep.subr.mxu0 0.0
    %140 = vmatpush1.msra.mxu0 0.0
    %141 = vmatprep.subr.mxu0 0.0
    %142 = vmatpush1.msra.mxu0 0.0
    %143 = vmatprep.subr.mxu0 0.0
    %144 = vmatpush1.msra.mxu0 0.0
    %145 = vmatprep.subr.mxu0 0.0
    %146 = vmatpush1.msra.mxu0 0.0
    %147 = vmatprep.subr.mxu0 0.0
    %148 = vmatpush1.msra.mxu0 0.0
    %149 = vmatprep.subr.mxu0 0.0
    %150 = vmatpush1.msra.mxu0 0.0
    %151 = vmatprep.subr.mxu0 0.0
    %152 = vmatpush1.msra.mxu0 0.0
    %153 = vmatprep.subr.mxu0 0.0
    %154 = vmatpush1.msra.mxu0 0.0
    %155 = vmatprep.subr.mxu0 0.0
    %156 = vmatpush1.msra.mxu0 0.0
    %157 = vmatprep.subr.mxu0 0.0
    %158 = vmatpush1.msra.mxu0 0.0
    %159 = vmatprep.subr.mxu0 0.0
    %160 = vmatpush1.msra.mxu0 0.0
    %161 = vmatprep.subr.mxu0 0.0
    %162 = vmatpush1.msra.mxu0 0.0
    %163 = vmatprep.subr.mxu0 0.0
    %164 = vmatpush1.msra.mxu0 0.0
    %165 = vmatprep.subr.mxu0 0.0
    %166 = vmatpush1.msra.mxu0 0.0
    %167 = vmatprep.subr.mxu0 0.0
    %168 = vmatpush1.msra.mxu0 0.0
    %169 = vmatprep.subr.mxu0 0.0
    %170 = vmatpush1.msra.mxu0 0.0
    %171 = vmatprep.subr.mxu0 0.0
    %172 = vmatpush1.msra.mxu0 0.0
    %173 = vmatprep.subr.mxu0 0.0
    %174 = vmatpush1.msra.mxu0 0.0
    %175 = vmatprep.subr.mxu0 0.0
    %176 = vmatpush1.msra.mxu0 0.0
    %177 = vmatprep.subr.mxu0 0.0
    %178 = vmatpush1.msra.mxu0 0.0
    %179 = vmatprep.subr.mxu0 0.0
    %180 = vmatpush1.msra.mxu0 0.0
    %181 = vmatprep.mubr.f32.mxu0 0.0
    %182 = vmatmul.mubr.f32.gmra.mrb[0].mxu0 %v103
    %v183 = vpop.f32.mrb[0].mxu0
    %v184 = vadd.f32 %v66, %v183
    %v185 = vpop.f32.mrb[0].mxu0
    %v186 = vadd.f32 %v70, %v185
    %187 = vmatprep.mubr.f32.mxu0 0.0
    %188 = vmatmul.mubr.f32.gmra.mrb[0].mxu0 %v106
    %v189 = vpop.f32.mrb[0].mxu0
    %v190 = vadd.f32 %v66, %v189
    %v191 = vpop.f32.mrb[0].mxu0
    %v192 = vadd.f32 %v70, %v191
    %193 = vdwg.mxu0
    %194 = vmatprep.subr.mxu0 %v115
    %195 = vmatpush1.msra.mxu0 %v113
    %196 = vmatprep.subr.mxu0 0.0
    %197 = vmatpush1.msra.mxu0 0.0
    %198 = vmatprep.subr.mxu0 0.0
    %199 = vmatpush1.msra.mxu0 0.0
    %200 = vmatprep.subr.mxu0 0.0
    %201 = vmatpush1.msra.mxu0 0.0
    %202 = vmatprep.subr.mxu0 0.0
    %203 = vmatpush1.msra.mxu0 0.0
    %204 = vmatprep.subr.mxu0 0.0
    %205 = vmatpush1.msra.mxu0 0.0
    %206 = vmatprep.subr.mxu0 0.0
    %207 = vmatpush1.msra.mxu0 0.0
    %208 = vmatprep.subr.mxu0 0.0
    %209 = vmatpush1.msra.mxu0 0.0
    %210 = vmatprep.subr.mxu0 0.0
    %211 = vmatpush1.msra.mxu0 0.0
    %212 = vmatprep.subr.mxu0 0.0
    %213 = vmatpush1.msra.mxu0 0.0
    %214 = vmatprep.subr.mxu0 0.0
    %215 = vmatpush1.msra.mxu0 0.0
    %216 = vmatprep.subr.mxu0 0.0
    %217 = vmatpush1.msra.mxu0 0.0
    %218 = vmatprep.subr.mxu0 0.0
    %219 = vmatpush1.msra.mxu0 0.0
    %220 = vmatprep.subr.mxu0 0.0
    %221 = vmatpush1.msra.mxu0 0.0
    %222 = vmatprep.subr.mxu0 0.0
    %223 = vmatpush1.msra.mxu0 0.0
    %224 = vmatprep.subr.mxu0 0.0
    %225 = vmatpush1.msra.mxu0 0.0
    %226 = vmatprep.subr.mxu0 0.0
    %227 = vmatpush1.msra.mxu0 0.0
    %228 = vmatprep.subr.mxu0 0.0
    %229 = vmatpush1.msra.mxu0 0.0
    %230 = vmatprep.subr.mxu0 0.0
    %231 = vmatpush1.msra.mxu0 0.0
    %232 = vmatprep.subr.mxu0 0.0
    %233 = vmatpush1.msra.mxu0 0.0
    %234 = vmatprep.subr.mxu0 0.0
    %235 = vmatpush1.msra.mxu0 0.0
    %236 = vmatprep.subr.mxu0 0.0
    %237 = vmatpush1.msra.mxu0 0.0
    %238 = vmatprep.subr.mxu0 0.0
    %239 = vmatpush1.msra.mxu0 0.0
    %240 = vmatprep.subr.mxu0 0.0
    %241 = vmatpush1.msra.mxu0 0.0
    %242 = vmatprep.subr.mxu0 0.0
    %243 = vmatpush1.msra.mxu0 0.0
    %244 = vmatprep.subr.mxu0 0.0
    %245 = vmatpush1.msra.mxu0 0.0
    %246 = vmatprep.subr.mxu0 0.0
    %247 = vmatpush1.msra.mxu0 0.0
    %248 = vmatprep.subr.mxu0 0.0
    %249 = vmatpush1.msra.mxu0 0.0
    %250 = vmatprep.subr.mxu0 0.0
    %251 = vmatpush1.msra.mxu0 0.0
    %252 = vmatprep.subr.mxu0 0.0
    %253 = vmatpush1.msra.mxu0 0.0
    %254 = vmatprep.subr.mxu0 0.0
    %255 = vmatpush1.msra.mxu0 0.0
    %256 = vmatprep.subr.mxu0 0.0
    %257 = vmatpush1.msra.mxu0 0.0
    %258 = vmatprep.mubr.f32.mxu0 0.0
    %259 = vmatmul.mubr.f32.gmra.mrb[0].mxu0 %v103
    %v260 = vpop.f32.mrb[0].mxu0
    %v261 = vadd.f32 %v74, %v260
    %v262 = vpop.f32.mrb[0].mxu0
    %v263 = vadd.f32 %v78, %v262
    %264 = vmatprep.mubr.f32.mxu0 0.0
    %265 = vmatmul.mubr.f32.gmra.mrb[0].mxu0 %v106
    %v266 = vpop.f32.mrb[0].mxu0
    %v267 = vadd.f32 %v74, %v266
    %v268 = vpop.f32.mrb[0].mxu0
    %v269 = vadd.f32 %v78, %v268
    %270 = vdwg.mxu0
    %v271 = vld [vmem:[#allocation2] sm:$0xff]
    %v272 = vld [vmem:[#allocation2 + $0x8] sm:$0xff]
    %v273 = vld [vmem:[#allocation2 + $0x10] sm:$0xff]
    %v274 = vld [vmem:[#allocation2 + $0x18] sm:$0xff]
    %v275 = vld [vmem:[#allocation2 + $0x20] sm:$0xff]
    %v276 = vld [vmem:[#allocation2 + $0x28] sm:$0xff]
    %v277 = vld [vmem:[#allocation2 + $0x30] sm:$0xff]
    %v278 = vld [vmem:[#allocation2 + $0x38] sm:$0xff]
    %v279 = vld [vmem:[#allocation2 + $0x40] sm:$0xff]
    %v280 = vld [vmem:[#allocation2 + $0x48] sm:$0xff]
    %v281 = vld [vmem:[#allocation2 + $0x50] sm:$0xff]
    %v282 = vld [vmem:[#allocation2 + $0x58] sm:$0xff]
    %v283 = vld [vmem:[#allocation2 + $0x60] sm:$0xff]
    %v284 = vld [vmem:[#allocation2 + $0x68] sm:$0xff]
    %v285 = vld [vmem:[#allocation2 + $0x70] sm:$0xff]
    %v286 = vld [vmem:[#allocation2 + $0x78] sm:$0xff]
    %v287 = vld [vmem:[#allocation2 + $0x80] sm:$0xff]
    %v288 = vld [vmem:[#allocation2 + $0x88] sm:$0xff]
    %v289 = vld [vmem:[#allocation2 + $0x90] sm:$0xff]
    %v290 = vld [vmem:[#allocation2 + $0x98] sm:$0xff]
    %v291 = vld [vmem:[#allocation2 + $0xa0] sm:$0xff]
    %v292 = vld [vmem:[#allocation2 + $0xa8] sm:$0xff]
    %v293 = vld [vmem:[#allocation2 + $0xb0] sm:$0xff]
    %v294 = vld [vmem:[#allocation2 + $0xb8] sm:$0xff]
    %v295 = vld [vmem:[#allocation2 + $0xc0] sm:$0xff]
    %v296 = vld [vmem:[#allocation2 + $0xc8] sm:$0xff]
    %v297 = vld [vmem:[#allocation2 + $0xd0] sm:$0xff]
    %v298 = vld [vmem:[#allocation2 + $0xd8] sm:$0xff]
    %v299 = vld [vmem:[#allocation2 + $0xe0] sm:$0xff]
    %v300 = vld [vmem:[#allocation2 + $0xe8] sm:$0xff]
    %v301 = vld [vmem:[#allocation2 + $0xf0] sm:$0xff]
    %v302 = vld [vmem:[#allocation2 + $0xf8] sm:$0xff]
    %v303 = vld [vmem:[#allocation2 + $0x100] sm:$0xff]
    %v304 = vld [vmem:[#allocation2 + $0x108] sm:$0xff]
    %v305 = vld [vmem:[#allocation2 + $0x110] sm:$0xff]
    %v306 = vld [vmem:[#allocation2 + $0x118] sm:$0xff]
    %v307 = vld [vmem:[#allocation2 + $0x120] sm:$0xff]
    %v308 = vld [vmem:[#allocation2 + $0x128] sm:$0xff]
    %v309 = vld [vmem:[#allocation2 + $0x130] sm:$0xff]
    %v310 = vld [vmem:[#allocation2 + $0x138] sm:$0xff]
    %v311 = vld [vmem:[#allocation2 + $0x140] sm:$0xff]
    %v312 = vld [vmem:[#allocation2 + $0x148] sm:$0xff]
    %v313 = vld [vmem:[#allocation2 + $0x150] sm:$0xff]
    %v314 = vld [vmem:[#allocation2 + $0x158] sm:$0xff]
    %v315 = vld [vmem:[#allocation2 + $0x160] sm:$0xff]
    %v316 = vld [vmem:[#allocation2 + $0x168] sm:$0xff]
    %v317 = vld [vmem:[#allocation2 + $0x170] sm:$0xff]
    %v318 = vld [vmem:[#allocation2 + $0x178] sm:$0xff]
    %v319 = vld [vmem:[#allocation2 + $0x180] sm:$0xff]
    %v320 = vld [vmem:[#allocation2 + $0x188] sm:$0xff]
    %v321 = vld [vmem:[#allocation2 + $0x190] sm:$0xff]
    %v322 = vld [vmem:[#allocation2 + $0x198] sm:$0xff]
    %v323 = vld [vmem:[#allocation2 + $0x1a0] sm:$0xff]
    %v324 = vld [vmem:[#allocation2 + $0x1a8] sm:$0xff]
    %v325 = vld [vmem:[#allocation2 + $0x1b0] sm:$0xff]
    %v326 = vld [vmem:[#allocation2 + $0x1b8] sm:$0xff]
    %v327 = vld [vmem:[#allocation2 + $0x1c0] sm:$0xff]
    %v328 = vld [vmem:[#allocation2 + $0x1c8] sm:$0xff]
    %v329 = vld [vmem:[#allocation2 + $0x1d0] sm:$0xff]
    %v330 = vld [vmem:[#allocation2 + $0x1d8] sm:$0xff]
    %v331 = vld [vmem:[#allocation2 + $0x1e0] sm:$0xff]
    %v332 = vld [vmem:[#allocation2 + $0x1e8] sm:$0xff]
    %v333 = vld [vmem:[#allocation2 + $0x1f0] sm:$0xff]
    %v334 = vld [vmem:[#allocation2 + $0x1f8] sm:$0xff]
    %v335 = vld [vmem:[#allocation5] sm:$0xff]
    %v336 = vld [vmem:[#allocation5 + $0x8] sm:$0xff]
    %v337 = vld [vmem:[#allocation5 + $0x10] sm:$0xff]
    %v338 = vld [vmem:[#allocation5 + $0x18] sm:$0xff]
    %v339 = vld [vmem:[#allocation5 + $0x20] sm:$0xff]
    %v340 = vld [vmem:[#allocation5 + $0x28] sm:$0xff]
    %v341 = vld [vmem:[#allocation5 + $0x30] sm:$0xff]
    %v342 = vld [vmem:[#allocation5 + $0x38] sm:$0xff]
    %v343 = vld [vmem:[#allocation5 + $0x40] sm:$0xff]
    %v344 = vld [vmem:[#allocation5 + $0x48] sm:$0xff]
    %v345 = vld [vmem:[#allocation5 + $0x50] sm:$0xff]
    %v346 = vld [vmem:[#allocation5 + $0x58] sm:$0xff]
    %v347 = vld [vmem:[#allocation5 + $0x60] sm:$0xff]
    %v348 = vld [vmem:[#allocation5 + $0x68] sm:$0xff]
    %v349 = vld [vmem:[#allocation5 + $0x70] sm:$0xff]
    %v350 = vld [vmem:[#allocation5 + $0x78] sm:$0xff]
    %v351 = vld [vmem:[#allocation5 + $0x80] sm:$0xff]
    %v352 = vld [vmem:[#allocation5 + $0x88] sm:$0xff]
    %v353 = vld [vmem:[#allocation5 + $0x90] sm:$0xff]
    %v354 = vld [vmem:[#allocation5 + $0x98] sm:$0xff]
    %v355 = vld [vmem:[#allocation5 + $0xa0] sm:$0xff]
    %v356 = vld [vmem:[#allocation5 + $0xa8] sm:$0xff]
    %v357 = vld [vmem:[#allocation5 + $0xb0] sm:$0xff]
    %v358 = vld [vmem:[#allocation5 + $0xb8] sm:$0xff]
    %v359 = vld [vmem:[#allocation5 + $0xc0] sm:$0xff]
    %v360 = vld [vmem:[#allocation5 + $0xc8] sm:$0xff]
    %v361 = vld [vmem:[#allocation5 + $0xd0] sm:$0xff]
    %v362 = vld [vmem:[#allocation5 + $0xd8] sm:$0xff]
    %v363 = vld [vmem:[#allocation5 + $0xe0] sm:$0xff]
    %v364 = vld [vmem:[#allocation5 + $0xe8] sm:$0xff]
    %v365 = vld [vmem:[#allocation5 + $0xf0] sm:$0xff]
    %v366 = vld [vmem:[#allocation5 + $0xf8] sm:$0xff]
    %v367 = vld [vmem:[#allocation5 + $0x100] sm:$0xff]
    %v368 = vld [vmem:[#allocation5 + $0x108] sm:$0xff]
    %v369 = vld [vmem:[#allocation5 + $0x110] sm:$0xff]
    %v370 = vld [vmem:[#allocation5 + $0x118] sm:$0xff]
    %v371 = vld [vmem:[#allocation5 + $0x120] sm:$0xff]
    %v372 = vld [vmem:[#allocation5 + $0x128] sm:$0xff]
    %v373 = vld [vmem:[#allocation5 + $0x130] sm:$0xff]
    %v374 = vld [vmem:[#allocation5 + $0x138] sm:$0xff]
    %v375 = vld [vmem:[#allocation5 + $0x140] sm:$0xff]
    %v376 = vld [vmem:[#allocation5 + $0x148] sm:$0xff]
    %v377 = vld [vmem:[#allocation5 + $0x150] sm:$0xff]
    %v378 = vld [vmem:[#allocation5 + $0x158] sm:$0xff]
    %v379 = vld [vmem:[#allocation5 + $0x160] sm:$0xff]
    %v380 = vld [vmem:[#allocation5 + $0x168] sm:$0xff]
    %v381 = vld [vmem:[#allocation5 + $0x170] sm:$0xff]
    %v382 = vld [vmem:[#allocation5 + $0x178] sm:$0xff]
    %v383 = vld [vmem:[#allocation5 + $0x180] sm:$0xff]
    %v384 = vld [vmem:[#allocation5 + $0x188] sm:$0xff]
    %v385 = vld [vmem:[#allocation5 + $0x190] sm:$0xff]
    %v386 = vld [vmem:[#allocation5 + $0x198] sm:$0xff]
    %v387 = vld [vmem:[#allocation5 + $0x1a0] sm:$0xff]
    %v388 = vld [vmem:[#allocation5 + $0x1a8] sm:$0xff]
    %v389 = vld [vmem:[#allocation5 + $0x1b0] sm:$0xff]
    %v390 = vld [vmem:[#allocation5 + $0x1b8] sm:$0xff]
    %v391 = vld [vmem:[#allocation5 + $0x1c0] sm:$0xff]
    %v392 = vld [vmem:[#allocation5 + $0x1c8] sm:$0xff]
    %v393 = vld [vmem:[#allocation5 + $0x1d0] sm:$0xff]
    %v394 = vld [vmem:[#allocation5 + $0x1d8] sm:$0xff]
    %v395 = vld [vmem:[#allocation5 + $0x1e0] sm:$0xff]
    %v396 = vld [vmem:[#allocation5 + $0x1e8] sm:$0xff]
    %v397 = vld [vmem:[#allocation5 + $0x1f0] sm:$0xff]
    %v398 = vld [vmem:[#allocation5 + $0x1f8] sm:$0xff]
    %v399 = vld [vmem:[#allocation5 + $0x200] sm:$0xff]
    %v400 = vld [vmem:[#allocation5 + $0x208] sm:$0xff]
    %v401 = vld [vmem:[#allocation5 + $0x210] sm:$0xff]
    %v402 = vld [vmem:[#allocation5 + $0x218] sm:$0xff]
    %v403 = vld [vmem:[#allocation5 + $0x220] sm:$0xff]
    %v404 = vld [vmem:[#allocation5 + $0x228] sm:$0xff]
    %v405 = vld [vmem:[#allocation5 + $0x230] sm:$0xff]
    %v406 = vld [vmem:[#allocation5 + $0x238] sm:$0xff]
    %v407 = vld [vmem:[#allocation5 + $0x240] sm:$0xff]
    %v408 = vld [vmem:[#allocation5 + $0x248] sm:$0xff]
    %v409 = vld [vmem:[#allocation5 + $0x250] sm:$0xff]
    %v410 = vld [vmem:[#allocation5 + $0x258] sm:$0xff]
    %v411 = vld [vmem:[#allocation5 + $0x260] sm:$0xff]
    %v412 = vld [vmem:[#allocation5 + $0x268] sm:$0xff]
    %v413 = vld [vmem:[#allocation5 + $0x270] sm:$0xff]
    %v414 = vld [vmem:[#allocation5 + $0x278] sm:$0xff]
    %v415 = vld [vmem:[#allocation5 + $0x280] sm:$0xff]
    %v416 = vld [vmem:[#allocation5 + $0x288] sm:$0xff]
    %v417 = vld [vmem:[#allocation5 + $0x290] sm:$0xff]
    %v418 = vld [vmem:[#allocation5 + $0x298] sm:$0xff]
    %v419 = vld [vmem:[#allocation5 + $0x2a0] sm:$0xff]
    %v420 = vld [vmem:[#allocation5 + $0x2a8] sm:$0xff]
    %v421 = vld [vmem:[#allocation5 + $0x2b0] sm:$0xff]
    %v422 = vld [vmem:[#allocation5 + $0x2b8] sm:$0xff]
    %v423 = vld [vmem:[#allocation5 + $0x2c0] sm:$0xff]
    %v424 = vld [vmem:[#allocation5 + $0x2c8] sm:$0xff]
    %v425 = vld [vmem:[#allocation5 + $0x2d0] sm:$0xff]
    %v426 = vld [vmem:[#allocation5 + $0x2d8] sm:$0xff]
    %v427 = vld [vmem:[#allocation5 + $0x2e0] sm:$0xff]
    %v428 = vld [vmem:[#allocation5 + $0x2e8] sm:$0xff]
    %v429 = vld [vmem:[#allocation5 + $0x2f0] sm:$0xff]
    %v430 = vld [vmem:[#allocation5 + $0x2f8] sm:$0xff]
    %v431 = vld [vmem:[#allocation5 + $0x300] sm:$0xff]
    %v432 = vld [vmem:[#allocation5 + $0x308] sm:$0xff]
    %v433 = vld [vmem:[#allocation5 + $0x310] sm:$0xff]
    %v434 = vld [vmem:[#allocation5 + $0x318] sm:$0xff]
    %v435 = vld [vmem:[#allocation5 + $0x320] sm:$0xff]
    %v436 = vld [vmem:[#allocation5 + $0x328] sm:$0xff]
    %v437 = vld [vmem:[#allocation5 + $0x330] sm:$0xff]
    %v438 = vld [vmem:[#allocation5 + $0x338] sm:$0xff]
    %v439 = vld [vmem:[#allocation5 + $0x340] sm:$0xff]
    %v440 = vld [vmem:[#allocation5 + $0x348] sm:$0xff]
    %v441 = vld [vmem:[#allocation5 + $0x350] sm:$0xff]
    %v442 = vld [vmem:[#allocation5 + $0x358] sm:$0xff]
    %v443 = vld [vmem:[#allocation5 + $0x360] sm:$0xff]
    %v444 = vld [vmem:[#allocation5 + $0x368] sm:$0xff]
    %v445 = vld [vmem:[#allocation5 + $0x370] sm:$0xff]
    %v446 = vld [vmem:[#allocation5 + $0x378] sm:$0xff]
    %v447 = vld [vmem:[#allocation5 + $0x380] sm:$0xff]
    %v448 = vld [vmem:[#allocation5 + $0x388] sm:$0xff]
    %v449 = vld [vmem:[#allocation5 + $0x390] sm:$0xff]
    %v450 = vld [vmem:[#allocation5 + $0x398] sm:$0xff]
    %v451 = vld [vmem:[#allocation5 + $0x3a0] sm:$0xff]
    %v452 = vld [vmem:[#allocation5 + $0x3a8] sm:$0xff]
    %v453 = vld [vmem:[#allocation5 + $0x3b0] sm:$0xff]
    %v454 = vld [vmem:[#allocation5 + $0x3b8] sm:$0xff]
    %v455 = vld [vmem:[#allocation5 + $0x3c0] sm:$0xff]
    %v456 = vld [vmem:[#allocation5 + $0x3c8] sm:$0xff]
    %v457 = vld [vmem:[#allocation5 + $0x3d0] sm:$0xff]
    %v458 = vld [vmem:[#allocation5 + $0x3d8] sm:$0xff]
    %v459 = vld [vmem:[#allocation5 + $0x3e0] sm:$0xff]
    %v460 = vld [vmem:[#allocation5 + $0x3e8] sm:$0xff]
    %v461 = vld [vmem:[#allocation5 + $0x3f0] sm:$0xff]
    %v462 = vld [vmem:[#allocation5 + $0x3f8] sm:$0xff]
    %v463 = vld [vmem:[%s5] sm:$0xf]
    %v465 = vlaneseq
    %v466 = vshrl.u32 %v465, 7
    %v467 = vsub.s32 0, %v466
    %v468 = vrot.slane %v463, %v467
    %v469 = vlaneseq
    %v470 = vshrl.u32 %v469, 7
    %v471 = vsub.s32 1, %v470
    %v472 = vrot.slane %v463, %v471
    %v473 = vlaneseq
    %v474 = vshrl.u32 %v473, 7
    %v475 = vsub.s32 2, %v474
    %v476 = vrot.slane %v463, %v475
    %v477 = vlaneseq
    %v478 = vshrl.u32 %v477, 7
    %v479 = vsub.s32 3, %v478
    %v480 = vrot.slane %v463, %v479
    %485 = vmatprep.subr.mxu0 %v272
    %486 = vmatpush1.msra.mxu0 %v271
    %487 = vmatprep.subr.mxu0 %v276
    %488 = vmatpush1.msra.mxu0 %v275
    %489 = vmatprep.subr.mxu0 %v280
    %490 = vmatpush1.msra.mxu0 %v279
    %491 = vmatprep.subr.mxu0 %v284
    %492 = vmatpush1.msra.mxu0 %v283
    %493 = vmatprep.subr.mxu0 %v288
    %494 = vmatpush1.msra.mxu0 %v287
    %495 = vmatprep.subr.mxu0 %v292
    %496 = vmatpush1.msra.mxu0 %v291
    %497 = vmatprep.subr.mxu0 %v296
    %498 = vmatpush1.msra.mxu0 %v295
    %499 = vmatprep.subr.mxu0 %v300
    %500 = vmatpush1.msra.mxu0 %v299
    %501 = vmatprep.subr.mxu0 %v304
    %502 = vmatpush1.msra.mxu0 %v303
    %503 = vmatprep.subr.mxu0 %v308
    %504 = vmatpush1.msra.mxu0 %v307
    %505 = vmatprep.subr.mxu0 %v312
    %506 = vmatpush1.msra.mxu0 %v311
    %507 = vmatprep.subr.mxu0 %v316
    %508 = vmatpush1.msra.mxu0 %v315
    %509 = vmatprep.subr.mxu0 %v320
    %510 = vmatpush1.msra.mxu0 %v319
    %511 = vmatprep.subr.mxu0 %v324
    %512 = vmatpush1.msra.mxu0 %v323
    %513 = vmatprep.subr.mxu0 %v328
    %514 = vmatpush1.msra.mxu0 %v327
    %515 = vmatprep.subr.mxu0 %v332
    %516 = vmatpush1.msra.mxu0 %v331
    %517 = vmatprep.subr.mxu0 0.0
    %518 = vmatpush1.msra.mxu0 0.0
    %519 = vmatprep.subr.mxu0 0.0
    %520 = vmatpush1.msra.mxu0 0.0
    %521 = vmatprep.subr.mxu0 0.0
    %522 = vmatpush1.msra.mxu0 0.0
    %523 = vmatprep.subr.mxu0 0.0
    %524 = vmatpush1.msra.mxu0 0.0
    %525 = vmatprep.subr.mxu0 0.0
    %526 = vmatpush1.msra.mxu0 0.0
    %527 = vmatprep.subr.mxu0 0.0
    %528 = vmatpush1.msra.mxu0 0.0
    %529 = vmatprep.subr.mxu0 0.0
    %530 = vmatpush1.msra.mxu0 0.0
    %531 = vmatprep.subr.mxu0 0.0
    %532 = vmatpush1.msra.mxu0 0.0
    %533 = vmatprep.subr.mxu0 0.0
    %534 = vmatpush1.msra.mxu0 0.0
    %535 = vmatprep.subr.mxu0 0.0
    %536 = vmatpush1.msra.mxu0 0.0
    %537 = vmatprep.subr.mxu0 0.0
    %538 = vmatpush1.msra.mxu0 0.0
    %539 = vmatprep.subr.mxu0 0.0
    %540 = vmatpush1.msra.mxu0 0.0
    %541 = vmatprep.subr.mxu0 0.0
    %542 = vmatpush1.msra.mxu0 0.0
    %543 = vmatprep.subr.mxu0 0.0
    %544 = vmatpush1.msra.mxu0 0.0
    %545 = vmatprep.subr.mxu0 0.0
    %546 = vmatpush1.msra.mxu0 0.0
    %547 = vmatprep.subr.mxu0 0.0
    %548 = vmatpush1.msra.mxu0 0.0
    %549 = vmatprep.mubr.f32.mxu0 0.0
    %550 = vmatmul.mubr.f32.gmra.mrb[0].mxu0 0.0
    %v551 = vpop.f32.mrb[0].mxu0
    %v552 = vadd.f32 0.0, %v551
    %v553 = vpop.f32.mrb[0].mxu0
    %v554 = vadd.f32 0.0, %v553
    %555 = vdwg.mxu0
    %556 = vmatprep.subr.mxu0 %v274
    %557 = vmatpush1.msra.mxu0 %v273
    %558 = vmatprep.subr.mxu0 %v278
    %559 = vmatpush1.msra.mxu0 %v277
    %560 = vmatprep.subr.mxu0 %v282
    %561 = vmatpush1.msra.mxu0 %v281
    %562 = vmatprep.subr.mxu0 %v286
    %563 = vmatpush1.msra.mxu0 %v285
    %564 = vmatprep.subr.mxu0 %v290
    %565 = vmatpush1.msra.mxu0 %v289
    %566 = vmatprep.subr.mxu0 %v294
    %567 = vmatpush1.msra.mxu0 %v293
    %568 = vmatprep.subr.mxu0 %v298
    %569 = vmatpush1.msra.mxu0 %v297
    %570 = vmatprep.subr.mxu0 %v302
    %571 = vmatpush1.msra.mxu0 %v301
    %572 = vmatprep.subr.mxu0 %v306
    %573 = vmatpush1.msra.mxu0 %v305
    %574 = vmatprep.subr.mxu0 %v310
    %575 = vmatpush1.msra.mxu0 %v309
    %576 = vmatprep.subr.mxu0 %v314
    %577 = vmatpush1.msra.mxu0 %v313
    %578 = vmatprep.subr.mxu0 %v318
    %579 = vmatpush1.msra.mxu0 %v317
    %580 = vmatprep.subr.mxu0 %v322
    %581 = vmatpush1.msra.mxu0 %v321
    %582 = vmatprep.subr.mxu0 %v326
    %583 = vmatpush1.msra.mxu0 %v325
    %584 = vmatprep.subr.mxu0 %v330
    %585 = vmatpush1.msra.mxu0 %v329
    %586 = vmatprep.subr.mxu0 %v334
    %587 = vmatpush1.msra.mxu0 %v333
    %588 = vmatprep.subr.mxu0 0.0
    %589 = vmatpush1.msra.mxu0 0.0
    %590 = vmatprep.subr.mxu0 0.0
    %591 = vmatpush1.msra.mxu0 0.0
    %592 = vmatprep.subr.mxu0 0.0
    %593 = vmatpush1.msra.mxu0 0.0
    %594 = vmatprep.subr.mxu0 0.0
    %595 = vmatpush1.msra.mxu0 0.0
    %596 = vmatprep.subr.mxu0 0.0
    %597 = vmatpush1.msra.mxu0 0.0
    %598 = vmatprep.subr.mxu0 0.0
    %599 = vmatpush1.msra.mxu0 0.0
    %600 = vmatprep.subr.mxu0 0.0
    %601 = vmatpush1.msra.mxu0 0.0
    %602 = vmatprep.subr.mxu0 0.0
    %603 = vmatpush1.msra.mxu0 0.0
    %604 = vmatprep.subr.mxu0 0.0
    %605 = vmatpush1.msra.mxu0 0.0
    %606 = vmatprep.subr.mxu0 0.0
    %607 = vmatpush1.msra.mxu0 0.0
    %608 = vmatprep.subr.mxu0 0.0
    %609 = vmatpush1.msra.mxu0 0.0
    %610 = vmatprep.subr.mxu0 0.0
    %611 = vmatpush1.msra.mxu0 0.0
    %612 = vmatprep.subr.mxu0 0.0
    %613 = vmatpush1.msra.mxu0 0.0
    %614 = vmatprep.subr.mxu0 0.0
    %615 = vmatpush1.msra.mxu0 0.0
    %616 = vmatprep.subr.mxu0 0.0
    %617 = vmatpush1.msra.mxu0 0.0
    %618 = vmatprep.subr.mxu0 0.0
    %619 = vmatpush1.msra.mxu0 0.0
    %620 = vmatprep.mubr.f32.mxu0 0.0
    %621 = vmatmul.mubr.f32.gmra.mrb[0].mxu0 0.0
    %v622 = vpop.f32.mrb[0].mxu0
    %v623 = vadd.f32 0.0, %v622
    %v624 = vpop.f32.mrb[0].mxu0
    %v625 = vadd.f32 0.0, %v624
    %626 = vdwg.mxu0
    %v627 = vadd.f32 %v184, %v552
    %v628 = vadd.f32 %v186, %v554
    %v629 = vadd.f32 %v261, %v623
    %v630 = vadd.f32 %v263, %v625
    %v631 = vxor.u32 %v627, 2147483648
    %v632 = vmul.f32 %v631, 1.442695
    %v633 = vpow.pop %v632
    %v634 = vadd.f32 %v633, 1.0
    %v635 = vrcp.pop %v634
    %v636 = vmul.f32 1.0, %v635
    %v637 = vxor.u32 %v628, 2147483648
    %v638 = vmul.f32 %v637, 1.442695
    %v639 = vpow.pop %v638
    %v640 = vadd.f32 %v639, 1.0
    %v641 = vrcp.pop %v640
    %v642 = vmul.f32 1.0, %v641
    %v643 = vtanh.pop %v629
    %v644 = vxor.u32 %v630, 2147483648
    %v645 = vmul.f32 %v644, 1.442695
    %v646 = vpow.pop %v645
    %v647 = vadd.f32 %v646, 1.0
    %v648 = vrcp.pop %v647
    %v649 = vmul.f32 1.0, %v648
    %v650 = vmul.f32 %v642, 0.0
    %v651 = vmul.f32 %v636, %v643
    %v652 = vadd.f32 %v650, %v651
    %v653 = vtanh.pop %v652
    %v654 = vmul.f32 %v649, %v653
    %655 = vmatprep.subr.mxu0 %v336
    %656 = vmatpush1.msra.mxu0 %v335
    %657 = vmatprep.subr.mxu0 %v340
    %658 = vmatpush1.msra.mxu0 %v339
    %659 = vmatprep.subr.mxu0 %v344
    %660 = vmatpush1.msra.mxu0 %v343
    %661 = vmatprep.subr.mxu0 %v348
    %662 = vmatpush1.msra.mxu0 %v347
    %663 = vmatprep.subr.mxu0 %v352
    %664 = vmatpush1.msra.mxu0 %v351
    %665 = vmatprep.subr.mxu0 %v356
    %666 = vmatpush1.msra.mxu0 %v355
    %667 = vmatprep.subr.mxu0 %v360
    %668 = vmatpush1.msra.mxu0 %v359
    %669 = vmatprep.subr.mxu0 %v364
    %670 = vmatpush1.msra.mxu0 %v363
    %671 = vmatprep.subr.mxu0 %v368
    %672 = vmatpush1.msra.mxu0 %v367
    %673 = vmatprep.subr.mxu0 %v372
    %674 = vmatpush1.msra.mxu0 %v371
    %675 = vmatprep.subr.mxu0 %v376
    %676 = vmatpush1.msra.mxu0 %v375
    %677 = vmatprep.subr.mxu0 %v380
    %678 = vmatpush1.msra.mxu0 %v379
    %679 = vmatprep.subr.mxu0 %v384
    %680 = vmatpush1.msra.mxu0 %v383
    %681 = vmatprep.subr.mxu0 %v388
    %682 = vmatpush1.msra.mxu0 %v387
    %683 = vmatprep.subr.mxu0 %v392
    %684 = vmatpush1.msra.mxu0 %v391
    %685 = vmatprep.subr.mxu0 %v396
    %686 = vmatpush1.msra.mxu0 %v395
    %687 = vmatprep.subr.mxu0 %v400
    %688 = vmatpush1.msra.mxu0 %v399
    %689 = vmatprep.subr.mxu0 %v404
    %690 = vmatpush1.msra.mxu0 %v403
    %691 = vmatprep.subr.mxu0 %v408
    %692 = vmatpush1.msra.mxu0 %v407
    %693 = vmatprep.subr.mxu0 %v412
    %694 = vmatpush1.msra.mxu0 %v411
    %695 = vmatprep.subr.mxu0 %v416
    %696 = vmatpush1.msra.mxu0 %v415
    %697 = vmatprep.subr.mxu0 %v420
    %698 = vmatpush1.msra.mxu0 %v419
    %699 = vmatprep.subr.mxu0 %v424
    %700 = vmatpush1.msra.mxu0 %v423
    %701 = vmatprep.subr.mxu0 %v428
    %702 = vmatpush1.msra.mxu0 %v427
    %703 = vmatprep.subr.mxu0 %v432
    %704 = vmatpush1.msra.mxu0 %v431
    %705 = vmatprep.subr.mxu0 %v436
    %706 = vmatpush1.msra.mxu0 %v435
    %707 = vmatprep.subr.mxu0 %v440
    %708 = vmatpush1.msra.mxu0 %v439
    %709 = vmatprep.subr.mxu0 %v444
    %710 = vmatpush1.msra.mxu0 %v443
    %711 = vmatprep.subr.mxu0 %v448
    %712 = vmatpush1.msra.mxu0 %v447
    %713 = vmatprep.subr.mxu0 %v452
    %714 = vmatpush1.msra.mxu0 %v451
    %715 = vmatprep.subr.mxu0 %v456
    %716 = vmatpush1.msra.mxu0 %v455
    %717 = vmatprep.subr.mxu0 %v460
    %718 = vmatpush1.msra.mxu0 %v459
    %719 = vmatprep.mubr.f32.mxu0 0.0
    %720 = vmatmul.mubr.f32.gmra.mrb[0].mxu0 %v654
    %v721 = vpop.f32.mrb[0].mxu0
    %v722 = vadd.f32 %v468, %v721
    %v723 = vpop.f32.mrb[0].mxu0
    %v724 = vadd.f32 %v472, %v723
    %725 = vdwg.mxu0
    %726 = vmatprep.subr.mxu0 %v338
    %727 = vmatpush1.msra.mxu0 %v337
    %728 = vmatprep.subr.mxu0 %v342
    %729 = vmatpush1.msra.mxu0 %v341
    %730 = vmatprep.subr.mxu0 %v346
    %731 = vmatpush1.msra.mxu0 %v345
    %732 = vmatprep.subr.mxu0 %v350
    %733 = vmatpush1.msra.mxu0 %v349
    %734 = vmatprep.subr.mxu0 %v354
    %735 = vmatpush1.msra.mxu0 %v353
    %736 = vmatprep.subr.mxu0 %v358
    %737 = vmatpush1.msra.mxu0 %v357
    %738 = vmatprep.subr.mxu0 %v362
    %739 = vmatpush1.msra.mxu0 %v361
    %740 = vmatprep.subr.mxu0 %v366
    %741 = vmatpush1.msra.mxu0 %v365
    %742 = vmatprep.subr.mxu0 %v370
    %743 = vmatpush1.msra.mxu0 %v369
    %744 = vmatprep.subr.mxu0 %v374
    %745 = vmatpush1.msra.mxu0 %v373
    %746 = vmatprep.subr.mxu0 %v378
    %747 = vmatpush1.msra.mxu0 %v377
    %748 = vmatprep.subr.mxu0 %v382
    %749 = vmatpush1.msra.mxu0 %v381
    %750 = vmatprep.subr.mxu0 %v386
    %751 = vmatpush1.msra.mxu0 %v385
    %752 = vmatprep.subr.mxu0 %v390
    %753 = vmatpush1.msra.mxu0 %v389
    %754 = vmatprep.subr.mxu0 %v394
    %755 = vmatpush1.msra.mxu0 %v393
    %756 = vmatprep.subr.mxu0 %v398
    %757 = vmatpush1.msra.mxu0 %v397
    %758 = vmatprep.subr.mxu0 %v402
    %759 = vmatpush1.msra.mxu0 %v401
    %760 = vmatprep.subr.mxu0 %v406
    %761 = vmatpush1.msra.mxu0 %v405
    %762 = vmatprep.subr.mxu0 %v410
    %763 = vmatpush1.msra.mxu0 %v409
    %764 = vmatprep.subr.mxu0 %v414
    %765 = vmatpush1.msra.mxu0 %v413
    %766 = vmatprep.subr.mxu0 %v418
    %767 = vmatpush1.msra.mxu0 %v417
    %768 = vmatprep.subr.mxu0 %v422
    %769 = vmatpush1.msra.mxu0 %v421
    %770 = vmatprep.subr.mxu0 %v426
    %771 = vmatpush1.msra.mxu0 %v425
    %772 = vmatprep.subr.mxu0 %v430
    %773 = vmatpush1.msra.mxu0 %v429
    %774 = vmatprep.subr.mxu0 %v434
    %775 = vmatpush1.msra.mxu0 %v433
    %776 = vmatprep.subr.mxu0 %v438
    %777 = vmatpush1.msra.mxu0 %v437
    %778 = vmatprep.subr.mxu0 %v442
    %779 = vmatpush1.msra.mxu0 %v441
    %780 = vmatprep.subr.mxu0 %v446
    %781 = vmatpush1.msra.mxu0 %v445
    %782 = vmatprep.subr.mxu0 %v450
    %783 = vmatpush1.msra.mxu0 %v449
    %784 = vmatprep.subr.mxu0 %v454
    %785 = vmatpush1.msra.mxu0 %v453
    %786 = vmatprep.subr.mxu0 %v458
    %787 = vmatpush1.msra.mxu0 %v457
    %788 = vmatprep.subr.mxu0 %v462
    %789 = vmatpush1.msra.mxu0 %v461
    %790 = vmatprep.mubr.f32.mxu0 0.0
    %791 = vmatmul.mubr.f32.gmra.mrb[0].mxu0 %v654
    %v792 = vpop.f32.mrb[0].mxu0
    %v793 = vadd.f32 %v476, %v792
    %v794 = vpop.f32.mrb[0].mxu0
    %v795 = vadd.f32 %v480, %v794
    %796 = vdwg.mxu0
    %v797 = vxor.u32 %v722, 2147483648
    %v798 = vmul.f32 %v797, 1.442695
    %v799 = vpow.pop %v798
    %v800 = vadd.f32 %v799, 1.0
    %v801 = vrcp.pop %v800
    %v802 = vmul.f32 1.0, %v801
    %v803 = vxor.u32 %v724, 2147483648
    %v804 = vmul.f32 %v803, 1.442695
    %v805 = vpow.pop %v804
    %v806 = vadd.f32 %v805, 1.0
    %v807 = vrcp.pop %v806
    %v808 = vmul.f32 1.0, %v807
    %v809 = vtanh.pop %v793
    %v810 = vxor.u32 %v795, 2147483648
    %v811 = vmul.f32 %v810, 1.442695
    %v812 = vpow.pop %v811
    %v813 = vadd.f32 %v812, 1.0
    %v814 = vrcp.pop %v813
    %v815 = vmul.f32 1.0, %v814
    %v816 = vmul.f32 %v808, 0.0
    %v817 = vmul.f32 %v802, %v809
    %v818 = vadd.f32 %v816, %v817
    %v819 = vtanh.pop %v818
    %v820 = vmul.f32 %v815, %v819
    %821 = vmatprep.subr.mxu0 %v272
    %822 = vmatpush1.msra.mxu0 %v271
    %823 = vmatprep.subr.mxu0 %v276
    %824 = vmatpush1.msra.mxu0 %v275
    %825 = vmatprep.subr.mxu0 %v280
    %826 = vmatpush1.msra.mxu0 %v279
    %827 = vmatprep.subr.mxu0 %v284
    %828 = vmatpush1.msra.mxu0 %v283
    %829 = vmatprep.subr.mxu0 %v288
    %830 = vmatpush1.msra.mxu0 %v287
    %831 = vmatprep.subr.mxu0 %v292
    %832 = vmatpush1.msra.mxu0 %v291
    %833 = vmatprep.subr.mxu0 %v296
    %834 = vmatpush1.msra.mxu0 %v295
    %835 = vmatprep.subr.mxu0 %v300
    %836 = vmatpush1.msra.mxu0 %v299
    %837 = vmatprep.subr.mxu0 %v304
    %838 = vmatpush1.msra.mxu0 %v303
    %839 = vmatprep.subr.mxu0 %v308
    %840 = vmatpush1.msra.mxu0 %v307
    %841 = vmatprep.subr.mxu0 %v312
    %842 = vmatpush1.msra.mxu0 %v311
    %843 = vmatprep.subr.mxu0 %v316
    %844 = vmatpush1.msra.mxu0 %v315
    %845 = vmatprep.subr.mxu0 %v320
    %846 = vmatpush1.msra.mxu0 %v319
    %847 = vmatprep.subr.mxu0 %v324
    %848 = vmatpush1.msra.mxu0 %v323
    %849 = vmatprep.subr.mxu0 %v328
    %850 = vmatpush1.msra.mxu0 %v327
    %851 = vmatprep.subr.mxu0 %v332
    %852 = vmatpush1.msra.mxu0 %v331
    %853 = vmatprep.subr.mxu0 0.0
    %854 = vmatpush1.msra.mxu0 0.0
    %855 = vmatprep.subr.mxu0 0.0
    %856 = vmatpush1.msra.mxu0 0.0
    %857 = vmatprep.subr.mxu0 0.0
    %858 = vmatpush1.msra.mxu0 0.0
    %859 = vmatprep.subr.mxu0 0.0
    %860 = vmatpush1.msra.mxu0 0.0
    %861 = vmatprep.subr.mxu0 0.0
    %862 = vmatpush1.msra.mxu0 0.0
    %863 = vmatprep.subr.mxu0 0.0
    %864 = vmatpush1.msra.mxu0 0.0
    %865 = vmatprep.subr.mxu0 0.0
    %866 = vmatpush1.msra.mxu0 0.0
    %867 = vmatprep.subr.mxu0 0.0
    %868 = vmatpush1.msra.mxu0 0.0
    %869 = vmatprep.subr.mxu0 0.0
    %870 = vmatpush1.msra.mxu0 0.0
    %871 = vmatprep.subr.mxu0 0.0
    %872 = vmatpush1.msra.mxu0 0.0
    %873 = vmatprep.subr.mxu0 0.0
    %874 = vmatpush1.msra.mxu0 0.0
    %875 = vmatprep.subr.mxu0 0.0
    %876 = vmatpush1.msra.mxu0 0.0
    %877 = vmatprep.subr.mxu0 0.0
    %878 = vmatpush1.msra.mxu0 0.0
    %879 = vmatprep.subr.mxu0 0.0
    %880 = vmatpush1.msra.mxu0 0.0
    %881 = vmatprep.subr.mxu0 0.0
    %882 = vmatpush1.msra.mxu0 0.0
    %883 = vmatprep.subr.mxu0 0.0
    %884 = vmatpush1.msra.mxu0 0.0
    %885 = vmatprep.mubr.f32.mxu0 0.0
    %886 = vmatmul.mubr.f32.gmra.mrb[0].mxu0 %v654
    %v887 = vpop.f32.mrb[0].mxu0
    %v888 = vadd.f32 0.0, %v887
    %v889 = vpop.f32.mrb[0].mxu0
    %v890 = vadd.f32 0.0, %v889
    %891 = vdwg.mxu0
    %892 = vmatprep.subr.mxu0 %v274
    %893 = vmatpush1.msra.mxu0 %v273
    %894 = vmatprep.subr.mxu0 %v278
    %895 = vmatpush1.msra.mxu0 %v277
    %896 = vmatprep.subr.mxu0 %v282
    %897 = vmatpush1.msra.mxu0 %v281
    %898 = vmatprep.subr.mxu0 %v286
    %899 = vmatpush1.msra.mxu0 %v285
    %900 = vmatprep.subr.mxu0 %v290
    %901 = vmatpush1.msra.mxu0 %v289
    %902 = vmatprep.subr.mxu0 %v294
    %903 = vmatpush1.msra.mxu0 %v293
    %904 = vmatprep.subr.mxu0 %v298
    %905 = vmatpush1.msra.mxu0 %v297
    %906 = vmatprep.subr.mxu0 %v302
    %907 = vmatpush1.msra.mxu0 %v301
    %908 = vmatprep.subr.mxu0 %v306
    %909 = vmatpush1.msra.mxu0 %v305
    %910 = vmatprep.subr.mxu0 %v310
    %911 = vmatpush1.msra.mxu0 %v309
    %912 = vmatprep.subr.mxu0 %v314
    %913 = vmatpush1.msra.mxu0 %v313
    %914 = vmatprep.subr.mxu0 %v318
    %915 = vmatpush1.msra.mxu0 %v317
    %916 = vmatprep.subr.mxu0 %v322
    %917 = vmatpush1.msra.mxu0 %v321
    %918 = vmatprep.subr.mxu0 %v326
    %919 = vmatpush1.msra.mxu0 %v325
    %920 = vmatprep.subr.mxu0 %v330
    %921 = vmatpush1.msra.mxu0 %v329
    %922 = vmatprep.subr.mxu0 %v334
    %923 = vmatpush1.msra.mxu0 %v333
    %924 = vmatprep.subr.mxu0 0.0
    %925 = vmatpush1.msra.mxu0 0.0
    %926 = vmatprep.subr.mxu0 0.0
    %927 = vmatpush1.msra.mxu0 0.0
    %928 = vmatprep.subr.mxu0 0.0
    %929 = vmatpush1.msra.mxu0 0.0
    %930 = vmatprep.subr.mxu0 0.0
    %931 = vmatpush1.msra.mxu0 0.0
    %932 = vmatprep.subr.mxu0 0.0
    %933 = vmatpush1.msra.mxu0 0.0
    %934 = vmatprep.subr.mxu0 0.0
    %935 = vmatpush1.msra.mxu0 0.0
    %936 = vmatprep.subr.mxu0 0.0
    %937 = vmatpush1.msra.mxu0 0.0
    %938 = vmatprep.subr.mxu0 0.0
    %939 = vmatpush1.msra.mxu0 0.0
    %940 = vmatprep.subr.mxu0 0.0
    %941 = vmatpush1.msra.mxu0 0.0
    %942 = vmatprep.subr.mxu0 0.0
    %943 = vmatpush1.msra.mxu0 0.0
    %944 = vmatprep.subr.mxu0 0.0
    %945 = vmatpush1.msra.mxu0 0.0
    %946 = vmatprep.subr.mxu0 0.0
    %947 = vmatpush1.msra.mxu0 0.0
    %948 = vmatprep.subr.mxu0 0.0
    %949 = vmatpush1.msra.mxu0 0.0
    %950 = vmatprep.subr.mxu0 0.0
    %951 = vmatpush1.msra.mxu0 0.0
    %952 = vmatprep.subr.mxu0 0.0
    %953 = vmatpush1.msra.mxu0 0.0
    %954 = vmatprep.subr.mxu0 0.0
    %955 = vmatpush1.msra.mxu0 0.0
    %956 = vmatprep.mubr.f32.mxu0 0.0
    %957 = vmatmul.mubr.f32.gmra.mrb[0].mxu0 %v654
    %v958 = vpop.f32.mrb[0].mxu0
    %v959 = vadd.f32 0.0, %v958
    %v960 = vpop.f32.mrb[0].mxu0
    %v961 = vadd.f32 0.0, %v960
    %962 = vdwg.mxu0
    %v967 = vrot.slane %v888, 6
    %v968 = vrot.slane %v890, 6
    %v969 = vrot.slane %v959, 6
    %v970 = vrot.slane %v961, 6
    %v975 = vadd.f32 %v184, %v967
    %v976 = vadd.f32 %v186, %v968
    %v977 = vadd.f32 %v261, %v969
    %v978 = vadd.f32 %v263, %v970
    %v979 = vxor.u32 %v975, 2147483648
    %v980 = vmul.f32 %v979, 1.442695
    %v981 = vpow.pop %v980
    %v982 = vadd.f32 %v981, 1.0
    %v983 = vrcp.pop %v982
    %v984 = vmul.f32 1.0, %v983
    %v985 = vxor.u32 %v976, 2147483648
    %v986 = vmul.f32 %v985, 1.442695
    %v987 = vpow.pop %v986
    %v988 = vadd.f32 %v987, 1.0
    %v989 = vrcp.pop %v988
    %v990 = vmul.f32 1.0, %v989
    %v991 = vtanh.pop %v977
    %v992 = vxor.u32 %v978, 2147483648
    %v993 = vmul.f32 %v992, 1.442695
    %v994 = vpow.pop %v993
    %v995 = vadd.f32 %v994, 1.0
    %v996 = vrcp.pop %v995
    %v997 = vmul.f32 1.0, %v996
    %v999 = vrot.slane %v652, 6
    %v1001 = vmul.f32 %v990, %v999
    %v1002 = vmul.f32 %v984, %v991
    %v1003 = vadd.f32 %v1001, %v1002
    %v1004 = vtanh.pop %v1003
    %v1005 = vmul.f32 %v997, %v1004
    %v1007 = vrot.slane %v820, 6
    %v1009 = vrot.slane %v1005, 2
    %v1010 = vrot.slane %v1007, 2
    %1013 = vmatprep.subr.mxu0 %v336
    %1014 = vmatpush1.msra.mxu0 %v335
    %1015 = vmatprep.subr.mxu0 %v340
    %1016 = vmatpush1.msra.mxu0 %v339
    %1017 = vmatprep.subr.mxu0 %v344
    %1018 = vmatpush1.msra.mxu0 %v343
    %1019 = vmatprep.subr.mxu0 %v348
    %1020 = vmatpush1.msra.mxu0 %v347
    %1021 = vmatprep.subr.mxu0 %v352
    %1022 = vmatpush1.msra.mxu0 %v351
    %1023 = vmatprep.subr.mxu0 %v356
    %1024 = vmatpush1.msra.mxu0 %v355
    %1025 = vmatprep.subr.mxu0 %v360
    %1026 = vmatpush1.msra.mxu0 %v359
    %1027 = vmatprep.subr.mxu0 %v364
    %1028 = vmatpush1.msra.mxu0 %v363
    %1029 = vmatprep.subr.mxu0 %v368
    %1030 = vmatpush1.msra.mxu0 %v367
    %1031 = vmatprep.subr.mxu0 %v372
    %1032 = vmatpush1.msra.mxu0 %v371
    %1033 = vmatprep.subr.mxu0 %v376
    %1034 = vmatpush1.msra.mxu0 %v375
    %1035 = vmatprep.subr.mxu0 %v380
    %1036 = vmatpush1.msra.mxu0 %v379
    %1037 = vmatprep.subr.mxu0 %v384
    %1038 = vmatpush1.msra.mxu0 %v383
    %1039 = vmatprep.subr.mxu0 %v388
    %1040 = vmatpush1.msra.mxu0 %v387
    %1041 = vmatprep.subr.mxu0 %v392
    %1042 = vmatpush1.msra.mxu0 %v391
    %1043 = vmatprep.subr.mxu0 %v396
    %1044 = vmatpush1.msra.mxu0 %v395
    %1045 = vmatprep.subr.mxu0 %v400
    %1046 = vmatpush1.msra.mxu0 %v399
    %1047 = vmatprep.subr.mxu0 %v404
    %1048 = vmatpush1.msra.mxu0 %v403
    %1049 = vmatprep.subr.mxu0 %v408
    %1050 = vmatpush1.msra.mxu0 %v407
    %1051 = vmatprep.subr.mxu0 %v412
    %1052 = vmatpush1.msra.mxu0 %v411
    %1053 = vmatprep.subr.mxu0 %v416
    %1054 = vmatpush1.msra.mxu0 %v415
    %1055 = vmatprep.subr.mxu0 %v420
    %1056 = vmatpush1.msra.mxu0 %v419
    %1057 = vmatprep.subr.mxu0 %v424
    %1058 = vmatpush1.msra.mxu0 %v423
    %1059 = vmatprep.subr.mxu0 %v428
    %1060 = vmatpush1.msra.mxu0 %v427
    %1061 = vmatprep.subr.mxu0 %v432
    %1062 = vmatpush1.msra.mxu0 %v431
    %1063 = vmatprep.subr.mxu0 %v436
    %1064 = vmatpush1.msra.mxu0 %v435
    %1065 = vmatprep.subr.mxu0 %v440
    %1066 = vmatpush1.msra.mxu0 %v439
    %1067 = vmatprep.subr.mxu0 %v444
    %1068 = vmatpush1.msra.mxu0 %v443
    %1069 = vmatprep.subr.mxu0 %v448
    %1070 = vmatpush1.msra.mxu0 %v447
    %1071 = vmatprep.subr.mxu0 %v452
    %1072 = vmatpush1.msra.mxu0 %v451
    %1073 = vmatprep.subr.mxu0 %v456
    %1074 = vmatpush1.msra.mxu0 %v455
    %1075 = vmatprep.subr.mxu0 %v460
    %1076 = vmatpush1.msra.mxu0 %v459
    %1077 = vmatprep.mubr.f32.mxu0 %v1010
    %1078 = vmatmul.mubr.f32.gmra.mrb[0].mxu0 %v1009
    %v1079 = vpop.f32.mrb[0].mxu0
    %v1080 = vadd.f32 %v468, %v1079
    %v1081 = vpop.f32.mrb[0].mxu0
    %v1082 = vadd.f32 %v472, %v1081
    %1083 = vdwg.mxu0
    %1084 = vmatprep.subr.mxu0 %v338
    %1085 = vmatpush1.msra.mxu0 %v337
    %1086 = vmatprep.subr.mxu0 %v342
    %1087 = vmatpush1.msra.mxu0 %v341
    %1088 = vmatprep.subr.mxu0 %v346
    %1089 = vmatpush1.msra.mxu0 %v345
    %1090 = vmatprep.subr.mxu0 %v350
    %1091 = vmatpush1.msra.mxu0 %v349
    %1092 = vmatprep.subr.mxu0 %v354
    %1093 = vmatpush1.msra.mxu0 %v353
    %1094 = vmatprep.subr.mxu0 %v358
    %1095 = vmatpush1.msra.mxu0 %v357
    %1096 = vmatprep.subr.mxu0 %v362
    %1097 = vmatpush1.msra.mxu0 %v361
    %1098 = vmatprep.subr.mxu0 %v366
    %1099 = vmatpush1.msra.mxu0 %v365
    %1100 = vmatprep.subr.mxu0 %v370
    %1101 = vmatpush1.msra.mxu0 %v369
    %1102 = vmatprep.subr.mxu0 %v374
    %1103 = vmatpush1.msra.mxu0 %v373
    %1104 = vmatprep.subr.mxu0 %v378
    %1105 = vmatpush1.msra.mxu0 %v377
    %1106 = vmatprep.subr.mxu0 %v382
    %1107 = vmatpush1.msra.mxu0 %v381
    %1108 = vmatprep.subr.mxu0 %v386
    %1109 = vmatpush1.msra.mxu0 %v385
    %1110 = vmatprep.subr.mxu0 %v390
    %1111 = vmatpush1.msra.mxu0 %v389
    %1112 = vmatprep.subr.mxu0 %v394
    %1113 = vmatpush1.msra.mxu0 %v393
    %1114 = vmatprep.subr.mxu0 %v398
    %1115 = vmatpush1.msra.mxu0 %v397
    %1116 = vmatprep.subr.mxu0 %v402
    %1117 = vmatpush1.msra.mxu0 %v401
    %1118 = vmatprep.subr.mxu0 %v406
    %1119 = vmatpush1.msra.mxu0 %v405
    %1120 = vmatprep.subr.mxu0 %v410
    %1121 = vmatpush1.msra.mxu0 %v409
    %1122 = vmatprep.subr.mxu0 %v414
    %1123 = vmatpush1.msra.mxu0 %v413
    %1124 = vmatprep.subr.mxu0 %v418
    %1125 = vmatpush1.msra.mxu0 %v417
    %1126 = vmatprep.subr.mxu0 %v422
    %1127 = vmatpush1.msra.mxu0 %v421
    %1128 = vmatprep.subr.mxu0 %v426
    %1129 = vmatpush1.msra.mxu0 %v425
    %1130 = vmatprep.subr.mxu0 %v430
    %1131 = vmatpush1.msra.mxu0 %v429
    %1132 = vmatprep.subr.mxu0 %v434
    %1133 = vmatpush1.msra.mxu0 %v433
    %1134 = vmatprep.subr.mxu0 %v438
    %1135 = vmatpush1.msra.mxu0 %v437
    %1136 = vmatprep.subr.mxu0 %v442
    %1137 = vmatpush1.msra.mxu0 %v441
    %1138 = vmatprep.subr.mxu0 %v446
    %1139 = vmatpush1.msra.mxu0 %v445
    %1140 = vmatprep.subr.mxu0 %v450
    %1141 = vmatpush1.msra.mxu0 %v449
    %1142 = vmatprep.subr.mxu0 %v454
    %1143 = vmatpush1.msra.mxu0 %v453
    %1144 = vmatprep.subr.mxu0 %v458
    %1145 = vmatpush1.msra.mxu0 %v457
    %1146 = vmatprep.subr.mxu0 %v462
    %1147 = vmatpush1.msra.mxu0 %v461
    %1148 = vmatprep.mubr.f32.mxu0 %v1010
    %1149 = vmatmul.mubr.f32.gmra.mrb[0].mxu0 %v1009
    %v1150 = vpop.f32.mrb[0].mxu0
    %v1151 = vadd.f32 %v476, %v1150
    %v1152 = vpop.f32.mrb[0].mxu0
    %v1153 = vadd.f32 %v480, %v1152
    %1154 = vdwg.mxu0
    %v1155 = vxor.u32 %v1080, 2147483648
    %v1156 = vmul.f32 %v1155, 1.442695
    %v1157 = vpow.pop %v1156
    %v1158 = vadd.f32 %v1157, 1.0
    %v1159 = vrcp.pop %v1158
    %v1160 = vmul.f32 1.0, %v1159
    %v1161 = vxor.u32 %v1082, 2147483648
    %v1162 = vmul.f32 %v1161, 1.442695
    %v1163 = vpow.pop %v1162
    %v1164 = vadd.f32 %v1163, 1.0
    %v1165 = vrcp.pop %v1164
    %v1166 = vmul.f32 1.0, %v1165
    %v1167 = vtanh.pop %v1151
    %v1168 = vxor.u32 %v1153, 2147483648
    %v1169 = vmul.f32 %v1168, 1.442695
    %v1170 = vpow.pop %v1169
    %v1171 = vadd.f32 %v1170, 1.0
    %v1172 = vrcp.pop %v1171
    %v1173 = vmul.f32 1.0, %v1172
    %v1174 = vmul.f32 %v1166, %v818
    %v1175 = vmul.f32 %v1160, %v1167
    %v1176 = vadd.f32 %v1174, %v1175
    %v1177 = vtanh.pop %v1176
    %v1178 = vmul.f32 %v1173, %v1177
    %1179 = vmatprep.subr.mxu0 %v272
    %1180 = vmatpush1.msra.mxu0 %v271
    %1181 = vmatprep.subr.mxu0 %v276
    %1182 = vmatpush1.msra.mxu0 %v275
    %1183 = vmatprep.subr.mxu0 %v280
    %1184 = vmatpush1.msra.mxu0 %v279
    %1185 = vmatprep.subr.mxu0 %v284
    %1186 = vmatpush1.msra.mxu0 %v283
    %1187 = vmatprep.subr.mxu0 %v288
    %1188 = vmatpush1.msra.mxu0 %v287
    %1189 = vmatprep.subr.mxu0 %v292
    %1190 = vmatpush1.msra.mxu0 %v291
    %1191 = vmatprep.subr.mxu0 %v296
    %1192 = vmatpush1.msra.mxu0 %v295
    %1193 = vmatprep.subr.mxu0 %v300
    %1194 = vmatpush1.msra.mxu0 %v299
    %1195 = vmatprep.subr.mxu0 %v304
    %1196 = vmatpush1.msra.mxu0 %v303
    %1197 = vmatprep.subr.mxu0 %v308
    %1198 = vmatpush1.msra.mxu0 %v307
    %1199 = vmatprep.subr.mxu0 %v312
    %1200 = vmatpush1.msra.mxu0 %v311
    %1201 = vmatprep.subr.mxu0 %v316
    %1202 = vmatpush1.msra.mxu0 %v315
    %1203 = vmatprep.subr.mxu0 %v320
    %1204 = vmatpush1.msra.mxu0 %v319
    %1205 = vmatprep.subr.mxu0 %v324
    %1206 = vmatpush1.msra.mxu0 %v323
    %1207 = vmatprep.subr.mxu0 %v328
    %1208 = vmatpush1.msra.mxu0 %v327
    %1209 = vmatprep.subr.mxu0 %v332
    %1210 = vmatpush1.msra.mxu0 %v331
    %1211 = vmatprep.subr.mxu0 0.0
    %1212 = vmatpush1.msra.mxu0 0.0
    %1213 = vmatprep.subr.mxu0 0.0
    %1214 = vmatpush1.msra.mxu0 0.0
    %1215 = vmatprep.subr.mxu0 0.0
    %1216 = vmatpush1.msra.mxu0 0.0
    %1217 = vmatprep.subr.mxu0 0.0
    %1218 = vmatpush1.msra.mxu0 0.0
    %1219 = vmatprep.subr.mxu0 0.0
    %1220 = vmatpush1.msra.mxu0 0.0
    %1221 = vmatprep.subr.mxu0 0.0
    %1222 = vmatpush1.msra.mxu0 0.0
    %1223 = vmatprep.subr.mxu0 0.0
    %1224 = vmatpush1.msra.mxu0 0.0
    %1225 = vmatprep.subr.mxu0 0.0
    %1226 = vmatpush1.msra.mxu0 0.0
    %1227 = vmatprep.subr.mxu0 0.0
    %1228 = vmatpush1.msra.mxu0 0.0
    %1229 = vmatprep.subr.mxu0 0.0
    %1230 = vmatpush1.msra.mxu0 0.0
    %1231 = vmatprep.subr.mxu0 0.0
    %1232 = vmatpush1.msra.mxu0 0.0
    %1233 = vmatprep.subr.mxu0 0.0
    %1234 = vmatpush1.msra.mxu0 0.0
    %1235 = vmatprep.subr.mxu0 0.0
    %1236 = vmatpush1.msra.mxu0 0.0
    %1237 = vmatprep.subr.mxu0 0.0
    %1238 = vmatpush1.msra.mxu0 0.0
    %1239 = vmatprep.subr.mxu0 0.0
    %1240 = vmatpush1.msra.mxu0 0.0
    %1241 = vmatprep.subr.mxu0 0.0
    %1242 = vmatpush1.msra.mxu0 0.0
    %1243 = vmatprep.mubr.f32.mxu0 0.0
    %1244 = vmatmul.mubr.f32.gmra.mrb[0].mxu0 %v1009
    %v1245 = vpop.f32.mrb[0].mxu0
    %v1246 = vadd.f32 0.0, %v1245
    %v1247 = vpop.f32.mrb[0].mxu0
    %v1248 = vadd.f32 0.0, %v1247
    %1249 = vdwg.mxu0
    %1250 = vmatprep.subr.mxu0 %v274
    %1251 = vmatpush1.msra.mxu0 %v273
    %1252 = vmatprep.subr.mxu0 %v278
    %1253 = vmatpush1.msra.mxu0 %v277
    %1254 = vmatprep.subr.mxu0 %v282
    %1255 = vmatpush1.msra.mxu0 %v281
    %1256 = vmatprep.subr.mxu0 %v286
    %1257 = vmatpush1.msra.mxu0 %v285
    %1258 = vmatprep.subr.mxu0 %v290
    %1259 = vmatpush1.msra.mxu0 %v289
    %1260 = vmatprep.subr.mxu0 %v294
    %1261 = vmatpush1.msra.mxu0 %v293
    %1262 = vmatprep.subr.mxu0 %v298
    %1263 = vmatpush1.msra.mxu0 %v297
    %1264 = vmatprep.subr.mxu0 %v302
    %1265 = vmatpush1.msra.mxu0 %v301
    %1266 = vmatprep.subr.mxu0 %v306
    %1267 = vmatpush1.msra.mxu0 %v305
    %1268 = vmatprep.subr.mxu0 %v310
    %1269 = vmatpush1.msra.mxu0 %v309
    %1270 = vmatprep.subr.mxu0 %v314
    %1271 = vmatpush1.msra.mxu0 %v313
    %1272 = vmatprep.subr.mxu0 %v318
    %1273 = vmatpush1.msra.mxu0 %v317
    %1274 = vmatprep.subr.mxu0 %v322
    %1275 = vmatpush1.msra.mxu0 %v321
    %1276 = vmatprep.subr.mxu0 %v326
    %1277 = vmatpush1.msra.mxu0 %v325
    %1278 = vmatprep.subr.mxu0 %v330
    %1279 = vmatpush1.msra.mxu0 %v329
    %1280 = vmatprep.subr.mxu0 %v334
    %1281 = vmatpush1.msra.mxu0 %v333
    %1282 = vmatprep.subr.mxu0 0.0
    %1283 = vmatpush1.msra.mxu0 0.0
    %1284 = vmatprep.subr.mxu0 0.0
    %1285 = vmatpush1.msra.mxu0 0.0
    %1286 = vmatprep.subr.mxu0 0.0
    %1287 = vmatpush1.msra.mxu0 0.0
    %1288 = vmatprep.subr.mxu0 0.0
    %1289 = vmatpush1.msra.mxu0 0.0
    %1290 = vmatprep.subr.mxu0 0.0
    %1291 = vmatpush1.msra.mxu0 0.0
    %1292 = vmatprep.subr.mxu0 0.0
    %1293 = vmatpush1.msra.mxu0 0.0
    %1294 = vmatprep.subr.mxu0 0.0
    %1295 = vmatpush1.msra.mxu0 0.0
    %1296 = vmatprep.subr.mxu0 0.0
    %1297 = vmatpush1.msra.mxu0 0.0
    %1298 = vmatprep.subr.mxu0 0.0
    %1299 = vmatpush1.msra.mxu0 0.0
    %1300 = vmatprep.subr.mxu0 0.0
    %1301 = vmatpush1.msra.mxu0 0.0
    %1302 = vmatprep.subr.mxu0 0.0
    %1303 = vmatpush1.msra.mxu0 0.0
    %1304 = vmatprep.subr.mxu0 0.0
    %1305 = vmatpush1.msra.mxu0 0.0
    %1306 = vmatprep.subr.mxu0 0.0
    %1307 = vmatpush1.msra.mxu0 0.0
    %1308 = vmatprep.subr.mxu0 0.0
    %1309 = vmatpush1.msra.mxu0 0.0
    %1310 = vmatprep.subr.mxu0 0.0
    %1311 = vmatpush1.msra.mxu0 0.0
    %1312 = vmatprep.subr.mxu0 0.0
    %1313 = vmatpush1.msra.mxu0 0.0
    %1314 = vmatprep.mubr.f32.mxu0 0.0
    %1315 = vmatmul.mubr.f32.gmra.mrb[0].mxu0 %v1009
    %v1316 = vpop.f32.mrb[0].mxu0
    %v1317 = vadd.f32 0.0, %v1316
    %v1318 = vpop.f32.mrb[0].mxu0
    %v1319 = vadd.f32 0.0, %v1318
    %1320 = vdwg.mxu0
    %v1325 = vrot.slane %v1246, 4
    %v1326 = vrot.slane %v1248, 4
    %v1327 = vrot.slane %v1317, 4
    %v1328 = vrot.slane %v1319, 4
    %v1333 = vadd.f32 %v184, %v1325
    %v1334 = vadd.f32 %v186, %v1326
    %v1335 = vadd.f32 %v261, %v1327
    %v1336 = vadd.f32 %v263, %v1328
    %v1337 = vxor.u32 %v1333, 2147483648
    %v1338 = vmul.f32 %v1337, 1.442695
    %v1339 = vpow.pop %v1338
    %v1340 = vadd.f32 %v1339, 1.0
    %v1341 = vrcp.pop %v1340
    %v1342 = vmul.f32 1.0, %v1341
    %v1343 = vxor.u32 %v1334, 2147483648
    %v1344 = vmul.f32 %v1343, 1.442695
    %v1345 = vpow.pop %v1344
    %v1346 = vadd.f32 %v1345, 1.0
    %v1347 = vrcp.pop %v1346
    %v1348 = vmul.f32 1.0, %v1347
    %v1349 = vtanh.pop %v1335
    %v1350 = vxor.u32 %v1336, 2147483648
    %v1351 = vmul.f32 %v1350, 1.442695
    %v1352 = vpow.pop %v1351
    %v1353 = vadd.f32 %v1352, 1.0
    %v1354 = vrcp.pop %v1353
    %v1355 = vmul.f32 1.0, %v1354
    %v1357 = vrot.slane %v1003, 6
    %v1359 = vmul.f32 %v1348, %v1357
    %v1360 = vmul.f32 %v1342, %v1349
    %v1361 = vadd.f32 %v1359, %v1360
    %v1362 = vtanh.pop %v1361
    %v1363 = vmul.f32 %v1355, %v1362
    %v1365 = vrot.slane %v1178, 4
    %v1367 = vrot.slane %v1363, 4
    %v1368 = vrot.slane %v1365, 4
    %1371 = vmatprep.subr.mxu0 %v336
    %1372 = vmatpush1.msra.mxu0 %v335
    %1373 = vmatprep.subr.mxu0 %v340
    %1374 = vmatpush1.msra.mxu0 %v339
    %1375 = vmatprep.subr.mxu0 %v344
    %1376 = vmatpush1.msra.mxu0 %v343
    %1377 = vmatprep.subr.mxu0 %v348
    %1378 = vmatpush1.msra.mxu0 %v347
    %1379 = vmatprep.subr.mxu0 %v352
    %1380 = vmatpush1.msra.mxu0 %v351
    %1381 = vmatprep.subr.mxu0 %v356
    %1382 = vmatpush1.msra.mxu0 %v355
    %1383 = vmatprep.subr.mxu0 %v360
    %1384 = vmatpush1.msra.mxu0 %v359
    %1385 = vmatprep.subr.mxu0 %v364
    %1386 = vmatpush1.msra.mxu0 %v363
    %1387 = vmatprep.subr.mxu0 %v368
    %1388 = vmatpush1.msra.mxu0 %v367
    %1389 = vmatprep.subr.mxu0 %v372
    %1390 = vmatpush1.msra.mxu0 %v371
    %1391 = vmatprep.subr.mxu0 %v376
    %1392 = vmatpush1.msra.mxu0 %v375
    %1393 = vmatprep.subr.mxu0 %v380
    %1394 = vmatpush1.msra.mxu0 %v379
    %1395 = vmatprep.subr.mxu0 %v384
    %1396 = vmatpush1.msra.mxu0 %v383
    %1397 = vmatprep.subr.mxu0 %v388
    %1398 = vmatpush1.msra.mxu0 %v387
    %1399 = vmatprep.subr.mxu0 %v392
    %1400 = vmatpush1.msra.mxu0 %v391
    %1401 = vmatprep.subr.mxu0 %v396
    %1402 = vmatpush1.msra.mxu0 %v395
    %1403 = vmatprep.subr.mxu0 %v400
    %1404 = vmatpush1.msra.mxu0 %v399
    %1405 = vmatprep.subr.mxu0 %v404
    %1406 = vmatpush1.msra.mxu0 %v403
    %1407 = vmatprep.subr.mxu0 %v408
    %1408 = vmatpush1.msra.mxu0 %v407
    %1409 = vmatprep.subr.mxu0 %v412
    %1410 = vmatpush1.msra.mxu0 %v411
    %1411 = vmatprep.subr.mxu0 %v416
    %1412 = vmatpush1.msra.mxu0 %v415
    %1413 = vmatprep.subr.mxu0 %v420
    %1414 = vmatpush1.msra.mxu0 %v419
    %1415 = vmatprep.subr.mxu0 %v424
    %1416 = vmatpush1.msra.mxu0 %v423
    %1417 = vmatprep.subr.mxu0 %v428
    %1418 = vmatpush1.msra.mxu0 %v427
    %1419 = vmatprep.subr.mxu0 %v432
    %1420 = vmatpush1.msra.mxu0 %v431
    %1421 = vmatprep.subr.mxu0 %v436
    %1422 = vmatpush1.msra.mxu0 %v435
    %1423 = vmatprep.subr.mxu0 %v440
    %1424 = vmatpush1.msra.mxu0 %v439
    %1425 = vmatprep.subr.mxu0 %v444
    %1426 = vmatpush1.msra.mxu0 %v443
    %1427 = vmatprep.subr.mxu0 %v448
    %1428 = vmatpush1.msra.mxu0 %v447
    %1429 = vmatprep.subr.mxu0 %v452
    %1430 = vmatpush1.msra.mxu0 %v451
    %1431 = vmatprep.subr.mxu0 %v456
    %1432 = vmatpush1.msra.mxu0 %v455
    %1433 = vmatprep.subr.mxu0 %v460
    %1434 = vmatpush1.msra.mxu0 %v459
    %1435 = vmatprep.mubr.f32.mxu0 %v1368
    %1436 = vmatmul.mubr.f32.gmra.mrb[0].mxu0 %v1367
    %v1437 = vpop.f32.mrb[0].mxu0
    %v1438 = vadd.f32 %v468, %v1437
    %v1439 = vpop.f32.mrb[0].mxu0
    %v1440 = vadd.f32 %v472, %v1439
    %1441 = vdwg.mxu0
    %1442 = vmatprep.subr.mxu0 %v338
    %1443 = vmatpush1.msra.mxu0 %v337
    %1444 = vmatprep.subr.mxu0 %v342
    %1445 = vmatpush1.msra.mxu0 %v341
    %1446 = vmatprep.subr.mxu0 %v346
    %1447 = vmatpush1.msra.mxu0 %v345
    %1448 = vmatprep.subr.mxu0 %v350
    %1449 = vmatpush1.msra.mxu0 %v349
    %1450 = vmatprep.subr.mxu0 %v354
    %1451 = vmatpush1.msra.mxu0 %v353
    %1452 = vmatprep.subr.mxu0 %v358
    %1453 = vmatpush1.msra.mxu0 %v357
    %1454 = vmatprep.subr.mxu0 %v362
    %1455 = vmatpush1.msra.mxu0 %v361
    %1456 = vmatprep.subr.mxu0 %v366
    %1457 = vmatpush1.msra.mxu0 %v365
    %1458 = vmatprep.subr.mxu0 %v370
    %1459 = vmatpush1.msra.mxu0 %v369
    %1460 = vmatprep.subr.mxu0 %v374
    %1461 = vmatpush1.msra.mxu0 %v373
    %1462 = vmatprep.subr.mxu0 %v378
    %1463 = vmatpush1.msra.mxu0 %v377
    %1464 = vmatprep.subr.mxu0 %v382
    %1465 = vmatpush1.msra.mxu0 %v381
    %1466 = vmatprep.subr.mxu0 %v386
    %1467 = vmatpush1.msra.mxu0 %v385
    %1468 = vmatprep.subr.mxu0 %v390
    %1469 = vmatpush1.msra.mxu0 %v389
    %1470 = vmatprep.subr.mxu0 %v394
    %1471 = vmatpush1.msra.mxu0 %v393
    %1472 = vmatprep.subr.mxu0 %v398
    %1473 = vmatpush1.msra.mxu0 %v397
    %1474 = vmatprep.subr.mxu0 %v402
    %1475 = vmatpush1.msra.mxu0 %v401
    %1476 = vmatprep.subr.mxu0 %v406
    %1477 = vmatpush1.msra.mxu0 %v405
    %1478 = vmatprep.subr.mxu0 %v410
    %1479 = vmatpush1.msra.mxu0 %v409
    %1480 = vmatprep.subr.mxu0 %v414
    %1481 = vmatpush1.msra.mxu0 %v413
    %1482 = vmatprep.subr.mxu0 %v418
    %1483 = vmatpush1.msra.mxu0 %v417
    %1484 = vmatprep.subr.mxu0 %v422
    %1485 = vmatpush1.msra.mxu0 %v421
    %1486 = vmatprep.subr.mxu0 %v426
    %1487 = vmatpush1.msra.mxu0 %v425
    %1488 = vmatprep.subr.mxu0 %v430
    %1489 = vmatpush1.msra.mxu0 %v429
    %1490 = vmatprep.subr.mxu0 %v434
    %1491 = vmatpush1.msra.mxu0 %v433
    %1492 = vmatprep.subr.mxu0 %v438
    %1493 = vmatpush1.msra.mxu0 %v437
    %1494 = vmatprep.subr.mxu0 %v442
    %1495 = vmatpush1.msra.mxu0 %v441
    %1496 = vmatprep.subr.mxu0 %v446
    %1497 = vmatpush1.msra.mxu0 %v445
    %1498 = vmatprep.subr.mxu0 %v450
    %1499 = vmatpush1.msra.mxu0 %v449
    %1500 = vmatprep.subr.mxu0 %v454
    %1501 = vmatpush1.msra.mxu0 %v453
    %1502 = vmatprep.subr.mxu0 %v458
    %1503 = vmatpush1.msra.mxu0 %v457
    %1504 = vmatprep.subr.mxu0 %v462
    %1505 = vmatpush1.msra.mxu0 %v461
    %1506 = vmatprep.mubr.f32.mxu0 %v1368
    %1507 = vmatmul.mubr.f32.gmra.mrb[0].mxu0 %v1367
    %v1508 = vpop.f32.mrb[0].mxu0
    %v1509 = vadd.f32 %v476, %v1508
    %v1510 = vpop.f32.mrb[0].mxu0
    %v1511 = vadd.f32 %v480, %v1510
    %1512 = vdwg.mxu0
    %v1513 = vxor.u32 %v1438, 2147483648
    %v1514 = vmul.f32 %v1513, 1.442695
    %v1515 = vpow.pop %v1514
    %v1516 = vadd.f32 %v1515, 1.0
    %v1517 = vrcp.pop %v1516
    %v1518 = vmul.f32 1.0, %v1517
    %v1519 = vxor.u32 %v1440, 2147483648
    %v1520 = vmul.f32 %v1519, 1.442695
    %v1521 = vpow.pop %v1520
    %v1522 = vadd.f32 %v1521, 1.0
    %v1523 = vrcp.pop %v1522
    %v1524 = vmul.f32 1.0, %v1523
    %v1525 = vtanh.pop %v1509
    %v1526 = vxor.u32 %v1511, 2147483648
    %v1527 = vmul.f32 %v1526, 1.442695
    %v1528 = vpow.pop %v1527
    %v1529 = vadd.f32 %v1528, 1.0
    %v1530 = vrcp.pop %v1529
    %v1531 = vmul.f32 1.0, %v1530
    %v1532 = vmul.f32 %v1524, %v1176
    %v1533 = vmul.f32 %v1518, %v1525
    %v1534 = vadd.f32 %v1532, %v1533
    %v1535 = vtanh.pop %v1534
    %v1536 = vmul.f32 %v1531, %v1535
    %1537 = vmatprep.subr.mxu0 %v272
    %1538 = vmatpush1.msra.mxu0 %v271
    %1539 = vmatprep.subr.mxu0 %v276
    %1540 = vmatpush1.msra.mxu0 %v275
    %1541 = vmatprep.subr.mxu0 %v280
    %1542 = vmatpush1.msra.mxu0 %v279
    %1543 = vmatprep.subr.mxu0 %v284
    %1544 = vmatpush1.msra.mxu0 %v283
    %1545 = vmatprep.subr.mxu0 %v288
    %1546 = vmatpush1.msra.mxu0 %v287
    %1547 = vmatprep.subr.mxu0 %v292
    %1548 = vmatpush1.msra.mxu0 %v291
    %1549 = vmatprep.subr.mxu0 %v296
    %1550 = vmatpush1.msra.mxu0 %v295
    %1551 = vmatprep.subr.mxu0 %v300
    %1552 = vmatpush1.msra.mxu0 %v299
    %1553 = vmatprep.subr.mxu0 %v304
    %1554 = vmatpush1.msra.mxu0 %v303
    %1555 = vmatprep.subr.mxu0 %v308
    %1556 = vmatpush1.msra.mxu0 %v307
    %1557 = vmatprep.subr.mxu0 %v312
    %1558 = vmatpush1.msra.mxu0 %v311
    %1559 = vmatprep.subr.mxu0 %v316
    %1560 = vmatpush1.msra.mxu0 %v315
    %1561 = vmatprep.subr.mxu0 %v320
    %1562 = vmatpush1.msra.mxu0 %v319
    %1563 = vmatprep.subr.mxu0 %v324
    %1564 = vmatpush1.msra.mxu0 %v323
    %1565 = vmatprep.subr.mxu0 %v328
    %1566 = vmatpush1.msra.mxu0 %v327
    %1567 = vmatprep.subr.mxu0 %v332
    %1568 = vmatpush1.msra.mxu0 %v331
    %1569 = vmatprep.subr.mxu0 0.0
    %1570 = vmatpush1.msra.mxu0 0.0
    %1571 = vmatprep.subr.mxu0 0.0
    %1572 = vmatpush1.msra.mxu0 0.0
    %1573 = vmatprep.subr.mxu0 0.0
    %1574 = vmatpush1.msra.mxu0 0.0
    %1575 = vmatprep.subr.mxu0 0.0
    %1576 = vmatpush1.msra.mxu0 0.0
    %1577 = vmatprep.subr.mxu0 0.0
    %1578 = vmatpush1.msra.mxu0 0.0
    %1579 = vmatprep.subr.mxu0 0.0
    %1580 = vmatpush1.msra.mxu0 0.0
    %1581 = vmatprep.subr.mxu0 0.0
    %1582 = vmatpush1.msra.mxu0 0.0
    %1583 = vmatprep.subr.mxu0 0.0
    %1584 = vmatpush1.msra.mxu0 0.0
    %1585 = vmatprep.subr.mxu0 0.0
    %1586 = vmatpush1.msra.mxu0 0.0
    %1587 = vmatprep.subr.mxu0 0.0
    %1588 = vmatpush1.msra.mxu0 0.0
    %1589 = vmatprep.subr.mxu0 0.0
    %1590 = vmatpush1.msra.mxu0 0.0
    %1591 = vmatprep.subr.mxu0 0.0
    %1592 = vmatpush1.msra.mxu0 0.0
    %1593 = vmatprep.subr.mxu0 0.0
    %1594 = vmatpush1.msra.mxu0 0.0
    %1595 = vmatprep.subr.mxu0 0.0
    %1596 = vmatpush1.msra.mxu0 0.0
    %1597 = vmatprep.subr.mxu0 0.0
    %1598 = vmatpush1.msra.mxu0 0.0
    %1599 = vmatprep.subr.mxu0 0.0
    %1600 = vmatpush1.msra.mxu0 0.0
    %1601 = vmatprep.mubr.f32.mxu0 0.0
    %1602 = vmatmul.mubr.f32.gmra.mrb[0].mxu0 %v1367
    %v1603 = vpop.f32.mrb[0].mxu0
    %v1604 = vadd.f32 0.0, %v1603
    %v1605 = vpop.f32.mrb[0].mxu0
    %v1606 = vadd.f32 0.0, %v1605
    %1607 = vdwg.mxu0
    %1608 = vmatprep.subr.mxu0 %v274
    %1609 = vmatpush1.msra.mxu0 %v273
    %1610 = vmatprep.subr.mxu0 %v278
    %1611 = vmatpush1.msra.mxu0 %v277
    %1612 = vmatprep.subr.mxu0 %v282
    %1613 = vmatpush1.msra.mxu0 %v281
    %1614 = vmatprep.subr.mxu0 %v286
    %1615 = vmatpush1.msra.mxu0 %v285
    %1616 = vmatprep.subr.mxu0 %v290
    %1617 = vmatpush1.msra.mxu0 %v289
    %1618 = vmatprep.subr.mxu0 %v294
    %1619 = vmatpush1.msra.mxu0 %v293
    %1620 = vmatprep.subr.mxu0 %v298
    %1621 = vmatpush1.msra.mxu0 %v297
    %1622 = vmatprep.subr.mxu0 %v302
    %1623 = vmatpush1.msra.mxu0 %v301
    %1624 = vmatprep.subr.mxu0 %v306
    %1625 = vmatpush1.msra.mxu0 %v305
    %1626 = vmatprep.subr.mxu0 %v310
    %1627 = vmatpush1.msra.mxu0 %v309
    %1628 = vmatprep.subr.mxu0 %v314
    %1629 = vmatpush1.msra.mxu0 %v313
    %1630 = vmatprep.subr.mxu0 %v318
    %1631 = vmatpush1.msra.mxu0 %v317
    %1632 = vmatprep.subr.mxu0 %v322
    %1633 = vmatpush1.msra.mxu0 %v321
    %1634 = vmatprep.subr.mxu0 %v326
    %1635 = vmatpush1.msra.mxu0 %v325
    %1636 = vmatprep.subr.mxu0 %v330
    %1637 = vmatpush1.msra.mxu0 %v329
    %1638 = vmatprep.subr.mxu0 %v334
    %1639 = vmatpush1.msra.mxu0 %v333
    %1640 = vmatprep.subr.mxu0 0.0
    %1641 = vmatpush1.msra.mxu0 0.0
    %1642 = vmatprep.subr.mxu0 0.0
    %1643 = vmatpush1.msra.mxu0 0.0
    %1644 = vmatprep.subr.mxu0 0.0
    %1645 = vmatpush1.msra.mxu0 0.0
    %1646 = vmatprep.subr.mxu0 0.0
    %1647 = vmatpush1.msra.mxu0 0.0
    %1648 = vmatprep.subr.mxu0 0.0
    %1649 = vmatpush1.msra.mxu0 0.0
    %1650 = vmatprep.subr.mxu0 0.0
    %1651 = vmatpush1.msra.mxu0 0.0
    %1652 = vmatprep.subr.mxu0 0.0
    %1653 = vmatpush1.msra.mxu0 0.0
    %1654 = vmatprep.subr.mxu0 0.0
    %1655 = vmatpush1.msra.mxu0 0.0
    %1656 = vmatprep.subr.mxu0 0.0
    %1657 = vmatpush1.msra.mxu0 0.0
    %1658 = vmatprep.subr.mxu0 0.0
    %1659 = vmatpush1.msra.mxu0 0.0
    %1660 = vmatprep.subr.mxu0 0.0
    %1661 = vmatpush1.msra.mxu0 0.0
    %1662 = vmatprep.subr.mxu0 0.0
    %1663 = vmatpush1.msra.mxu0 0.0
    %1664 = vmatprep.subr.mxu0 0.0
    %1665 = vmatpush1.msra.mxu0 0.0
    %1666 = vmatprep.subr.mxu0 0.0
    %1667 = vmatpush1.msra.mxu0 0.0
    %1668 = vmatprep.subr.mxu0 0.0
    %1669 = vmatpush1.msra.mxu0 0.0
    %1670 = vmatprep.subr.mxu0 0.0
    %1671 = vmatpush1.msra.mxu0 0.0
    %1672 = vmatprep.mubr.f32.mxu0 0.0
    %1673 = vmatmul.mubr.f32.gmra.mrb[0].mxu0 %v1367
    %v1674 = vpop.f32.mrb[0].mxu0
    %v1675 = vadd.f32 0.0, %v1674
    %v1676 = vpop.f32.mrb[0].mxu0
    %v1677 = vadd.f32 0.0, %v1676
    %1678 = vdwg.mxu0
    %v1683 = vrot.slane %v1604, 2
    %v1684 = vrot.slane %v1606, 2
    %v1685 = vrot.slane %v1675, 2
    %v1686 = vrot.slane %v1677, 2
    %v1691 = vadd.f32 %v184, %v1683
    %v1692 = vadd.f32 %v186, %v1684
    %v1693 = vadd.f32 %v261, %v1685
    %v1694 = vadd.f32 %v263, %v1686
    %v1695 = vxor.u32 %v1691, 2147483648
    %v1696 = vmul.f32 %v1695, 1.442695
    %v1697 = vpow.pop %v1696
    %v1698 = vadd.f32 %v1697, 1.0
    %v1699 = vrcp.pop %v1698
    %v1700 = vmul.f32 1.0, %v1699
    %v1701 = vxor.u32 %v1692, 2147483648
    %v1702 = vmul.f32 %v1701, 1.442695
    %v1703 = vpow.pop %v1702
    %v1704 = vadd.f32 %v1703, 1.0
    %v1705 = vrcp.pop %v1704
    %v1706 = vmul.f32 1.0, %v1705
    %v1707 = vtanh.pop %v1693
    %v1708 = vxor.u32 %v1694, 2147483648
    %v1709 = vmul.f32 %v1708, 1.442695
    %v1710 = vpow.pop %v1709
    %v1711 = vadd.f32 %v1710, 1.0
    %v1712 = vrcp.pop %v1711
    %v1713 = vmul.f32 1.0, %v1712
    %v1715 = vrot.slane %v1361, 6
    %v1717 = vmul.f32 %v1706, %v1715
    %v1718 = vmul.f32 %v1700, %v1707
    %v1719 = vadd.f32 %v1717, %v1718
    %v1720 = vtanh.pop %v1719
    %v1721 = vmul.f32 %v1713, %v1720
    %v1723 = vrot.slane %v1536, 2
    %v1725 = vrot.slane %v1721, 6
    %v1726 = vrot.slane %v1723, 6
    %1729 = vmatprep.subr.mxu0 %v336
    %1730 = vmatpush1.msra.mxu0 %v335
    %1731 = vmatprep.subr.mxu0 %v340
    %1732 = vmatpush1.msra.mxu0 %v339
    %1733 = vmatprep.subr.mxu0 %v344
    %1734 = vmatpush1.msra.mxu0 %v343
    %1735 = vmatprep.subr.mxu0 %v348
    %1736 = vmatpush1.msra.mxu0 %v347
    %1737 = vmatprep.subr.mxu0 %v352
    %1738 = vmatpush1.msra.mxu0 %v351
    %1739 = vmatprep.subr.mxu0 %v356
    %1740 = vmatpush1.msra.mxu0 %v355
    %1741 = vmatprep.subr.mxu0 %v360
    %1742 = vmatpush1.msra.mxu0 %v359
    %1743 = vmatprep.subr.mxu0 %v364
    %1744 = vmatpush1.msra.mxu0 %v363
    %1745 = vmatprep.subr.mxu0 %v368
    %1746 = vmatpush1.msra.mxu0 %v367
    %1747 = vmatprep.subr.mxu0 %v372
    %1748 = vmatpush1.msra.mxu0 %v371
    %1749 = vmatprep.subr.mxu0 %v376
    %1750 = vmatpush1.msra.mxu0 %v375
    %1751 = vmatprep.subr.mxu0 %v380
    %1752 = vmatpush1.msra.mxu0 %v379
    %1753 = vmatprep.subr.mxu0 %v384
    %1754 = vmatpush1.msra.mxu0 %v383
    %1755 = vmatprep.subr.mxu0 %v388
    %1756 = vmatpush1.msra.mxu0 %v387
    %1757 = vmatprep.subr.mxu0 %v392
    %1758 = vmatpush1.msra.mxu0 %v391
    %1759 = vmatprep.subr.mxu0 %v396
    %1760 = vmatpush1.msra.mxu0 %v395
    %1761 = vmatprep.subr.mxu0 %v400
    %1762 = vmatpush1.msra.mxu0 %v399
    %1763 = vmatprep.subr.mxu0 %v404
    %1764 = vmatpush1.msra.mxu0 %v403
    %1765 = vmatprep.subr.mxu0 %v408
    %1766 = vmatpush1.msra.mxu0 %v407
    %1767 = vmatprep.subr.mxu0 %v412
    %1768 = vmatpush1.msra.mxu0 %v411
    %1769 = vmatprep.subr.mxu0 %v416
    %1770 = vmatpush1.msra.mxu0 %v415
    %1771 = vmatprep.subr.mxu0 %v420
    %1772 = vmatpush1.msra.mxu0 %v419
    %1773 = vmatprep.subr.mxu0 %v424
    %1774 = vmatpush1.msra.mxu0 %v423
    %1775 = vmatprep.subr.mxu0 %v428
    %1776 = vmatpush1.msra.mxu0 %v427
    %1777 = vmatprep.subr.mxu0 %v432
    %1778 = vmatpush1.msra.mxu0 %v431
    %1779 = vmatprep.subr.mxu0 %v436
    %1780 = vmatpush1.msra.mxu0 %v435
    %1781 = vmatprep.subr.mxu0 %v440
    %1782 = vmatpush1.msra.mxu0 %v439
    %1783 = vmatprep.subr.mxu0 %v444
    %1784 = vmatpush1.msra.mxu0 %v443
    %1785 = vmatprep.subr.mxu0 %v448
    %1786 = vmatpush1.msra.mxu0 %v447
    %1787 = vmatprep.subr.mxu0 %v452
    %1788 = vmatpush1.msra.mxu0 %v451
    %1789 = vmatprep.subr.mxu0 %v456
    %1790 = vmatpush1.msra.mxu0 %v455
    %1791 = vmatprep.subr.mxu0 %v460
    %1792 = vmatpush1.msra.mxu0 %v459
    %1793 = vmatprep.mubr.f32.mxu0 %v1726
    %1794 = vmatmul.mubr.f32.gmra.mrb[0].mxu0 %v1725
    %v1795 = vpop.f32.mrb[0].mxu0
    %v1796 = vadd.f32 %v468, %v1795
    %v1797 = vpop.f32.mrb[0].mxu0
    %v1798 = vadd.f32 %v472, %v1797
    %1799 = vdwg.mxu0
    %1800 = vmatprep.subr.mxu0 %v338
    %1801 = vmatpush1.msra.mxu0 %v337
    %1802 = vmatprep.subr.mxu0 %v342
    %1803 = vmatpush1.msra.mxu0 %v341
    %1804 = vmatprep.subr.mxu0 %v346
    %1805 = vmatpush1.msra.mxu0 %v345
    %1806 = vmatprep.subr.mxu0 %v350
    %1807 = vmatpush1.msra.mxu0 %v349
    %1808 = vmatprep.subr.mxu0 %v354
    %1809 = vmatpush1.msra.mxu0 %v353
    %1810 = vmatprep.subr.mxu0 %v358
    %1811 = vmatpush1.msra.mxu0 %v357
    %1812 = vmatprep.subr.mxu0 %v362
    %1813 = vmatpush1.msra.mxu0 %v361
    %1814 = vmatprep.subr.mxu0 %v366
    %1815 = vmatpush1.msra.mxu0 %v365
    %1816 = vmatprep.subr.mxu0 %v370
    %1817 = vmatpush1.msra.mxu0 %v369
    %1818 = vmatprep.subr.mxu0 %v374
    %1819 = vmatpush1.msra.mxu0 %v373
    %1820 = vmatprep.subr.mxu0 %v378
    %1821 = vmatpush1.msra.mxu0 %v377
    %1822 = vmatprep.subr.mxu0 %v382
    %1823 = vmatpush1.msra.mxu0 %v381
    %1824 = vmatprep.subr.mxu0 %v386
    %1825 = vmatpush1.msra.mxu0 %v385
    %1826 = vmatprep.subr.mxu0 %v390
    %1827 = vmatpush1.msra.mxu0 %v389
    %1828 = vmatprep.subr.mxu0 %v394
    %1829 = vmatpush1.msra.mxu0 %v393
    %1830 = vmatprep.subr.mxu0 %v398
    %1831 = vmatpush1.msra.mxu0 %v397
    %1832 = vmatprep.subr.mxu0 %v402
    %1833 = vmatpush1.msra.mxu0 %v401
    %1834 = vmatprep.subr.mxu0 %v406
    %1835 = vmatpush1.msra.mxu0 %v405
    %1836 = vmatprep.subr.mxu0 %v410
    %1837 = vmatpush1.msra.mxu0 %v409
    %1838 = vmatprep.subr.mxu0 %v414
    %1839 = vmatpush1.msra.mxu0 %v413
    %1840 = vmatprep.subr.mxu0 %v418
    %1841 = vmatpush1.msra.mxu0 %v417
    %1842 = vmatprep.subr.mxu0 %v422
    %1843 = vmatpush1.msra.mxu0 %v421
    %1844 = vmatprep.subr.mxu0 %v426
    %1845 = vmatpush1.msra.mxu0 %v425
    %1846 = vmatprep.subr.mxu0 %v430
    %1847 = vmatpush1.msra.mxu0 %v429
    %1848 = vmatprep.subr.mxu0 %v434
    %1849 = vmatpush1.msra.mxu0 %v433
    %1850 = vmatprep.subr.mxu0 %v438
    %1851 = vmatpush1.msra.mxu0 %v437
    %1852 = vmatprep.subr.mxu0 %v442
    %1853 = vmatpush1.msra.mxu0 %v441
    %1854 = vmatprep.subr.mxu0 %v446
    %1855 = vmatpush1.msra.mxu0 %v445
    %1856 = vmatprep.subr.mxu0 %v450
    %1857 = vmatpush1.msra.mxu0 %v449
    %1858 = vmatprep.subr.mxu0 %v454
    %1859 = vmatpush1.msra.mxu0 %v453
    %1860 = vmatprep.subr.mxu0 %v458
    %1861 = vmatpush1.msra.mxu0 %v457
    %1862 = vmatprep.subr.mxu0 %v462
    %1863 = vmatpush1.msra.mxu0 %v461
    %1864 = vmatprep.mubr.f32.mxu0 %v1726
    %1865 = vmatmul.mubr.f32.gmra.mrb[0].mxu0 %v1725
    %v1866 = vpop.f32.mrb[0].mxu0
    %v1867 = vadd.f32 %v476, %v1866
    %v1868 = vpop.f32.mrb[0].mxu0
    %v1869 = vadd.f32 %v480, %v1868
    %1870 = vdwg.mxu0
    %v1871 = vxor.u32 %v1796, 2147483648
    %v1872 = vmul.f32 %v1871, 1.442695
    %v1873 = vpow.pop %v1872
    %v1874 = vadd.f32 %v1873, 1.0
    %v1875 = vrcp.pop %v1874
    %v1876 = vmul.f32 1.0, %v1875
    %v1877 = vxor.u32 %v1798, 2147483648
    %v1878 = vmul.f32 %v1877, 1.442695
    %v1879 = vpow.pop %v1878
    %v1880 = vadd.f32 %v1879, 1.0
    %v1881 = vrcp.pop %v1880
    %v1882 = vmul.f32 1.0, %v1881
    %v1883 = vtanh.pop %v1867
    %v1884 = vxor.u32 %v1869, 2147483648
    %v1885 = vmul.f32 %v1884, 1.442695
    %v1886 = vpow.pop %v1885
    %v1887 = vadd.f32 %v1886, 1.0
    %v1888 = vrcp.pop %v1887
    %v1889 = vmul.f32 1.0, %v1888
    %v1890 = vmul.f32 %v1882, %v1534
    %v1891 = vmul.f32 %v1876, %v1883
    %v1892 = vadd.f32 %v1890, %v1891
    %v1893 = vtanh.pop %v1892
    %v1894 = vmul.f32 %v1889, %v1893
    %1895 = vmatprep.subr.mxu0 %v272
    %1896 = vmatpush1.msra.mxu0 %v271
    %1897 = vmatprep.subr.mxu0 %v276
    %1898 = vmatpush1.msra.mxu0 %v275
    %1899 = vmatprep.subr.mxu0 %v280
    %1900 = vmatpush1.msra.mxu0 %v279
    %1901 = vmatprep.subr.mxu0 %v284
    %1902 = vmatpush1.msra.mxu0 %v283
    %1903 = vmatprep.subr.mxu0 %v288
    %1904 = vmatpush1.msra.mxu0 %v287
    %1905 = vmatprep.subr.mxu0 %v292
    %1906 = vmatpush1.msra.mxu0 %v291
    %1907 = vmatprep.subr.mxu0 %v296
    %1908 = vmatpush1.msra.mxu0 %v295
    %1909 = vmatprep.subr.mxu0 %v300
    %1910 = vmatpush1.msra.mxu0 %v299
    %1911 = vmatprep.subr.mxu0 %v304
    %1912 = vmatpush1.msra.mxu0 %v303
    %1913 = vmatprep.subr.mxu0 %v308
    %1914 = vmatpush1.msra.mxu0 %v307
    %1915 = vmatprep.subr.mxu0 %v312
    %1916 = vmatpush1.msra.mxu0 %v311
    %1917 = vmatprep.subr.mxu0 %v316
    %1918 = vmatpush1.msra.mxu0 %v315
    %1919 = vmatprep.subr.mxu0 %v320
    %1920 = vmatpush1.msra.mxu0 %v319
    %1921 = vmatprep.subr.mxu0 %v324
    %1922 = vmatpush1.msra.mxu0 %v323
    %1923 = vmatprep.subr.mxu0 %v328
    %1924 = vmatpush1.msra.mxu0 %v327
    %1925 = vmatprep.subr.mxu0 %v332
    %1926 = vmatpush1.msra.mxu0 %v331
    %1927 = vmatprep.subr.mxu0 0.0
    %1928 = vmatpush1.msra.mxu0 0.0
    %1929 = vmatprep.subr.mxu0 0.0
    %1930 = vmatpush1.msra.mxu0 0.0
    %1931 = vmatprep.subr.mxu0 0.0
    %1932 = vmatpush1.msra.mxu0 0.0
    %1933 = vmatprep.subr.mxu0 0.0
    %1934 = vmatpush1.msra.mxu0 0.0
    %1935 = vmatprep.subr.mxu0 0.0
    %1936 = vmatpush1.msra.mxu0 0.0
    %1937 = vmatprep.subr.mxu0 0.0
    %1938 = vmatpush1.msra.mxu0 0.0
    %1939 = vmatprep.subr.mxu0 0.0
    %1940 = vmatpush1.msra.mxu0 0.0
    %1941 = vmatprep.subr.mxu0 0.0
    %1942 = vmatpush1.msra.mxu0 0.0
    %1943 = vmatprep.subr.mxu0 0.0
    %1944 = vmatpush1.msra.mxu0 0.0
    %1945 = vmatprep.subr.mxu0 0.0
    %1946 = vmatpush1.msra.mxu0 0.0
    %1947 = vmatprep.subr.mxu0 0.0
    %1948 = vmatpush1.msra.mxu0 0.0
    %1949 = vmatprep.subr.mxu0 0.0
    %1950 = vmatpush1.msra.mxu0 0.0
    %1951 = vmatprep.subr.mxu0 0.0
    %1952 = vmatpush1.msra.mxu0 0.0
    %1953 = vmatprep.subr.mxu0 0.0
    %1954 = vmatpush1.msra.mxu0 0.0
    %1955 = vmatprep.subr.mxu0 0.0
    %1956 = vmatpush1.msra.mxu0 0.0
    %1957 = vmatprep.subr.mxu0 0.0
    %1958 = vmatpush1.msra.mxu0 0.0
    %1959 = vmatprep.mubr.f32.mxu0 0.0
    %1960 = vmatmul.mubr.f32.gmra.mrb[0].mxu0 %v1725
    %v1961 = vpop.f32.mrb[0].mxu0
    %v1962 = vadd.f32 0.0, %v1961
    %v1963 = vpop.f32.mrb[0].mxu0
    %v1964 = vadd.f32 0.0, %v1963
    %1965 = vdwg.mxu0
    %1966 = vmatprep.subr.mxu0 %v274
    %1967 = vmatpush1.msra.mxu0 %v273
    %1968 = vmatprep.subr.mxu0 %v278
    %1969 = vmatpush1.msra.mxu0 %v277
    %1970 = vmatprep.subr.mxu0 %v282
    %1971 = vmatpush1.msra.mxu0 %v281
    %1972 = vmatprep.subr.mxu0 %v286
    %1973 = vmatpush1.msra.mxu0 %v285
    %1974 = vmatprep.subr.mxu0 %v290
    %1975 = vmatpush1.msra.mxu0 %v289
    %1976 = vmatprep.subr.mxu0 %v294
    %1977 = vmatpush1.msra.mxu0 %v293
    %1978 = vmatprep.subr.mxu0 %v298
    %1979 = vmatpush1.msra.mxu0 %v297
    %1980 = vmatprep.subr.mxu0 %v302
    %1981 = vmatpush1.msra.mxu0 %v301
    %1982 = vmatprep.subr.mxu0 %v306
    %1983 = vmatpush1.msra.mxu0 %v305
    %1984 = vmatprep.subr.mxu0 %v310
    %1985 = vmatpush1.msra.mxu0 %v309
    %1986 = vmatprep.subr.mxu0 %v314
    %1987 = vmatpush1.msra.mxu0 %v313
    %1988 = vmatprep.subr.mxu0 %v318
    %1989 = vmatpush1.msra.mxu0 %v317
    %1990 = vmatprep.subr.mxu0 %v322
    %1991 = vmatpush1.msra.mxu0 %v321
    %1992 = vmatprep.subr.mxu0 %v326
    %1993 = vmatpush1.msra.mxu0 %v325
    %1994 = vmatprep.subr.mxu0 %v330
    %1995 = vmatpush1.msra.mxu0 %v329
    %1996 = vmatprep.subr.mxu0 %v334
    %1997 = vmatpush1.msra.mxu0 %v333
    %1998 = vmatprep.subr.mxu0 0.0
    %1999 = vmatpush1.msra.mxu0 0.0
    %2000 = vmatprep.subr.mxu0 0.0
    %2001 = vmatpush1.msra.mxu0 0.0
    %2002 = vmatprep.subr.mxu0 0.0
    %2003 = vmatpush1.msra.mxu0 0.0
    %2004 = vmatprep.subr.mxu0 0.0
    %2005 = vmatpush1.msra.mxu0 0.0
    %2006 = vmatprep.subr.mxu0 0.0
    %2007 = vmatpush1.msra.mxu0 0.0
    %2008 = vmatprep.subr.mxu0 0.0
    %2009 = vmatpush1.msra.mxu0 0.0
    %2010 = vmatprep.subr.mxu0 0.0
    %2011 = vmatpush1.msra.mxu0 0.0
    %2012 = vmatprep.subr.mxu0 0.0
    %2013 = vmatpush1.msra.mxu0 0.0
    %2014 = vmatprep.subr.mxu0 0.0
    %2015 = vmatpush1.msra.mxu0 0.0
    %2016 = vmatprep.subr.mxu0 0.0
    %2017 = vmatpush1.msra.mxu0 0.0
    %2018 = vmatprep.subr.mxu0 0.0
    %2019 = vmatpush1.msra.mxu0 0.0
    %2020 = vmatprep.subr.mxu0 0.0
    %2021 = vmatpush1.msra.mxu0 0.0
    %2022 = vmatprep.subr.mxu0 0.0
    %2023 = vmatpush1.msra.mxu0 0.0
    %2024 = vmatprep.subr.mxu0 0.0
    %2025 = vmatpush1.msra.mxu0 0.0
    %2026 = vmatprep.subr.mxu0 0.0
    %2027 = vmatpush1.msra.mxu0 0.0
    %2028 = vmatprep.subr.mxu0 0.0
    %2029 = vmatpush1.msra.mxu0 0.0
    %2030 = vmatprep.mubr.f32.mxu0 0.0
    %2031 = vmatmul.mubr.f32.gmra.mrb[0].mxu0 %v1725
    %v2032 = vpop.f32.mrb[0].mxu0
    %v2033 = vadd.f32 0.0, %v2032
    %v2034 = vpop.f32.mrb[0].mxu0
    %v2035 = vadd.f32 0.0, %v2034
    %2036 = vdwg.mxu0
    %v2037 = vadd.f32 %v190, %v1962
    %v2038 = vadd.f32 %v192, %v1964
    %v2039 = vadd.f32 %v267, %v2033
    %v2040 = vadd.f32 %v269, %v2035
    %v2041 = vxor.u32 %v2037, 2147483648
    %v2042 = vmul.f32 %v2041, 1.442695
    %v2043 = vpow.pop %v2042
    %v2044 = vadd.f32 %v2043, 1.0
    %v2045 = vrcp.pop %v2044
    %v2046 = vmul.f32 1.0, %v2045
    %v2047 = vxor.u32 %v2038, 2147483648
    %v2048 = vmul.f32 %v2047, 1.442695
    %v2049 = vpow.pop %v2048
    %v2050 = vadd.f32 %v2049, 1.0
    %v2051 = vrcp.pop %v2050
    %v2052 = vmul.f32 1.0, %v2051
    %v2053 = vtanh.pop %v2039
    %v2054 = vxor.u32 %v2040, 2147483648
    %v2055 = vmul.f32 %v2054, 1.442695
    %v2056 = vpow.pop %v2055
    %v2057 = vadd.f32 %v2056, 1.0
    %v2058 = vrcp.pop %v2057
    %v2059 = vmul.f32 1.0, %v2058
    %v2061 = vrot.slane %v1719, 6
    %v2063 = vmul.f32 %v2052, %v2061
    %v2064 = vmul.f32 %v2046, %v2053
    %v2065 = vadd.f32 %v2063, %v2064
    %v2066 = vtanh.pop %v2065
    %v2067 = vmul.f32 %v2059, %v2066
    %2068 = vmatprep.subr.mxu0 %v336
    %2069 = vmatpush1.msra.mxu0 %v335
    %2070 = vmatprep.subr.mxu0 %v340
    %2071 = vmatpush1.msra.mxu0 %v339
    %2072 = vmatprep.subr.mxu0 %v344
    %2073 = vmatpush1.msra.mxu0 %v343
    %2074 = vmatprep.subr.mxu0 %v348
    %2075 = vmatpush1.msra.mxu0 %v347
    %2076 = vmatprep.subr.mxu0 %v352
    %2077 = vmatpush1.msra.mxu0 %v351
    %2078 = vmatprep.subr.mxu0 %v356
    %2079 = vmatpush1.msra.mxu0 %v355
    %2080 = vmatprep.subr.mxu0 %v360
    %2081 = vmatpush1.msra.mxu0 %v359
    %2082 = vmatprep.subr.mxu0 %v364
    %2083 = vmatpush1.msra.mxu0 %v363
    %2084 = vmatprep.subr.mxu0 %v368
    %2085 = vmatpush1.msra.mxu0 %v367
    %2086 = vmatprep.subr.mxu0 %v372
    %2087 = vmatpush1.msra.mxu0 %v371
    %2088 = vmatprep.subr.mxu0 %v376
    %2089 = vmatpush1.msra.mxu0 %v375
    %2090 = vmatprep.subr.mxu0 %v380
    %2091 = vmatpush1.msra.mxu0 %v379
    %2092 = vmatprep.subr.mxu0 %v384
    %2093 = vmatpush1.msra.mxu0 %v383
    %2094 = vmatprep.subr.mxu0 %v388
    %2095 = vmatpush1.msra.mxu0 %v387
    %2096 = vmatprep.subr.mxu0 %v392
    %2097 = vmatpush1.msra.mxu0 %v391
    %2098 = vmatprep.subr.mxu0 %v396
    %2099 = vmatpush1.msra.mxu0 %v395
    %2100 = vmatprep.subr.mxu0 %v400
    %2101 = vmatpush1.msra.mxu0 %v399
    %2102 = vmatprep.subr.mxu0 %v404
    %2103 = vmatpush1.msra.mxu0 %v403
    %2104 = vmatprep.subr.mxu0 %v408
    %2105 = vmatpush1.msra.mxu0 %v407
    %2106 = vmatprep.subr.mxu0 %v412
    %2107 = vmatpush1.msra.mxu0 %v411
    %2108 = vmatprep.subr.mxu0 %v416
    %2109 = vmatpush1.msra.mxu0 %v415
    %2110 = vmatprep.subr.mxu0 %v420
    %2111 = vmatpush1.msra.mxu0 %v419
    %2112 = vmatprep.subr.mxu0 %v424
    %2113 = vmatpush1.msra.mxu0 %v423
    %2114 = vmatprep.subr.mxu0 %v428
    %2115 = vmatpush1.msra.mxu0 %v427
    %2116 = vmatprep.subr.mxu0 %v432
    %2117 = vmatpush1.msra.mxu0 %v431
    %2118 = vmatprep.subr.mxu0 %v436
    %2119 = vmatpush1.msra.mxu0 %v435
    %2120 = vmatprep.subr.mxu0 %v440
    %2121 = vmatpush1.msra.mxu0 %v439
    %2122 = vmatprep.subr.mxu0 %v444
    %2123 = vmatpush1.msra.mxu0 %v443
    %2124 = vmatprep.subr.mxu0 %v448
    %2125 = vmatpush1.msra.mxu0 %v447
    %2126 = vmatprep.subr.mxu0 %v452
    %2127 = vmatpush1.msra.mxu0 %v451
    %2128 = vmatprep.subr.mxu0 %v456
    %2129 = vmatpush1.msra.mxu0 %v455
    %2130 = vmatprep.subr.mxu0 %v460
    %2131 = vmatpush1.msra.mxu0 %v459
    %2132 = vmatprep.mubr.f32.mxu0 %v1894
    %2133 = vmatmul.mubr.f32.gmra.mrb[0].mxu0 %v2067
    %v2134 = vpop.f32.mrb[0].mxu0
    %v2135 = vadd.f32 %v468, %v2134
    %v2136 = vpop.f32.mrb[0].mxu0
    %v2137 = vadd.f32 %v472, %v2136
    %2138 = vdwg.mxu0
    %2139 = vmatprep.subr.mxu0 %v338
    %2140 = vmatpush1.msra.mxu0 %v337
    %2141 = vmatprep.subr.mxu0 %v342
    %2142 = vmatpush1.msra.mxu0 %v341
    %2143 = vmatprep.subr.mxu0 %v346
    %2144 = vmatpush1.msra.mxu0 %v345
    %2145 = vmatprep.subr.mxu0 %v350
    %2146 = vmatpush1.msra.mxu0 %v349
    %2147 = vmatprep.subr.mxu0 %v354
    %2148 = vmatpush1.msra.mxu0 %v353
    %2149 = vmatprep.subr.mxu0 %v358
    %2150 = vmatpush1.msra.mxu0 %v357
    %2151 = vmatprep.subr.mxu0 %v362
    %2152 = vmatpush1.msra.mxu0 %v361
    %2153 = vmatprep.subr.mxu0 %v366
    %2154 = vmatpush1.msra.mxu0 %v365
    %2155 = vmatprep.subr.mxu0 %v370
    %2156 = vmatpush1.msra.mxu0 %v369
    %2157 = vmatprep.subr.mxu0 %v374
    %2158 = vmatpush1.msra.mxu0 %v373
    %2159 = vmatprep.subr.mxu0 %v378
    %2160 = vmatpush1.msra.mxu0 %v377
    %2161 = vmatprep.subr.mxu0 %v382
    %2162 = vmatpush1.msra.mxu0 %v381
    %2163 = vmatprep.subr.mxu0 %v386
    %2164 = vmatpush1.msra.mxu0 %v385
    %2165 = vmatprep.subr.mxu0 %v390
    %2166 = vmatpush1.msra.mxu0 %v389
    %2167 = vmatprep.subr.mxu0 %v394
    %2168 = vmatpush1.msra.mxu0 %v393
    %2169 = vmatprep.subr.mxu0 %v398
    %2170 = vmatpush1.msra.mxu0 %v397
    %2171 = vmatprep.subr.mxu0 %v402
    %2172 = vmatpush1.msra.mxu0 %v401
    %2173 = vmatprep.subr.mxu0 %v406
    %2174 = vmatpush1.msra.mxu0 %v405
    %2175 = vmatprep.subr.mxu0 %v410
    %2176 = vmatpush1.msra.mxu0 %v409
    %2177 = vmatprep.subr.mxu0 %v414
    %2178 = vmatpush1.msra.mxu0 %v413
    %2179 = vmatprep.subr.mxu0 %v418
    %2180 = vmatpush1.msra.mxu0 %v417
    %2181 = vmatprep.subr.mxu0 %v422
    %2182 = vmatpush1.msra.mxu0 %v421
    %2183 = vmatprep.subr.mxu0 %v426
    %2184 = vmatpush1.msra.mxu0 %v425
    %2185 = vmatprep.subr.mxu0 %v430
    %2186 = vmatpush1.msra.mxu0 %v429
    %2187 = vmatprep.subr.mxu0 %v434
    %2188 = vmatpush1.msra.mxu0 %v433
    %2189 = vmatprep.subr.mxu0 %v438
    %2190 = vmatpush1.msra.mxu0 %v437
    %2191 = vmatprep.subr.mxu0 %v442
    %2192 = vmatpush1.msra.mxu0 %v441
    %2193 = vmatprep.subr.mxu0 %v446
    %2194 = vmatpush1.msra.mxu0 %v445
    %2195 = vmatprep.subr.mxu0 %v450
    %2196 = vmatpush1.msra.mxu0 %v449
    %2197 = vmatprep.subr.mxu0 %v454
    %2198 = vmatpush1.msra.mxu0 %v453
    %2199 = vmatprep.subr.mxu0 %v458
    %2200 = vmatpush1.msra.mxu0 %v457
    %2201 = vmatprep.subr.mxu0 %v462
    %2202 = vmatpush1.msra.mxu0 %v461
    %2203 = vmatprep.mubr.f32.mxu0 %v1894
    %2204 = vmatmul.mubr.f32.gmra.mrb[0].mxu0 %v2067
    %v2205 = vpop.f32.mrb[0].mxu0
    %v2206 = vadd.f32 %v476, %v2205
    %v2207 = vpop.f32.mrb[0].mxu0
    %v2208 = vadd.f32 %v480, %v2207
    %2209 = vdwg.mxu0
    %v2210 = vxor.u32 %v2135, 2147483648
    %v2211 = vmul.f32 %v2210, 1.442695
    %v2212 = vpow.pop %v2211
    %v2213 = vadd.f32 %v2212, 1.0
    %v2214 = vrcp.pop %v2213
    %v2215 = vmul.f32 1.0, %v2214
    %v2216 = vxor.u32 %v2137, 2147483648
    %v2217 = vmul.f32 %v2216, 1.442695
    %v2218 = vpow.pop %v2217
    %v2219 = vadd.f32 %v2218, 1.0
    %v2220 = vrcp.pop %v2219
    %v2221 = vmul.f32 1.0, %v2220
    %v2222 = vtanh.pop %v2206
    %v2223 = vxor.u32 %v2208, 2147483648
    %v2224 = vmul.f32 %v2223, 1.442695
    %v2225 = vpow.pop %v2224
    %v2226 = vadd.f32 %v2225, 1.0
    %v2227 = vrcp.pop %v2226
    %v2228 = vmul.f32 1.0, %v2227
    %v2229 = vmul.f32 %v2221, %v1892
    %v2230 = vmul.f32 %v2215, %v2222
    %v2231 = vadd.f32 %v2229, %v2230
    %v2232 = vtanh.pop %v2231
    %v2233 = vmul.f32 %v2228, %v2232
    %2234 = vmatprep.subr.mxu0 %v272
    %2235 = vmatpush1.msra.mxu0 %v271
    %2236 = vmatprep.subr.mxu0 %v276
    %2237 = vmatpush1.msra.mxu0 %v275
    %2238 = vmatprep.subr.mxu0 %v280
    %2239 = vmatpush1.msra.mxu0 %v279
    %2240 = vmatprep.subr.mxu0 %v284
    %2241 = vmatpush1.msra.mxu0 %v283
    %2242 = vmatprep.subr.mxu0 %v288
    %2243 = vmatpush1.msra.mxu0 %v287
    %2244 = vmatprep.subr.mxu0 %v292
    %2245 = vmatpush1.msra.mxu0 %v291
    %2246 = vmatprep.subr.mxu0 %v296
    %2247 = vmatpush1.msra.mxu0 %v295
    %2248 = vmatprep.subr.mxu0 %v300
    %2249 = vmatpush1.msra.mxu0 %v299
    %2250 = vmatprep.subr.mxu0 %v304
    %2251 = vmatpush1.msra.mxu0 %v303
    %2252 = vmatprep.subr.mxu0 %v308
    %2253 = vmatpush1.msra.mxu0 %v307
    %2254 = vmatprep.subr.mxu0 %v312
    %2255 = vmatpush1.msra.mxu0 %v311
    %2256 = vmatprep.subr.mxu0 %v316
    %2257 = vmatpush1.msra.mxu0 %v315
    %2258 = vmatprep.subr.mxu0 %v320
    %2259 = vmatpush1.msra.mxu0 %v319
    %2260 = vmatprep.subr.mxu0 %v324
    %2261 = vmatpush1.msra.mxu0 %v323
    %2262 = vmatprep.subr.mxu0 %v328
    %2263 = vmatpush1.msra.mxu0 %v327
    %2264 = vmatprep.subr.mxu0 %v332
    %2265 = vmatpush1.msra.mxu0 %v331
    %2266 = vmatprep.subr.mxu0 0.0
    %2267 = vmatpush1.msra.mxu0 0.0
    %2268 = vmatprep.subr.mxu0 0.0
    %2269 = vmatpush1.msra.mxu0 0.0
    %2270 = vmatprep.subr.mxu0 0.0
    %2271 = vmatpush1.msra.mxu0 0.0
    %2272 = vmatprep.subr.mxu0 0.0
    %2273 = vmatpush1.msra.mxu0 0.0
    %2274 = vmatprep.subr.mxu0 0.0
    %2275 = vmatpush1.msra.mxu0 0.0
    %2276 = vmatprep.subr.mxu0 0.0
    %2277 = vmatpush1.msra.mxu0 0.0
    %2278 = vmatprep.subr.mxu0 0.0
    %2279 = vmatpush1.msra.mxu0 0.0
    %2280 = vmatprep.subr.mxu0 0.0
    %2281 = vmatpush1.msra.mxu0 0.0
    %2282 = vmatprep.subr.mxu0 0.0
    %2283 = vmatpush1.msra.mxu0 0.0
    %2284 = vmatprep.subr.mxu0 0.0
    %2285 = vmatpush1.msra.mxu0 0.0
    %2286 = vmatprep.subr.mxu0 0.0
    %2287 = vmatpush1.msra.mxu0 0.0
    %2288 = vmatprep.subr.mxu0 0.0
    %2289 = vmatpush1.msra.mxu0 0.0
    %2290 = vmatprep.subr.mxu0 0.0
    %2291 = vmatpush1.msra.mxu0 0.0
    %2292 = vmatprep.subr.mxu0 0.0
    %2293 = vmatpush1.msra.mxu0 0.0
    %2294 = vmatprep.subr.mxu0 0.0
    %2295 = vmatpush1.msra.mxu0 0.0
    %2296 = vmatprep.subr.mxu0 0.0
    %2297 = vmatpush1.msra.mxu0 0.0
    %2298 = vmatprep.mubr.f32.mxu0 0.0
    %2299 = vmatmul.mubr.f32.gmra.mrb[0].mxu0 %v2067
    %v2300 = vpop.f32.mrb[0].mxu0
    %v2301 = vadd.f32 0.0, %v2300
    %v2302 = vpop.f32.mrb[0].mxu0
    %v2303 = vadd.f32 0.0, %v2302
    %2304 = vdwg.mxu0
    %2305 = vmatprep.subr.mxu0 %v274
    %2306 = vmatpush1.msra.mxu0 %v273
    %2307 = vmatprep.subr.mxu0 %v278
    %2308 = vmatpush1.msra.mxu0 %v277
    %2309 = vmatprep.subr.mxu0 %v282
    %2310 = vmatpush1.msra.mxu0 %v281
    %2311 = vmatprep.subr.mxu0 %v286
    %2312 = vmatpush1.msra.mxu0 %v285
    %2313 = vmatprep.subr.mxu0 %v290
    %2314 = vmatpush1.msra.mxu0 %v289
    %2315 = vmatprep.subr.mxu0 %v294
    %2316 = vmatpush1.msra.mxu0 %v293
    %2317 = vmatprep.subr.mxu0 %v298
    %2318 = vmatpush1.msra.mxu0 %v297
    %2319 = vmatprep.subr.mxu0 %v302
    %2320 = vmatpush1.msra.mxu0 %v301
    %2321 = vmatprep.subr.mxu0 %v306
    %2322 = vmatpush1.msra.mxu0 %v305
    %2323 = vmatprep.subr.mxu0 %v310
    %2324 = vmatpush1.msra.mxu0 %v309
    %2325 = vmatprep.subr.mxu0 %v314
    %2326 = vmatpush1.msra.mxu0 %v313
    %2327 = vmatprep.subr.mxu0 %v318
    %2328 = vmatpush1.msra.mxu0 %v317
    %2329 = vmatprep.subr.mxu0 %v322
    %2330 = vmatpush1.msra.mxu0 %v321
    %2331 = vmatprep.subr.mxu0 %v326
    %2332 = vmatpush1.msra.mxu0 %v325
    %2333 = vmatprep.subr.mxu0 %v330
    %2334 = vmatpush1.msra.mxu0 %v329
    %2335 = vmatprep.subr.mxu0 %v334
    %2336 = vmatpush1.msra.mxu0 %v333
    %2337 = vmatprep.subr.mxu0 0.0
    %2338 = vmatpush1.msra.mxu0 0.0
    %2339 = vmatprep.subr.mxu0 0.0
    %2340 = vmatpush1.msra.mxu0 0.0
    %2341 = vmatprep.subr.mxu0 0.0
    %2342 = vmatpush1.msra.mxu0 0.0
    %2343 = vmatprep.subr.mxu0 0.0
    %2344 = vmatpush1.msra.mxu0 0.0
    %2345 = vmatprep.subr.mxu0 0.0
    %2346 = vmatpush1.msra.mxu0 0.0
    %2347 = vmatprep.subr.mxu0 0.0
    %2348 = vmatpush1.msra.mxu0 0.0
    %2349 = vmatprep.subr.mxu0 0.0
    %2350 = vmatpush1.msra.mxu0 0.0
    %2351 = vmatprep.subr.mxu0 0.0
    %2352 = vmatpush1.msra.mxu0 0.0
    %2353 = vmatprep.subr.mxu0 0.0
    %2354 = vmatpush1.msra.mxu0 0.0
    %2355 = vmatprep.subr.mxu0 0.0
    %2356 = vmatpush1.msra.mxu0 0.0
    %2357 = vmatprep.subr.mxu0 0.0
    %2358 = vmatpush1.msra.mxu0 0.0
    %2359 = vmatprep.subr.mxu0 0.0
    %2360 = vmatpush1.msra.mxu0 0.0
    %2361 = vmatprep.subr.mxu0 0.0
    %2362 = vmatpush1.msra.mxu0 0.0
    %2363 = vmatprep.subr.mxu0 0.0
    %2364 = vmatpush1.msra.mxu0 0.0
    %2365 = vmatprep.subr.mxu0 0.0
    %2366 = vmatpush1.msra.mxu0 0.0
    %2367 = vmatprep.subr.mxu0 0.0
    %2368 = vmatpush1.msra.mxu0 0.0
    %2369 = vmatprep.mubr.f32.mxu0 0.0
    %2370 = vmatmul.mubr.f32.gmra.mrb[0].mxu0 %v2067
    %v2371 = vpop.f32.mrb[0].mxu0
    %v2372 = vadd.f32 0.0, %v2371
    %v2373 = vpop.f32.mrb[0].mxu0
    %v2374 = vadd.f32 0.0, %v2373
    %2375 = vdwg.mxu0
    %v2380 = vrot.slane %v2301, 6
    %v2381 = vrot.slane %v2303, 6
    %v2382 = vrot.slane %v2372, 6
    %v2383 = vrot.slane %v2374, 6
    %v2388 = vadd.f32 %v190, %v2380
    %v2389 = vadd.f32 %v192, %v2381
    %v2390 = vadd.f32 %v267, %v2382
    %v2391 = vadd.f32 %v269, %v2383
    %v2392 = vxor.u32 %v2388, 2147483648
    %v2393 = vmul.f32 %v2392, 1.442695
    %v2394 = vpow.pop %v2393
    %v2395 = vadd.f32 %v2394, 1.0
    %v2396 = vrcp.pop %v2395
    %v2397 = vmul.f32 1.0, %v2396
    %v2398 = vxor.u32 %v2389, 2147483648
    %v2399 = vmul.f32 %v2398, 1.442695
    %v2400 = vpow.pop %v2399
    %v2401 = vadd.f32 %v2400, 1.0
    %v2402 = vrcp.pop %v2401
    %v2403 = vmul.f32 1.0, %v2402
    %v2404 = vtanh.pop %v2390
    %v2405 = vxor.u32 %v2391, 2147483648
    %v2406 = vmul.f32 %v2405, 1.442695
    %v2407 = vpow.pop %v2406
    %v2408 = vadd.f32 %v2407, 1.0
    %v2409 = vrcp.pop %v2408
    %v2410 = vmul.f32 1.0, %v2409
    %v2412 = vrot.slane %v2065, 6
    %v2414 = vmul.f32 %v2403, %v2412
    %v2415 = vmul.f32 %v2397, %v2404
    %v2416 = vadd.f32 %v2414, %v2415
    %v2417 = vtanh.pop %v2416
    %v2418 = vmul.f32 %v2410, %v2417
    %v2420 = vrot.slane %v2233, 6
    %v2422 = vrot.slane %v2418, 2
    %v2423 = vrot.slane %v2420, 2
    %2426 = vmatprep.subr.mxu0 %v336
    %2427 = vmatpush1.msra.mxu0 %v335
    %2428 = vmatprep.subr.mxu0 %v340
    %2429 = vmatpush1.msra.mxu0 %v339
    %2430 = vmatprep.subr.mxu0 %v344
    %2431 = vmatpush1.msra.mxu0 %v343
    %2432 = vmatprep.subr.mxu0 %v348
    %2433 = vmatpush1.msra.mxu0 %v347
    %2434 = vmatprep.subr.mxu0 %v352
    %2435 = vmatpush1.msra.mxu0 %v351
    %2436 = vmatprep.subr.mxu0 %v356
    %2437 = vmatpush1.msra.mxu0 %v355
    %2438 = vmatprep.subr.mxu0 %v360
    %2439 = vmatpush1.msra.mxu0 %v359
    %2440 = vmatprep.subr.mxu0 %v364
    %2441 = vmatpush1.msra.mxu0 %v363
    %2442 = vmatprep.subr.mxu0 %v368
    %2443 = vmatpush1.msra.mxu0 %v367
    %2444 = vmatprep.subr.mxu0 %v372
    %2445 = vmatpush1.msra.mxu0 %v371
    %2446 = vmatprep.subr.mxu0 %v376
    %2447 = vmatpush1.msra.mxu0 %v375
    %2448 = vmatprep.subr.mxu0 %v380
    %2449 = vmatpush1.msra.mxu0 %v379
    %2450 = vmatprep.subr.mxu0 %v384
    %2451 = vmatpush1.msra.mxu0 %v383
    %2452 = vmatprep.subr.mxu0 %v388
    %2453 = vmatpush1.msra.mxu0 %v387
    %2454 = vmatprep.subr.mxu0 %v392
    %2455 = vmatpush1.msra.mxu0 %v391
    %2456 = vmatprep.subr.mxu0 %v396
    %2457 = vmatpush1.msra.mxu0 %v395
    %2458 = vmatprep.subr.mxu0 %v400
    %2459 = vmatpush1.msra.mxu0 %v399
    %2460 = vmatprep.subr.mxu0 %v404
    %2461 = vmatpush1.msra.mxu0 %v403
    %2462 = vmatprep.subr.mxu0 %v408
    %2463 = vmatpush1.msra.mxu0 %v407
    %2464 = vmatprep.subr.mxu0 %v412
    %2465 = vmatpush1.msra.mxu0 %v411
    %2466 = vmatprep.subr.mxu0 %v416
    %2467 = vmatpush1.msra.mxu0 %v415
    %2468 = vmatprep.subr.mxu0 %v420
    %2469 = vmatpush1.msra.mxu0 %v419
    %2470 = vmatprep.subr.mxu0 %v424
    %2471 = vmatpush1.msra.mxu0 %v423
    %2472 = vmatprep.subr.mxu0 %v428
    %2473 = vmatpush1.msra.mxu0 %v427
    %2474 = vmatprep.subr.mxu0 %v432
    %2475 = vmatpush1.msra.mxu0 %v431
    %2476 = vmatprep.subr.mxu0 %v436
    %2477 = vmatpush1.msra.mxu0 %v435
    %2478 = vmatprep.subr.mxu0 %v440
    %2479 = vmatpush1.msra.mxu0 %v439
    %2480 = vmatprep.subr.mxu0 %v444
    %2481 = vmatpush1.msra.mxu0 %v443
    %2482 = vmatprep.subr.mxu0 %v448
    %2483 = vmatpush1.msra.mxu0 %v447
    %2484 = vmatprep.subr.mxu0 %v452
    %2485 = vmatpush1.msra.mxu0 %v451
    %2486 = vmatprep.subr.mxu0 %v456
    %2487 = vmatpush1.msra.mxu0 %v455
    %2488 = vmatprep.subr.mxu0 %v460
    %2489 = vmatpush1.msra.mxu0 %v459
    %2490 = vmatprep.mubr.f32.mxu0 %v2423
    %2491 = vmatmul.mubr.f32.gmra.mrb[0].mxu0 %v2422
    %v2492 = vpop.f32.mrb[0].mxu0
    %v2493 = vadd.f32 %v468, %v2492
    %v2494 = vpop.f32.mrb[0].mxu0
    %v2495 = vadd.f32 %v472, %v2494
    %2496 = vdwg.mxu0
    %2497 = vmatprep.subr.mxu0 %v338
    %2498 = vmatpush1.msra.mxu0 %v337
    %2499 = vmatprep.subr.mxu0 %v342
    %2500 = vmatpush1.msra.mxu0 %v341
    %2501 = vmatprep.subr.mxu0 %v346
    %2502 = vmatpush1.msra.mxu0 %v345
    %2503 = vmatprep.subr.mxu0 %v350
    %2504 = vmatpush1.msra.mxu0 %v349
    %2505 = vmatprep.subr.mxu0 %v354
    %2506 = vmatpush1.msra.mxu0 %v353
    %2507 = vmatprep.subr.mxu0 %v358
    %2508 = vmatpush1.msra.mxu0 %v357
    %2509 = vmatprep.subr.mxu0 %v362
    %2510 = vmatpush1.msra.mxu0 %v361
    %2511 = vmatprep.subr.mxu0 %v366
    %2512 = vmatpush1.msra.mxu0 %v365
    %2513 = vmatprep.subr.mxu0 %v370
    %2514 = vmatpush1.msra.mxu0 %v369
    %2515 = vmatprep.subr.mxu0 %v374
    %2516 = vmatpush1.msra.mxu0 %v373
    %2517 = vmatprep.subr.mxu0 %v378
    %2518 = vmatpush1.msra.mxu0 %v377
    %2519 = vmatprep.subr.mxu0 %v382
    %2520 = vmatpush1.msra.mxu0 %v381
    %2521 = vmatprep.subr.mxu0 %v386
    %2522 = vmatpush1.msra.mxu0 %v385
    %2523 = vmatprep.subr.mxu0 %v390
    %2524 = vmatpush1.msra.mxu0 %v389
    %2525 = vmatprep.subr.mxu0 %v394
    %2526 = vmatpush1.msra.mxu0 %v393
    %2527 = vmatprep.subr.mxu0 %v398
    %2528 = vmatpush1.msra.mxu0 %v397
    %2529 = vmatprep.subr.mxu0 %v402
    %2530 = vmatpush1.msra.mxu0 %v401
    %2531 = vmatprep.subr.mxu0 %v406
    %2532 = vmatpush1.msra.mxu0 %v405
    %2533 = vmatprep.subr.mxu0 %v410
    %2534 = vmatpush1.msra.mxu0 %v409
    %2535 = vmatprep.subr.mxu0 %v414
    %2536 = vmatpush1.msra.mxu0 %v413
    %2537 = vmatprep.subr.mxu0 %v418
    %2538 = vmatpush1.msra.mxu0 %v417
    %2539 = vmatprep.subr.mxu0 %v422
    %2540 = vmatpush1.msra.mxu0 %v421
    %2541 = vmatprep.subr.mxu0 %v426
    %2542 = vmatpush1.msra.mxu0 %v425
    %2543 = vmatprep.subr.mxu0 %v430
    %2544 = vmatpush1.msra.mxu0 %v429
    %2545 = vmatprep.subr.mxu0 %v434
    %2546 = vmatpush1.msra.mxu0 %v433
    %2547 = vmatprep.subr.mxu0 %v438
    %2548 = vmatpush1.msra.mxu0 %v437
    %2549 = vmatprep.subr.mxu0 %v442
    %2550 = vmatpush1.msra.mxu0 %v441
    %2551 = vmatprep.subr.mxu0 %v446
    %2552 = vmatpush1.msra.mxu0 %v445
    %2553 = vmatprep.subr.mxu0 %v450
    %2554 = vmatpush1.msra.mxu0 %v449
    %2555 = vmatprep.subr.mxu0 %v454
    %2556 = vmatpush1.msra.mxu0 %v453
    %2557 = vmatprep.subr.mxu0 %v458
    %2558 = vmatpush1.msra.mxu0 %v457
    %2559 = vmatprep.subr.mxu0 %v462
    %2560 = vmatpush1.msra.mxu0 %v461
    %2561 = vmatprep.mubr.f32.mxu0 %v2423
    %2562 = vmatmul.mubr.f32.gmra.mrb[0].mxu0 %v2422
    %v2563 = vpop.f32.mrb[0].mxu0
    %v2564 = vadd.f32 %v476, %v2563
    %v2565 = vpop.f32.mrb[0].mxu0
    %v2566 = vadd.f32 %v480, %v2565
    %2567 = vdwg.mxu0
    %v2568 = vxor.u32 %v2493, 2147483648
    %v2569 = vmul.f32 %v2568, 1.442695
    %v2570 = vpow.pop %v2569
    %v2571 = vadd.f32 %v2570, 1.0
    %v2572 = vrcp.pop %v2571
    %v2573 = vmul.f32 1.0, %v2572
    %v2574 = vxor.u32 %v2495, 2147483648
    %v2575 = vmul.f32 %v2574, 1.442695
    %v2576 = vpow.pop %v2575
    %v2577 = vadd.f32 %v2576, 1.0
    %v2578 = vrcp.pop %v2577
    %v2579 = vmul.f32 1.0, %v2578
    %v2580 = vtanh.pop %v2564
    %v2581 = vxor.u32 %v2566, 2147483648
    %v2582 = vmul.f32 %v2581, 1.442695
    %v2583 = vpow.pop %v2582
    %v2584 = vadd.f32 %v2583, 1.0
    %v2585 = vrcp.pop %v2584
    %v2586 = vmul.f32 1.0, %v2585
    %v2587 = vmul.f32 %v2579, %v2231
    %v2588 = vmul.f32 %v2573, %v2580
    %v2589 = vadd.f32 %v2587, %v2588
    %v2590 = vtanh.pop %v2589
    %v2591 = vmul.f32 %v2586, %v2590
    %2592 = vmatprep.subr.mxu0 %v272
    %2593 = vmatpush1.msra.mxu0 %v271
    %2594 = vmatprep.subr.mxu0 %v276
    %2595 = vmatpush1.msra.mxu0 %v275
    %2596 = vmatprep.subr.mxu0 %v280
    %2597 = vmatpush1.msra.mxu0 %v279
    %2598 = vmatprep.subr.mxu0 %v284
    %2599 = vmatpush1.msra.mxu0 %v283
    %2600 = vmatprep.subr.mxu0 %v288
    %2601 = vmatpush1.msra.mxu0 %v287
    %2602 = vmatprep.subr.mxu0 %v292
    %2603 = vmatpush1.msra.mxu0 %v291
    %2604 = vmatprep.subr.mxu0 %v296
    %2605 = vmatpush1.msra.mxu0 %v295
    %2606 = vmatprep.subr.mxu0 %v300
    %2607 = vmatpush1.msra.mxu0 %v299
    %2608 = vmatprep.subr.mxu0 %v304
    %2609 = vmatpush1.msra.mxu0 %v303
    %2610 = vmatprep.subr.mxu0 %v308
    %2611 = vmatpush1.msra.mxu0 %v307
    %2612 = vmatprep.subr.mxu0 %v312
    %2613 = vmatpush1.msra.mxu0 %v311
    %2614 = vmatprep.subr.mxu0 %v316
    %2615 = vmatpush1.msra.mxu0 %v315
    %2616 = vmatprep.subr.mxu0 %v320
    %2617 = vmatpush1.msra.mxu0 %v319
    %2618 = vmatprep.subr.mxu0 %v324
    %2619 = vmatpush1.msra.mxu0 %v323
    %2620 = vmatprep.subr.mxu0 %v328
    %2621 = vmatpush1.msra.mxu0 %v327
    %2622 = vmatprep.subr.mxu0 %v332
    %2623 = vmatpush1.msra.mxu0 %v331
    %2624 = vmatprep.subr.mxu0 0.0
    %2625 = vmatpush1.msra.mxu0 0.0
    %2626 = vmatprep.subr.mxu0 0.0
    %2627 = vmatpush1.msra.mxu0 0.0
    %2628 = vmatprep.subr.mxu0 0.0
    %2629 = vmatpush1.msra.mxu0 0.0
    %2630 = vmatprep.subr.mxu0 0.0
    %2631 = vmatpush1.msra.mxu0 0.0
    %2632 = vmatprep.subr.mxu0 0.0
    %2633 = vmatpush1.msra.mxu0 0.0
    %2634 = vmatprep.subr.mxu0 0.0
    %2635 = vmatpush1.msra.mxu0 0.0
    %2636 = vmatprep.subr.mxu0 0.0
    %2637 = vmatpush1.msra.mxu0 0.0
    %2638 = vmatprep.subr.mxu0 0.0
    %2639 = vmatpush1.msra.mxu0 0.0
    %2640 = vmatprep.subr.mxu0 0.0
    %2641 = vmatpush1.msra.mxu0 0.0
    %2642 = vmatprep.subr.mxu0 0.0
    %2643 = vmatpush1.msra.mxu0 0.0
    %2644 = vmatprep.subr.mxu0 0.0
    %2645 = vmatpush1.msra.mxu0 0.0
    %2646 = vmatprep.subr.mxu0 0.0
    %2647 = vmatpush1.msra.mxu0 0.0
    %2648 = vmatprep.subr.mxu0 0.0
    %2649 = vmatpush1.msra.mxu0 0.0
    %2650 = vmatprep.subr.mxu0 0.0
    %2651 = vmatpush1.msra.mxu0 0.0
    %2652 = vmatprep.subr.mxu0 0.0
    %2653 = vmatpush1.msra.mxu0 0.0
    %2654 = vmatprep.subr.mxu0 0.0
    %2655 = vmatpush1.msra.mxu0 0.0
    %2656 = vmatprep.mubr.f32.mxu0 0.0
    %2657 = vmatmul.mubr.f32.gmra.mrb[0].mxu0 %v2422
    %v2658 = vpop.f32.mrb[0].mxu0
    %v2659 = vadd.f32 0.0, %v2658
    %v2660 = vpop.f32.mrb[0].mxu0
    %v2661 = vadd.f32 0.0, %v2660
    %2662 = vdwg.mxu0
    %2663 = vmatprep.subr.mxu0 %v274
    %2664 = vmatpush1.msra.mxu0 %v273
    %2665 = vmatprep.subr.mxu0 %v278
    %2666 = vmatpush1.msra.mxu0 %v277
    %2667 = vmatprep.subr.mxu0 %v282
    %2668 = vmatpush1.msra.mxu0 %v281
    %2669 = vmatprep.subr.mxu0 %v286
    %2670 = vmatpush1.msra.mxu0 %v285
    %2671 = vmatprep.subr.mxu0 %v290
    %2672 = vmatpush1.msra.mxu0 %v289
    %2673 = vmatprep.subr.mxu0 %v294
    %2674 = vmatpush1.msra.mxu0 %v293
    %2675 = vmatprep.subr.mxu0 %v298
    %2676 = vmatpush1.msra.mxu0 %v297
    %2677 = vmatprep.subr.mxu0 %v302
    %2678 = vmatpush1.msra.mxu0 %v301
    %2679 = vmatprep.subr.mxu0 %v306
    %2680 = vmatpush1.msra.mxu0 %v305
    %2681 = vmatprep.subr.mxu0 %v310
    %2682 = vmatpush1.msra.mxu0 %v309
    %2683 = vmatprep.subr.mxu0 %v314
    %2684 = vmatpush1.msra.mxu0 %v313
    %2685 = vmatprep.subr.mxu0 %v318
    %2686 = vmatpush1.msra.mxu0 %v317
    %2687 = vmatprep.subr.mxu0 %v322
    %2688 = vmatpush1.msra.mxu0 %v321
    %2689 = vmatprep.subr.mxu0 %v326
    %2690 = vmatpush1.msra.mxu0 %v325
    %2691 = vmatprep.subr.mxu0 %v330
    %2692 = vmatpush1.msra.mxu0 %v329
    %2693 = vmatprep.subr.mxu0 %v334
    %2694 = vmatpush1.msra.mxu0 %v333
    %2695 = vmatprep.subr.mxu0 0.0
    %2696 = vmatpush1.msra.mxu0 0.0
    %2697 = vmatprep.subr.mxu0 0.0
    %2698 = vmatpush1.msra.mxu0 0.0
    %2699 = vmatprep.subr.mxu0 0.0
    %2700 = vmatpush1.msra.mxu0 0.0
    %2701 = vmatprep.subr.mxu0 0.0
    %2702 = vmatpush1.msra.mxu0 0.0
    %2703 = vmatprep.subr.mxu0 0.0
    %2704 = vmatpush1.msra.mxu0 0.0
    %2705 = vmatprep.subr.mxu0 0.0
    %2706 = vmatpush1.msra.mxu0 0.0
    %2707 = vmatprep.subr.mxu0 0.0
    %2708 = vmatpush1.msra.mxu0 0.0
    %2709 = vmatprep.subr.mxu0 0.0
    %2710 = vmatpush1.msra.mxu0 0.0
    %2711 = vmatprep.subr.mxu0 0.0
    %2712 = vmatpush1.msra.mxu0 0.0
    %2713 = vmatprep.subr.mxu0 0.0
    %2714 = vmatpush1.msra.mxu0 0.0
    %2715 = vmatprep.subr.mxu0 0.0
    %2716 = vmatpush1.msra.mxu0 0.0
    %2717 = vmatprep.subr.mxu0 0.0
    %2718 = vmatpush1.msra.mxu0 0.0
    %2719 = vmatprep.subr.mxu0 0.0
    %2720 = vmatpush1.msra.mxu0 0.0
    %2721 = vmatprep.subr.mxu0 0.0
    %2722 = vmatpush1.msra.mxu0 0.0
    %2723 = vmatprep.subr.mxu0 0.0
    %2724 = vmatpush1.msra.mxu0 0.0
    %2725 = vmatprep.subr.mxu0 0.0
    %2726 = vmatpush1.msra.mxu0 0.0
    %2727 = vmatprep.mubr.f32.mxu0 0.0
    %2728 = vmatmul.mubr.f32.gmra.mrb[0].mxu0 %v2422
    %v2729 = vpop.f32.mrb[0].mxu0
    %v2730 = vadd.f32 0.0, %v2729
    %v2731 = vpop.f32.mrb[0].mxu0
    %v2732 = vadd.f32 0.0, %v2731
    %2733 = vdwg.mxu0
    %v2738 = vrot.slane %v2659, 4
    %v2739 = vrot.slane %v2661, 4
    %v2740 = vrot.slane %v2730, 4
    %v2741 = vrot.slane %v2732, 4
    %v2746 = vadd.f32 %v190, %v2738
    %v2747 = vadd.f32 %v192, %v2739
    %v2748 = vadd.f32 %v267, %v2740
    %v2749 = vadd.f32 %v269, %v2741
    %v2750 = vxor.u32 %v2746, 2147483648
    %v2751 = vmul.f32 %v2750, 1.442695
    %v2752 = vpow.pop %v2751
    %v2753 = vadd.f32 %v2752, 1.0
    %v2754 = vrcp.pop %v2753
    %v2755 = vmul.f32 1.0, %v2754
    %v2756 = vxor.u32 %v2747, 2147483648
    %v2757 = vmul.f32 %v2756, 1.442695
    %v2758 = vpow.pop %v2757
    %v2759 = vadd.f32 %v2758, 1.0
    %v2760 = vrcp.pop %v2759
    %v2761 = vmul.f32 1.0, %v2760
    %v2762 = vtanh.pop %v2748
    %v2763 = vxor.u32 %v2749, 2147483648
    %v2764 = vmul.f32 %v2763, 1.442695
    %v2765 = vpow.pop %v2764
    %v2766 = vadd.f32 %v2765, 1.0
    %v2767 = vrcp.pop %v2766
    %v2768 = vmul.f32 1.0, %v2767
    %v2770 = vrot.slane %v2416, 6
    %v2772 = vmul.f32 %v2761, %v2770
    %v2773 = vmul.f32 %v2755, %v2762
    %v2774 = vadd.f32 %v2772, %v2773
    %v2775 = vtanh.pop %v2774
    %v2776 = vmul.f32 %v2768, %v2775
    %v2778 = vrot.slane %v2591, 4
    %v2780 = vrot.slane %v2776, 4
    %v2781 = vrot.slane %v2778, 4
    %2784 = vmatprep.subr.mxu0 %v336
    %2785 = vmatpush1.msra.mxu0 %v335
    %2786 = vmatprep.subr.mxu0 %v340
    %2787 = vmatpush1.msra.mxu0 %v339
    %2788 = vmatprep.subr.mxu0 %v344
    %2789 = vmatpush1.msra.mxu0 %v343
    %2790 = vmatprep.subr.mxu0 %v348
    %2791 = vmatpush1.msra.mxu0 %v347
    %2792 = vmatprep.subr.mxu0 %v352
    %2793 = vmatpush1.msra.mxu0 %v351
    %2794 = vmatprep.subr.mxu0 %v356
    %2795 = vmatpush1.msra.mxu0 %v355
    %2796 = vmatprep.subr.mxu0 %v360
    %2797 = vmatpush1.msra.mxu0 %v359
    %2798 = vmatprep.subr.mxu0 %v364
    %2799 = vmatpush1.msra.mxu0 %v363
    %2800 = vmatprep.subr.mxu0 %v368
    %2801 = vmatpush1.msra.mxu0 %v367
    %2802 = vmatprep.subr.mxu0 %v372
    %2803 = vmatpush1.msra.mxu0 %v371
    %2804 = vmatprep.subr.mxu0 %v376
    %2805 = vmatpush1.msra.mxu0 %v375
    %2806 = vmatprep.subr.mxu0 %v380
    %2807 = vmatpush1.msra.mxu0 %v379
    %2808 = vmatprep.subr.mxu0 %v384
    %2809 = vmatpush1.msra.mxu0 %v383
    %2810 = vmatprep.subr.mxu0 %v388
    %2811 = vmatpush1.msra.mxu0 %v387
    %2812 = vmatprep.subr.mxu0 %v392
    %2813 = vmatpush1.msra.mxu0 %v391
    %2814 = vmatprep.subr.mxu0 %v396
    %2815 = vmatpush1.msra.mxu0 %v395
    %2816 = vmatprep.subr.mxu0 %v400
    %2817 = vmatpush1.msra.mxu0 %v399
    %2818 = vmatprep.subr.mxu0 %v404
    %2819 = vmatpush1.msra.mxu0 %v403
    %2820 = vmatprep.subr.mxu0 %v408
    %2821 = vmatpush1.msra.mxu0 %v407
    %2822 = vmatprep.subr.mxu0 %v412
    %2823 = vmatpush1.msra.mxu0 %v411
    %2824 = vmatprep.subr.mxu0 %v416
    %2825 = vmatpush1.msra.mxu0 %v415
    %2826 = vmatprep.subr.mxu0 %v420
    %2827 = vmatpush1.msra.mxu0 %v419
    %2828 = vmatprep.subr.mxu0 %v424
    %2829 = vmatpush1.msra.mxu0 %v423
    %2830 = vmatprep.subr.mxu0 %v428
    %2831 = vmatpush1.msra.mxu0 %v427
    %2832 = vmatprep.subr.mxu0 %v432
    %2833 = vmatpush1.msra.mxu0 %v431
    %2834 = vmatprep.subr.mxu0 %v436
    %2835 = vmatpush1.msra.mxu0 %v435
    %2836 = vmatprep.subr.mxu0 %v440
    %2837 = vmatpush1.msra.mxu0 %v439
    %2838 = vmatprep.subr.mxu0 %v444
    %2839 = vmatpush1.msra.mxu0 %v443
    %2840 = vmatprep.subr.mxu0 %v448
    %2841 = vmatpush1.msra.mxu0 %v447
    %2842 = vmatprep.subr.mxu0 %v452
    %2843 = vmatpush1.msra.mxu0 %v451
    %2844 = vmatprep.subr.mxu0 %v456
    %2845 = vmatpush1.msra.mxu0 %v455
    %2846 = vmatprep.subr.mxu0 %v460
    %2847 = vmatpush1.msra.mxu0 %v459
    %2848 = vmatprep.mubr.f32.mxu0 %v2781
    %2849 = vmatmul.mubr.f32.gmra.mrb[0].mxu0 %v2780
    %v2850 = vpop.f32.mrb[0].mxu0
    %v2851 = vadd.f32 %v468, %v2850
    %v2852 = vpop.f32.mrb[0].mxu0
    %v2853 = vadd.f32 %v472, %v2852
    %2854 = vdwg.mxu0
    %2855 = vmatprep.subr.mxu0 %v338
    %2856 = vmatpush1.msra.mxu0 %v337
    %2857 = vmatprep.subr.mxu0 %v342
    %2858 = vmatpush1.msra.mxu0 %v341
    %2859 = vmatprep.subr.mxu0 %v346
    %2860 = vmatpush1.msra.mxu0 %v345
    %2861 = vmatprep.subr.mxu0 %v350
    %2862 = vmatpush1.msra.mxu0 %v349
    %2863 = vmatprep.subr.mxu0 %v354
    %2864 = vmatpush1.msra.mxu0 %v353
    %2865 = vmatprep.subr.mxu0 %v358
    %2866 = vmatpush1.msra.mxu0 %v357
    %2867 = vmatprep.subr.mxu0 %v362
    %2868 = vmatpush1.msra.mxu0 %v361
    %2869 = vmatprep.subr.mxu0 %v366
    %2870 = vmatpush1.msra.mxu0 %v365
    %2871 = vmatprep.subr.mxu0 %v370
    %2872 = vmatpush1.msra.mxu0 %v369
    %2873 = vmatprep.subr.mxu0 %v374
    %2874 = vmatpush1.msra.mxu0 %v373
    %2875 = vmatprep.subr.mxu0 %v378
    %2876 = vmatpush1.msra.mxu0 %v377
    %2877 = vmatprep.subr.mxu0 %v382
    %2878 = vmatpush1.msra.mxu0 %v381
    %2879 = vmatprep.subr.mxu0 %v386
    %2880 = vmatpush1.msra.mxu0 %v385
    %2881 = vmatprep.subr.mxu0 %v390
    %2882 = vmatpush1.msra.mxu0 %v389
    %2883 = vmatprep.subr.mxu0 %v394
    %2884 = vmatpush1.msra.mxu0 %v393
    %2885 = vmatprep.subr.mxu0 %v398
    %2886 = vmatpush1.msra.mxu0 %v397
    %2887 = vmatprep.subr.mxu0 %v402
    %2888 = vmatpush1.msra.mxu0 %v401
    %2889 = vmatprep.subr.mxu0 %v406
    %2890 = vmatpush1.msra.mxu0 %v405
    %2891 = vmatprep.subr.mxu0 %v410
    %2892 = vmatpush1.msra.mxu0 %v409
    %2893 = vmatprep.subr.mxu0 %v414
    %2894 = vmatpush1.msra.mxu0 %v413
    %2895 = vmatprep.subr.mxu0 %v418
    %2896 = vmatpush1.msra.mxu0 %v417
    %2897 = vmatprep.subr.mxu0 %v422
    %2898 = vmatpush1.msra.mxu0 %v421
    %2899 = vmatprep.subr.mxu0 %v426
    %2900 = vmatpush1.msra.mxu0 %v425
    %2901 = vmatprep.subr.mxu0 %v430
    %2902 = vmatpush1.msra.mxu0 %v429
    %2903 = vmatprep.subr.mxu0 %v434
    %2904 = vmatpush1.msra.mxu0 %v433
    %2905 = vmatprep.subr.mxu0 %v438
    %2906 = vmatpush1.msra.mxu0 %v437
    %2907 = vmatprep.subr.mxu0 %v442
    %2908 = vmatpush1.msra.mxu0 %v441
    %2909 = vmatprep.subr.mxu0 %v446
    %2910 = vmatpush1.msra.mxu0 %v445
    %2911 = vmatprep.subr.mxu0 %v450
    %2912 = vmatpush1.msra.mxu0 %v449
    %2913 = vmatprep.subr.mxu0 %v454
    %2914 = vmatpush1.msra.mxu0 %v453
    %2915 = vmatprep.subr.mxu0 %v458
    %2916 = vmatpush1.msra.mxu0 %v457
    %2917 = vmatprep.subr.mxu0 %v462
    %2918 = vmatpush1.msra.mxu0 %v461
    %2919 = vmatprep.mubr.f32.mxu0 %v2781
    %2920 = vmatmul.mubr.f32.gmra.mrb[0].mxu0 %v2780
    %v2921 = vpop.f32.mrb[0].mxu0
    %v2922 = vadd.f32 %v476, %v2921
    %v2923 = vpop.f32.mrb[0].mxu0
    %v2924 = vadd.f32 %v480, %v2923
    %2925 = vdwg.mxu0
    %v2926 = vxor.u32 %v2851, 2147483648
    %v2927 = vmul.f32 %v2926, 1.442695
    %v2928 = vpow.pop %v2927
    %v2929 = vadd.f32 %v2928, 1.0
    %v2930 = vrcp.pop %v2929
    %v2931 = vmul.f32 1.0, %v2930
    %v2932 = vxor.u32 %v2853, 2147483648
    %v2933 = vmul.f32 %v2932, 1.442695
    %v2934 = vpow.pop %v2933
    %v2935 = vadd.f32 %v2934, 1.0
    %v2936 = vrcp.pop %v2935
    %v2937 = vmul.f32 1.0, %v2936
    %v2938 = vtanh.pop %v2922
    %v2939 = vxor.u32 %v2924, 2147483648
    %v2940 = vmul.f32 %v2939, 1.442695
    %v2941 = vpow.pop %v2940
    %v2942 = vadd.f32 %v2941, 1.0
    %v2943 = vrcp.pop %v2942
    %v2944 = vmul.f32 1.0, %v2943
    %v2945 = vmul.f32 %v2937, %v2589
    %v2946 = vmul.f32 %v2931, %v2938
    %v2947 = vadd.f32 %v2945, %v2946
    %v2948 = vtanh.pop %v2947
    %v2949 = vmul.f32 %v2944, %v2948
    %2950 = vmatprep.subr.mxu0 %v272
    %2951 = vmatpush1.msra.mxu0 %v271
    %2952 = vmatprep.subr.mxu0 %v276
    %2953 = vmatpush1.msra.mxu0 %v275
    %2954 = vmatprep.subr.mxu0 %v280
    %2955 = vmatpush1.msra.mxu0 %v279
    %2956 = vmatprep.subr.mxu0 %v284
    %2957 = vmatpush1.msra.mxu0 %v283
    %2958 = vmatprep.subr.mxu0 %v288
    %2959 = vmatpush1.msra.mxu0 %v287
    %2960 = vmatprep.subr.mxu0 %v292
    %2961 = vmatpush1.msra.mxu0 %v291
    %2962 = vmatprep.subr.mxu0 %v296
    %2963 = vmatpush1.msra.mxu0 %v295
    %2964 = vmatprep.subr.mxu0 %v300
    %2965 = vmatpush1.msra.mxu0 %v299
    %2966 = vmatprep.subr.mxu0 %v304
    %2967 = vmatpush1.msra.mxu0 %v303
    %2968 = vmatprep.subr.mxu0 %v308
    %2969 = vmatpush1.msra.mxu0 %v307
    %2970 = vmatprep.subr.mxu0 %v312
    %2971 = vmatpush1.msra.mxu0 %v311
    %2972 = vmatprep.subr.mxu0 %v316
    %2973 = vmatpush1.msra.mxu0 %v315
    %2974 = vmatprep.subr.mxu0 %v320
    %2975 = vmatpush1.msra.mxu0 %v319
    %2976 = vmatprep.subr.mxu0 %v324
    %2977 = vmatpush1.msra.mxu0 %v323
    %2978 = vmatprep.subr.mxu0 %v328
    %2979 = vmatpush1.msra.mxu0 %v327
    %2980 = vmatprep.subr.mxu0 %v332
    %2981 = vmatpush1.msra.mxu0 %v331
    %2982 = vmatprep.subr.mxu0 0.0
    %2983 = vmatpush1.msra.mxu0 0.0
    %2984 = vmatprep.subr.mxu0 0.0
    %2985 = vmatpush1.msra.mxu0 0.0
    %2986 = vmatprep.subr.mxu0 0.0
    %2987 = vmatpush1.msra.mxu0 0.0
    %2988 = vmatprep.subr.mxu0 0.0
    %2989 = vmatpush1.msra.mxu0 0.0
    %2990 = vmatprep.subr.mxu0 0.0
    %2991 = vmatpush1.msra.mxu0 0.0
    %2992 = vmatprep.subr.mxu0 0.0
    %2993 = vmatpush1.msra.mxu0 0.0
    %2994 = vmatprep.subr.mxu0 0.0
    %2995 = vmatpush1.msra.mxu0 0.0
    %2996 = vmatprep.subr.mxu0 0.0
    %2997 = vmatpush1.msra.mxu0 0.0
    %2998 = vmatprep.subr.mxu0 0.0
    %2999 = vmatpush1.msra.mxu0 0.0
    %3000 = vmatprep.subr.mxu0 0.0
    %3001 = vmatpush1.msra.mxu0 0.0
    %3002 = vmatprep.subr.mxu0 0.0
    %3003 = vmatpush1.msra.mxu0 0.0
    %3004 = vmatprep.subr.mxu0 0.0
    %3005 = vmatpush1.msra.mxu0 0.0
    %3006 = vmatprep.subr.mxu0 0.0
    %3007 = vmatpush1.msra.mxu0 0.0
    %3008 = vmatprep.subr.mxu0 0.0
    %3009 = vmatpush1.msra.mxu0 0.0
    %3010 = vmatprep.subr.mxu0 0.0
    %3011 = vmatpush1.msra.mxu0 0.0
    %3012 = vmatprep.subr.mxu0 0.0
    %3013 = vmatpush1.msra.mxu0 0.0
    %3014 = vmatprep.mubr.f32.mxu0 0.0
    %3015 = vmatmul.mubr.f32.gmra.mrb[0].mxu0 %v2780
    %v3016 = vpop.f32.mrb[0].mxu0
    %v3017 = vadd.f32 0.0, %v3016
    %v3018 = vpop.f32.mrb[0].mxu0
    %v3019 = vadd.f32 0.0, %v3018
    %3020 = vdwg.mxu0
    %3021 = vmatprep.subr.mxu0 %v274
    %3022 = vmatpush1.msra.mxu0 %v273
    %3023 = vmatprep.subr.mxu0 %v278
    %3024 = vmatpush1.msra.mxu0 %v277
    %3025 = vmatprep.subr.mxu0 %v282
    %3026 = vmatpush1.msra.mxu0 %v281
    %3027 = vmatprep.subr.mxu0 %v286
    %3028 = vmatpush1.msra.mxu0 %v285
    %3029 = vmatprep.subr.mxu0 %v290
    %3030 = vmatpush1.msra.mxu0 %v289
    %3031 = vmatprep.subr.mxu0 %v294
    %3032 = vmatpush1.msra.mxu0 %v293
    %3033 = vmatprep.subr.mxu0 %v298
    %3034 = vmatpush1.msra.mxu0 %v297
    %3035 = vmatprep.subr.mxu0 %v302
    %3036 = vmatpush1.msra.mxu0 %v301
    %3037 = vmatprep.subr.mxu0 %v306
    %3038 = vmatpush1.msra.mxu0 %v305
    %3039 = vmatprep.subr.mxu0 %v310
    %3040 = vmatpush1.msra.mxu0 %v309
    %3041 = vmatprep.subr.mxu0 %v314
    %3042 = vmatpush1.msra.mxu0 %v313
    %3043 = vmatprep.subr.mxu0 %v318
    %3044 = vmatpush1.msra.mxu0 %v317
    %3045 = vmatprep.subr.mxu0 %v322
    %3046 = vmatpush1.msra.mxu0 %v321
    %3047 = vmatprep.subr.mxu0 %v326
    %3048 = vmatpush1.msra.mxu0 %v325
    %3049 = vmatprep.subr.mxu0 %v330
    %3050 = vmatpush1.msra.mxu0 %v329
    %3051 = vmatprep.subr.mxu0 %v334
    %3052 = vmatpush1.msra.mxu0 %v333
    %3053 = vmatprep.subr.mxu0 0.0
    %3054 = vmatpush1.msra.mxu0 0.0
    %3055 = vmatprep.subr.mxu0 0.0
    %3056 = vmatpush1.msra.mxu0 0.0
    %3057 = vmatprep.subr.mxu0 0.0
    %3058 = vmatpush1.msra.mxu0 0.0
    %3059 = vmatprep.subr.mxu0 0.0
    %3060 = vmatpush1.msra.mxu0 0.0
    %3061 = vmatprep.subr.mxu0 0.0
    %3062 = vmatpush1.msra.mxu0 0.0
    %3063 = vmatprep.subr.mxu0 0.0
    %3064 = vmatpush1.msra.mxu0 0.0
    %3065 = vmatprep.subr.mxu0 0.0
    %3066 = vmatpush1.msra.mxu0 0.0
    %3067 = vmatprep.subr.mxu0 0.0
    %3068 = vmatpush1.msra.mxu0 0.0
    %3069 = vmatprep.subr.mxu0 0.0
    %3070 = vmatpush1.msra.mxu0 0.0
    %3071 = vmatprep.subr.mxu0 0.0
    %3072 = vmatpush1.msra.mxu0 0.0
    %3073 = vmatprep.subr.mxu0 0.0
    %3074 = vmatpush1.msra.mxu0 0.0
    %3075 = vmatprep.subr.mxu0 0.0
    %3076 = vmatpush1.msra.mxu0 0.0
    %3077 = vmatprep.subr.mxu0 0.0
    %3078 = vmatpush1.msra.mxu0 0.0
    %3079 = vmatprep.subr.mxu0 0.0
    %3080 = vmatpush1.msra.mxu0 0.0
    %3081 = vmatprep.subr.mxu0 0.0
    %3082 = vmatpush1.msra.mxu0 0.0
    %3083 = vmatprep.subr.mxu0 0.0
    %3084 = vmatpush1.msra.mxu0 0.0
    %3085 = vmatprep.mubr.f32.mxu0 0.0
    %3086 = vmatmul.mubr.f32.gmra.mrb[0].mxu0 %v2780
    %v3087 = vpop.f32.mrb[0].mxu0
    %v3088 = vadd.f32 0.0, %v3087
    %v3089 = vpop.f32.mrb[0].mxu0
    %v3090 = vadd.f32 0.0, %v3089
    %3091 = vdwg.mxu0
    %v3096 = vrot.slane %v3017, 2
    %v3097 = vrot.slane %v3019, 2
    %v3098 = vrot.slane %v3088, 2
    %v3099 = vrot.slane %v3090, 2
    %v3104 = vadd.f32 %v190, %v3096
    %v3105 = vadd.f32 %v192, %v3097
    %v3106 = vadd.f32 %v267, %v3098
    %v3107 = vadd.f32 %v269, %v3099
    %v3108 = vxor.u32 %v3104, 2147483648
    %v3109 = vmul.f32 %v3108, 1.442695
    %v3110 = vpow.pop %v3109
    %v3111 = vadd.f32 %v3110, 1.0
    %v3112 = vrcp.pop %v3111
    %v3113 = vmul.f32 1.0, %v3112
    %v3114 = vxor.u32 %v3105, 2147483648
    %v3115 = vmul.f32 %v3114, 1.442695
    %v3116 = vpow.pop %v3115
    %v3117 = vadd.f32 %v3116, 1.0
    %v3118 = vrcp.pop %v3117
    %v3119 = vmul.f32 1.0, %v3118
    %v3120 = vtanh.pop %v3106
    %v3121 = vxor.u32 %v3107, 2147483648
    %v3122 = vmul.f32 %v3121, 1.442695
    %v3123 = vpow.pop %v3122
    %v3124 = vadd.f32 %v3123, 1.0
    %v3125 = vrcp.pop %v3124
    %v3126 = vmul.f32 1.0, %v3125
    %v3128 = vrot.slane %v2774, 6
    %v3130 = vmul.f32 %v3119, %v3128
    %v3131 = vmul.f32 %v3113, %v3120
    %v3132 = vadd.f32 %v3130, %v3131
    %v3133 = vtanh.pop %v3132
    %v3134 = vmul.f32 %v3126, %v3133
    %v3136 = vrot.slane %v2949, 2
    %v3138 = vrot.slane %v3134, 6
    %v3139 = vrot.slane %v3136, 6
    %3142 = vmatprep.subr.mxu0 %v336
    %3143 = vmatpush1.msra.mxu0 %v335
    %3144 = vmatprep.subr.mxu0 %v340
    %3145 = vmatpush1.msra.mxu0 %v339
    %3146 = vmatprep.subr.mxu0 %v344
    %3147 = vmatpush1.msra.mxu0 %v343
    %3148 = vmatprep.subr.mxu0 %v348
    %3149 = vmatpush1.msra.mxu0 %v347
    %3150 = vmatprep.subr.mxu0 %v352
    %3151 = vmatpush1.msra.mxu0 %v351
    %3152 = vmatprep.subr.mxu0 %v356
    %3153 = vmatpush1.msra.mxu0 %v355
    %3154 = vmatprep.subr.mxu0 %v360
    %3155 = vmatpush1.msra.mxu0 %v359
    %3156 = vmatprep.subr.mxu0 %v364
    %3157 = vmatpush1.msra.mxu0 %v363
    %3158 = vmatprep.subr.mxu0 %v368
    %3159 = vmatpush1.msra.mxu0 %v367
    %3160 = vmatprep.subr.mxu0 %v372
    %3161 = vmatpush1.msra.mxu0 %v371
    %3162 = vmatprep.subr.mxu0 %v376
    %3163 = vmatpush1.msra.mxu0 %v375
    %3164 = vmatprep.subr.mxu0 %v380
    %3165 = vmatpush1.msra.mxu0 %v379
    %3166 = vmatprep.subr.mxu0 %v384
    %3167 = vmatpush1.msra.mxu0 %v383
    %3168 = vmatprep.subr.mxu0 %v388
    %3169 = vmatpush1.msra.mxu0 %v387
    %3170 = vmatprep.subr.mxu0 %v392
    %3171 = vmatpush1.msra.mxu0 %v391
    %3172 = vmatprep.subr.mxu0 %v396
    %3173 = vmatpush1.msra.mxu0 %v395
    %3174 = vmatprep.subr.mxu0 %v400
    %3175 = vmatpush1.msra.mxu0 %v399
    %3176 = vmatprep.subr.mxu0 %v404
    %3177 = vmatpush1.msra.mxu0 %v403
    %3178 = vmatprep.subr.mxu0 %v408
    %3179 = vmatpush1.msra.mxu0 %v407
    %3180 = vmatprep.subr.mxu0 %v412
    %3181 = vmatpush1.msra.mxu0 %v411
    %3182 = vmatprep.subr.mxu0 %v416
    %3183 = vmatpush1.msra.mxu0 %v415
    %3184 = vmatprep.subr.mxu0 %v420
    %3185 = vmatpush1.msra.mxu0 %v419
    %3186 = vmatprep.subr.mxu0 %v424
    %3187 = vmatpush1.msra.mxu0 %v423
    %3188 = vmatprep.subr.mxu0 %v428
    %3189 = vmatpush1.msra.mxu0 %v427
    %3190 = vmatprep.subr.mxu0 %v432
    %3191 = vmatpush1.msra.mxu0 %v431
    %3192 = vmatprep.subr.mxu0 %v436
    %3193 = vmatpush1.msra.mxu0 %v435
    %3194 = vmatprep.subr.mxu0 %v440
    %3195 = vmatpush1.msra.mxu0 %v439
    %3196 = vmatprep.subr.mxu0 %v444
    %3197 = vmatpush1.msra.mxu0 %v443
    %3198 = vmatprep.subr.mxu0 %v448
    %3199 = vmatpush1.msra.mxu0 %v447
    %3200 = vmatprep.subr.mxu0 %v452
    %3201 = vmatpush1.msra.mxu0 %v451
    %3202 = vmatprep.subr.mxu0 %v456
    %3203 = vmatpush1.msra.mxu0 %v455
    %3204 = vmatprep.subr.mxu0 %v460
    %3205 = vmatpush1.msra.mxu0 %v459
    %3206 = vmatprep.mubr.f32.mxu0 %v3139
    %3207 = vmatmul.mubr.f32.gmra.mrb[0].mxu0 %v3138
    %v3208 = vpop.f32.mrb[0].mxu0
    %v3209 = vadd.f32 %v468, %v3208
    %v3210 = vpop.f32.mrb[0].mxu0
    %v3211 = vadd.f32 %v472, %v3210
    %3212 = vdwg.mxu0
    %3213 = vmatprep.subr.mxu0 %v338
    %3214 = vmatpush1.msra.mxu0 %v337
    %3215 = vmatprep.subr.mxu0 %v342
    %3216 = vmatpush1.msra.mxu0 %v341
    %3217 = vmatprep.subr.mxu0 %v346
    %3218 = vmatpush1.msra.mxu0 %v345
    %3219 = vmatprep.subr.mxu0 %v350
    %3220 = vmatpush1.msra.mxu0 %v349
    %3221 = vmatprep.subr.mxu0 %v354
    %3222 = vmatpush1.msra.mxu0 %v353
    %3223 = vmatprep.subr.mxu0 %v358
    %3224 = vmatpush1.msra.mxu0 %v357
    %3225 = vmatprep.subr.mxu0 %v362
    %3226 = vmatpush1.msra.mxu0 %v361
    %3227 = vmatprep.subr.mxu0 %v366
    %3228 = vmatpush1.msra.mxu0 %v365
    %3229 = vmatprep.subr.mxu0 %v370
    %3230 = vmatpush1.msra.mxu0 %v369
    %3231 = vmatprep.subr.mxu0 %v374
    %3232 = vmatpush1.msra.mxu0 %v373
    %3233 = vmatprep.subr.mxu0 %v378
    %3234 = vmatpush1.msra.mxu0 %v377
    %3235 = vmatprep.subr.mxu0 %v382
    %3236 = vmatpush1.msra.mxu0 %v381
    %3237 = vmatprep.subr.mxu0 %v386
    %3238 = vmatpush1.msra.mxu0 %v385
    %3239 = vmatprep.subr.mxu0 %v390
    %3240 = vmatpush1.msra.mxu0 %v389
    %3241 = vmatprep.subr.mxu0 %v394
    %3242 = vmatpush1.msra.mxu0 %v393
    %3243 = vmatprep.subr.mxu0 %v398
    %3244 = vmatpush1.msra.mxu0 %v397
    %3245 = vmatprep.subr.mxu0 %v402
    %3246 = vmatpush1.msra.mxu0 %v401
    %3247 = vmatprep.subr.mxu0 %v406
    %3248 = vmatpush1.msra.mxu0 %v405
    %3249 = vmatprep.subr.mxu0 %v410
    %3250 = vmatpush1.msra.mxu0 %v409
    %3251 = vmatprep.subr.mxu0 %v414
    %3252 = vmatpush1.msra.mxu0 %v413
    %3253 = vmatprep.subr.mxu0 %v418
    %3254 = vmatpush1.msra.mxu0 %v417
    %3255 = vmatprep.subr.mxu0 %v422
    %3256 = vmatpush1.msra.mxu0 %v421
    %3257 = vmatprep.subr.mxu0 %v426
    %3258 = vmatpush1.msra.mxu0 %v425
    %3259 = vmatprep.subr.mxu0 %v430
    %3260 = vmatpush1.msra.mxu0 %v429
    %3261 = vmatprep.subr.mxu0 %v434
    %3262 = vmatpush1.msra.mxu0 %v433
    %3263 = vmatprep.subr.mxu0 %v438
    %3264 = vmatpush1.msra.mxu0 %v437
    %3265 = vmatprep.subr.mxu0 %v442
    %3266 = vmatpush1.msra.mxu0 %v441
    %3267 = vmatprep.subr.mxu0 %v446
    %3268 = vmatpush1.msra.mxu0 %v445
    %3269 = vmatprep.subr.mxu0 %v450
    %3270 = vmatpush1.msra.mxu0 %v449
    %3271 = vmatprep.subr.mxu0 %v454
    %3272 = vmatpush1.msra.mxu0 %v453
    %3273 = vmatprep.subr.mxu0 %v458
    %3274 = vmatpush1.msra.mxu0 %v457
    %3275 = vmatprep.subr.mxu0 %v462
    %3276 = vmatpush1.msra.mxu0 %v461
    %3277 = vmatprep.mubr.f32.mxu0 %v3139
    %3278 = vmatmul.mubr.f32.gmra.mrb[0].mxu0 %v3138
    %v3279 = vpop.f32.mrb[0].mxu0
    %v3280 = vadd.f32 %v476, %v3279
    %v3281 = vpop.f32.mrb[0].mxu0
    %v3282 = vadd.f32 %v480, %v3281
    %3283 = vdwg.mxu0
    %v3284 = vxor.u32 %v3209, 2147483648
    %v3285 = vmul.f32 %v3284, 1.442695
    %v3286 = vpow.pop %v3285
    %v3287 = vadd.f32 %v3286, 1.0
    %v3288 = vrcp.pop %v3287
    %v3289 = vmul.f32 1.0, %v3288
    %v3290 = vxor.u32 %v3211, 2147483648
    %v3291 = vmul.f32 %v3290, 1.442695
    %v3292 = vpow.pop %v3291
    %v3293 = vadd.f32 %v3292, 1.0
    %v3294 = vrcp.pop %v3293
    %v3295 = vmul.f32 1.0, %v3294
    %v3296 = vtanh.pop %v3280
    %v3297 = vxor.u32 %v3282, 2147483648
    %v3298 = vmul.f32 %v3297, 1.442695
    %v3299 = vpow.pop %v3298
    %v3300 = vadd.f32 %v3299, 1.0
    %v3301 = vrcp.pop %v3300
    %v3302 = vmul.f32 1.0, %v3301
    %v3303 = vmul.f32 %v3295, %v2947
    %v3304 = vmul.f32 %v3289, %v3296
    %v3305 = vadd.f32 %v3303, %v3304
    %v3306 = vtanh.pop %v3305
    %v3307 = vmul.f32 %v3302, %v3306
    %v3308 = vld [vmem:[%s6] sm:$0xff]
    %v3309 = vld [vmem:[%s6 + $0x8] sm:$0xff]
    %v3310 = vld [vmem:[%s6 + $0x10] sm:$0xff]
    %v3311 = vld [vmem:[%s6 + $0x18] sm:$0xff]
    %v3312 = vld [vmem:[%s6 + $0x20] sm:$0xff]
    %v3313 = vld [vmem:[%s6 + $0x28] sm:$0xff]
    %v3314 = vld [vmem:[%s6 + $0x30] sm:$0xff]
    %v3315 = vld [vmem:[%s6 + $0x38] sm:$0xff]
    %v3316 = vld [vmem:[%s6 + $0x40] sm:$0xff]
    %v3317 = vld [vmem:[%s6 + $0x48] sm:$0xff]
    %v3318 = vld [vmem:[%s6 + $0x50] sm:$0xff]
    %v3319 = vld [vmem:[%s6 + $0x58] sm:$0xff]
    %v3320 = vld [vmem:[%s6 + $0x60] sm:$0xff]
    %v3321 = vld [vmem:[%s6 + $0x68] sm:$0xff]
    %v3322 = vld [vmem:[%s6 + $0x70] sm:$0xff]
    %v3323 = vld [vmem:[%s6 + $0x78] sm:$0xff]
    %v3324 = vld [vmem:[%s7] sm:$0x1]
    %v3326 = vlaneseq
    %v3327 = vshrl.u32 %v3326, 7
    %v3328 = vsub.s32 0, %v3327
    %v3329 = vrot.slane %v3324, %v3328
    %3331 = vmatprep.subr.mxu0 0.0
    %3332 = vmatpush1.msra.mxu0 %v3308
    %3333 = vmatprep.subr.mxu0 0.0
    %3334 = vmatpush1.msra.mxu0 %v3309
    %3335 = vmatprep.subr.mxu0 0.0
    %3336 = vmatpush1.msra.mxu0 %v3310
    %3337 = vmatprep.subr.mxu0 0.0
    %3338 = vmatpush1.msra.mxu0 %v3311
    %3339 = vmatprep.subr.mxu0 0.0
    %3340 = vmatpush1.msra.mxu0 %v3312
    %3341 = vmatprep.subr.mxu0 0.0
    %3342 = vmatpush1.msra.mxu0 %v3313
    %3343 = vmatprep.subr.mxu0 0.0
    %3344 = vmatpush1.msra.mxu0 %v3314
    %3345 = vmatprep.subr.mxu0 0.0
    %3346 = vmatpush1.msra.mxu0 %v3315
    %3347 = vmatprep.subr.mxu0 0.0
    %3348 = vmatpush1.msra.mxu0 %v3316
    %3349 = vmatprep.subr.mxu0 0.0
    %3350 = vmatpush1.msra.mxu0 %v3317
    %3351 = vmatprep.subr.mxu0 0.0
    %3352 = vmatpush1.msra.mxu0 %v3318
    %3353 = vmatprep.subr.mxu0 0.0
    %3354 = vmatpush1.msra.mxu0 %v3319
    %3355 = vmatprep.subr.mxu0 0.0
    %3356 = vmatpush1.msra.mxu0 %v3320
    %3357 = vmatprep.subr.mxu0 0.0
    %3358 = vmatpush1.msra.mxu0 %v3321
    %3359 = vmatprep.subr.mxu0 0.0
    %3360 = vmatpush1.msra.mxu0 %v3322
    %3361 = vmatprep.subr.mxu0 0.0
    %3362 = vmatpush1.msra.mxu0 %v3323
    %3363 = vmatprep.subr.mxu0 0.0
    %3364 = vmatpush1.msra.mxu0 0.0
    %3365 = vmatprep.subr.mxu0 0.0
    %3366 = vmatpush1.msra.mxu0 0.0
    %3367 = vmatprep.subr.mxu0 0.0
    %3368 = vmatpush1.msra.mxu0 0.0
    %3369 = vmatprep.subr.mxu0 0.0
    %3370 = vmatpush1.msra.mxu0 0.0
    %3371 = vmatprep.subr.mxu0 0.0
    %3372 = vmatpush1.msra.mxu0 0.0
    %3373 = vmatprep.subr.mxu0 0.0
    %3374 = vmatpush1.msra.mxu0 0.0
    %3375 = vmatprep.subr.mxu0 0.0
    %3376 = vmatpush1.msra.mxu0 0.0
    %3377 = vmatprep.subr.mxu0 0.0
    %3378 = vmatpush1.msra.mxu0 0.0
    %3379 = vmatprep.subr.mxu0 0.0
    %3380 = vmatpush1.msra.mxu0 0.0
    %3381 = vmatprep.subr.mxu0 0.0
    %3382 = vmatpush1.msra.mxu0 0.0
    %3383 = vmatprep.subr.mxu0 0.0
    %3384 = vmatpush1.msra.mxu0 0.0
    %3385 = vmatprep.subr.mxu0 0.0
    %3386 = vmatpush1.msra.mxu0 0.0
    %3387 = vmatprep.subr.mxu0 0.0
    %3388 = vmatpush1.msra.mxu0 0.0
    %3389 = vmatprep.subr.mxu0 0.0
    %3390 = vmatpush1.msra.mxu0 0.0
    %3391 = vmatprep.subr.mxu0 0.0
    %3392 = vmatpush1.msra.mxu0 0.0
    %3393 = vmatprep.subr.mxu0 0.0
    %3394 = vmatpush1.msra.mxu0 0.0
    %3395 = vmatprep.mubr.f32.mxu0 0.0
    %3396 = vmatmul.mubr.f32.gmra.mrb[0].mxu0 %v3307
    %v3397 = vpop.f32.mrb[0].mxu0
    %v3398 = vadd.f32 %v3329, %v3397
    %v3399 = vpop.f32.mrb[0].mxu0
    %3400 = vdwg.mxu0
    %vm3401 = vcmask 9216
    %3402 = vst.msk [vmem:[#allocation7] sm:$0x3] %vm3401, %v3398
    // Predicated region
    $region42: #{tpu_custom_call.1} parent=1 // pred_check
      _
    $region43: #{tpu_custom_call.1} parent=1 // pred_check_branch
      %3404 = sbr.rel (0) target = $region45
    $region44: #{tpu_custom_call.1} parent=1 // pred_region
      %s3406 = ssub.s32 32, 32
      %3407 = vsyncadd [#allocation4], %s3406
      %s3409 = sshll.u32 [#allocation7], 4
      %s3410 = int_to_ptr.vmem [resolvable:$true] %s3409
      %3412 = dma.vmem_to_hbm [thread:$0]  %s3410, 32, %s8, [#allocation4]
    $region45: #{tpu_custom_call.1} parent=1 // pred_fallthru
      _
    // Predicated region
    $region46: #{tpu_custom_call.1} parent=1 // pred_check
      _
    $region47: #{tpu_custom_call.1} parent=1 // pred_check_branch
      %3414 = sbr.rel (0) target = $region49
    $region48: #{tpu_custom_call.1} parent=1 // pred_region
      %3415 = dma.done [#allocation4], 32
    $region49: #{tpu_custom_call.1} parent=1 // pred_fallthru
      _
    %3416 = vsyncpa [#allocation3], 1
    %3417 = vsyncpa [#allocation6], 1
    %3418 = vsyncpa [#allocation4], 1

</llo_original>
